<compile_context>
chip_gen: v7x
topology: tpu7x:2x2x1
jax: 0.10.0
libtpu: 0.0.40
codegen_flags: <defaults>
</compile_context>

<pallas_src>
import jax
import jax.numpy as jnp
from jax.experimental import pallas as pl
from jax.experimental.pallas import tpu as pltpu


def _round_up(x, m):
    return ((x + m - 1) // m) * m


def _default_tn():
    # v5e: per-tile compute is already close to per-tile DMA -> keep TN=256.
    # v6e/v7x: DMA / fixed-overhead bound -> TN=512 gives grid=(2,), halving
    # per-step overhead while using only ~4 MiB double-buffered weight VMEM.
    try:
        kind = jax.devices()[0].device_kind.lower()
    except Exception:
        return 256
    return 256 if "v5" in kind else 512


def pack_conv1x1_params(w_oihw, bias, *, tn):
    """One-time packing of the Conv2d(2048,1000,1) parameters.

    Returns:
      w_tiles: (Cout_pad//tn, Cin, tn) bf16, tile-major so each grid step's
               weight DMA is a single contiguous transfer.
      b_pad:   (1, Cout_pad) f32 bias.
    """
    Cout, Cin = w_oihw.shape[0], w_oihw.shape[1]
    Cout_pad = _round_up(Cout, tn)
    n_tiles = Cout_pad // tn

    w2 = jnp.transpose(w_oihw.reshape(Cout, Cin))                # (Cin, Cout)
    w_pad = jnp.pad(w2, ((0, 0), (0, Cout_pad - Cout))).astype(jnp.bfloat16)
    w_tiles = jnp.transpose(w_pad.reshape(Cin, n_tiles, tn), (1, 0, 2))

    b_pad = jnp.pad(bias, (0, Cout_pad - Cout)).reshape(1, Cout_pad)
    b_pad = b_pad.astype(jnp.float32)
    return w_tiles, b_pad


def _mil_conv_kernel(x_ref, w_ref, b_ref, a_ref, o_ref):
    # x_ref: (M_pad, Cin)  bf16 — all batches' spatial positions (resident)
    # w_ref: (Cin, TN)     bf16 — one contiguous Cout tile of the 1x1 weight
    # b_ref: (1, TN)       f32  — bias tile
    # a_ref: (B, M_pad)    bf16 — per-batch averaging/masking matrix (1/HW)
    # o_ref: (B, TN)       f32  — MIL(mean) output tile
    logits = jnp.dot(x_ref[...], w_ref[...],
                     preferred_element_type=jnp.float32) + b_ref[...]
    # sigmoid(x) == 0.5*(tanh(x/2)+1): single EUP op instead of exp + divide.
    probs = 0.5 * (jnp.tanh(0.5 * logits) + 1.0)                 # (M_pad, TN)
    # MIL type 2: per-batch mean over the real HW rows (padded rows masked out
    # by zeros in A), as one tiny bf16 MXU matmul with f32 accumulation.
    o_ref[...] = jnp.dot(a_ref[...], probs.astype(jnp.bfloat16),
                         preferred_element_type=jnp.float32)


def resnet_mil_forward(feat_nchw, w_tiles, b_pad, *, cout=None):
    """feat_nchw: (B, Cin, H, W) float32 backbone features.
       w_tiles:   (n_tiles, Cin, TN) bf16 pre-packed 1x1 conv weight.
       b_pad:     (1, n_tiles*TN) f32 pre-packed bias.
       cout:      number of real output channels to keep (static).
       returns:   (B, cout) float32 MIL(mean) probabilities."""
    B, Cin, H, W = feat_nchw.shape
    n_tiles, Cin_w, TN = w_tiles.shape
    assert Cin_w == Cin
    Cout_pad = n_tiles * TN
    HW = H * W
    M = B * HW
    M_pad = _round_up(M, 16)           # bf16 sublane packing; full-array block

    # ---- per-call activation layout glue (small vs. the weight stream) ----
    # NCHW -> (B*HW, Cin), zero-pad M, cast to bf16 for the MXU.
    x_flat = jnp.transpose(feat_nchw, (0, 2, 3, 1)).reshape(M, Cin)
    x_pad = jnp.pad(x_flat, ((0, M_pad - M), (0, 0))).astype(jnp.bfloat16)

    # Averaging matrix: A[b, m] = 1/HW for m in [b*HW, (b+1)*HW), else 0.
    cols = jnp.arange(M_pad)[None, :]
    rows = jnp.arange(B)[:, None]
    A = jnp.where((cols >= rows * HW) & (cols < (rows + 1) * HW),
                  jnp.float32(1.0 / HW), jnp.float32(0.0)).astype(jnp.bfloat16)

    cost = pl.CostEstimate(
        flops=2 * M_pad * Cin * Cout_pad + 2 * B * M_pad * Cout_pad,
        transcendentals=M_pad * Cout_pad,
        bytes_accessed=(x_pad.size * 2 + w_tiles.size * 2
                        + b_pad.size * 4 + A.size * 2 + B * Cout_pad * 4),
    )

    out = pl.pallas_call(
        _mil_conv_kernel,
        out_shape=jax.ShapeDtypeStruct((B, Cout_pad), jnp.float32),
        grid_spec=pltpu.PrefetchScalarGridSpec(
            num_scalar_prefetch=0,
            grid=(n_tiles,),
            in_specs=[
                # Features resident across the whole grid (constant block,
                # fetched once by the pipeliner).
                pl.BlockSpec((M_pad, Cin), lambda n: (0, 0)),
                # Tile-major weight: one contiguous (Cin, TN) tile per step.
                pl.BlockSpec((None, Cin, TN), lambda n: (n, 0, 0)),
                pl.BlockSpec((1, TN), lambda n: (0, n)),
                # Averaging/masking matrix, also resident.
                pl.BlockSpec((B, M_pad), lambda n: (0, 0)),
            ],
            out_specs=pl.BlockSpec((B, TN), lambda n: (0, n)),
        ),
        compiler_params=pltpu.CompilerParams(
            # Cout-tile axis is independent -> megacore-shard it on v7x so the
            # two TensorCores stream disjoint halves of the weight.
            dimension_semantics=("parallel",)),
        cost_estimate=cost,
    )(x_pad, w_tiles, b_pad, A)

    if cout is None:
        return out
    return out[:, :cout]


def _reference(feat_nchw, w_oihw, bias):
    B, Cin, H, W = feat_nchw.shape
    Cout = w_oihw.shape[0]
    x = jnp.transpose(feat_nchw, (0, 2, 3, 1)).reshape(B, H * W, Cin)
    logits = x @ w_oihw.reshape(Cout, Cin).T + bias[None, None, :]
    return jax.nn.sigmoid(logits).mean(axis=1)


if __name__ == "__main__":
    key = jax.random.PRNGKey(0)
    k_feat, k_w, k_b = jax.random.split(key, 3)

    # resnet conv5 feature shape (small batch); Cin/Cout fixed by the module.
    B, Cin, H, W = 2, 2048, 7, 7
    Cout = 1000

    feat = jax.random.normal(k_feat, (B, Cin, H, W), dtype=jnp.float32)
    # deterministic synthetic Conv2d(2048, 1000, 1) parameters
    w = jax.random.normal(k_w, (Cout, Cin, 1, 1), dtype=jnp.float32) * 0.02
    bias = jax.random.normal(k_b, (Cout,), dtype=jnp.float32) * 0.02

    tn = _default_tn()
    # Weight packing is a one-time cost, off the per-call path.
    w_tiles, b_pad = jax.block_until_ready(pack_conv1x1_params(w, bias, tn=tn))

    fwd = jax.jit(resnet_mil_forward, static_argnames=("cout",))
    out = jax.block_until_ready(fwd(feat, w_tiles, b_pad, cout=Cout))
    ref = jax.block_until_ready(_reference(feat, w, bias))

    assert out.shape == (B, Cout), out.shape
    # bf16 MXU inputs (features, weights, probs, averaging matrix) with f32
    # accumulation -> relaxed absolute tolerance; outputs are sigmoid-then-mean
    # values in [0, 1].
    err = float(jnp.max(jnp.abs(out - ref)))
    assert err < 1e-2, f"mismatch vs reference, max abs err={err}"
    print("KERNEL_OK")
</pallas_src>

<mosaic_0001>
module attributes {stable_mosaic.version = 11 : i64} {
  func.func @_mil_conv_kernel(%arg0: i32, %arg1: memref<112x2048xbf16, #tpu.memory_space<vmem>>, %arg2: memref<1x2048x512xbf16, #tpu.memory_space<vmem>>, %arg3: memref<1x512xf32, #tpu.memory_space<vmem>>, %arg4: memref<2x112xbf16, #tpu.memory_space<vmem>>, %arg5: memref<2x512xf32, #tpu.memory_space<vmem>>) attributes {dimension_semantics = [#tpu.dimension_semantics<parallel>], iteration_bounds = array<i64: 2>, scalar_prefetch = 0 : i64, scratch_operands = 0 : i64, tpu.core_type = #tpu.core_type<tc>, window_params = [{pipeline_mode = #tpu.pipeline_mode<synchronous>, transform_indices = @transform_0, window_bounds = array<i64: 112, 2048>}, {transform_indices = @transform_1, window_bounds = array<i64: 1, 2048, 512>}, {transform_indices = @transform_2, window_bounds = array<i64: 1, 512>}, {pipeline_mode = #tpu.pipeline_mode<synchronous>, transform_indices = @transform_3, window_bounds = array<i64: 2, 112>}, {transform_indices = @transform_4, window_bounds = array<i64: 2, 512>}]} {
    %c0 = arith.constant 0 : index
    %c0_0 = arith.constant 0 : index
    %0 = vector.load %arg1[%c0, %c0_0] : memref<112x2048xbf16, #tpu.memory_space<vmem>>, vector<112x2048xbf16>
    %c0_1 = arith.constant 0 : index
    %c0_2 = arith.constant 0 : index
    %c0_3 = arith.constant 0 : index
    %1 = vector.load %arg2[%c0_1, %c0_2, %c0_3] : memref<1x2048x512xbf16, #tpu.memory_space<vmem>>, vector<1x2048x512xbf16>
    %2 = vector.shape_cast %1 : vector<1x2048x512xbf16> to vector<2048x512xbf16>
    %cst = arith.constant dense<0.000000e+00> : vector<112x512xf32>
    %3 = tpu.matmul %0, %2, %cst {dimension_numbers = #tpu.dot_dimension_numbers<[1], [0], [0], [1], [0, 0, 1, 1], [], []>} : vector<112x2048xbf16>, vector<2048x512xbf16>, vector<112x512xf32> -> vector<112x512xf32>
    %c0_4 = arith.constant 0 : index
    %c0_5 = arith.constant 0 : index
    %4 = vector.load %arg3[%c0_4, %c0_5] : memref<1x512xf32, #tpu.memory_space<vmem>>, vector<1x512xf32>
    %5 = vector.broadcast %4 : vector<1x512xf32> to vector<112x512xf32>
    %6 = arith.addf %3, %5 : vector<112x512xf32>
    %cst_6 = arith.constant 5.000000e-01 : f32
    %7 = vector.broadcast %cst_6 : f32 to vector<112x512xf32>
    %8 = arith.mulf %7, %6 : vector<112x512xf32>
    %9 = math.tanh %8 : vector<112x512xf32>
    %cst_7 = arith.constant 1.000000e+00 : f32
    %10 = vector.broadcast %cst_7 : f32 to vector<112x512xf32>
    %11 = arith.addf %9, %10 : vector<112x512xf32>
    %cst_8 = arith.constant 5.000000e-01 : f32
    %12 = vector.broadcast %cst_8 : f32 to vector<112x512xf32>
    %13 = arith.mulf %12, %11 : vector<112x512xf32>
    %c0_9 = arith.constant 0 : index
    %c0_10 = arith.constant 0 : index
    %14 = vector.load %arg4[%c0_9, %c0_10] : memref<2x112xbf16, #tpu.memory_space<vmem>>, vector<2x112xbf16>
    %15 = arith.truncf %13 : vector<112x512xf32> to vector<112x512xbf16>
    %cst_11 = arith.constant dense<0.000000e+00> : vector<2x512xf32>
    %16 = tpu.matmul %14, %15, %cst_11 {dimension_numbers = #tpu.dot_dimension_numbers<[1], [0], [0], [1], [0, 0, 1, 1], [], []>} : vector<2x112xbf16>, vector<112x512xbf16>, vector<2x512xf32> -> vector<2x512xf32>
    %c0_12 = arith.constant 0 : index
    %c0_13 = arith.constant 0 : index
    %17 = vector.load %arg5[%c0_12, %c0_13] : memref<2x512xf32, #tpu.memory_space<vmem>>, vector<2x512xf32>
    tpu.vector_store %arg5[%c0_12, %c0_13], %16 {strides = array<i32>} : memref<2x512xf32, #tpu.memory_space<vmem>>, vector<2x512xf32>,
    return
  }
  func.func @transform_0(%arg0: i32) -> (i32, i32) {
    %c0_i32 = arith.constant 0 : i32
    %c0_i32_0 = arith.constant 0 : i32
    %c0_i32_1 = arith.constant 0 : i32
    return %c0_i32, %c0_i32_0 : i32, i32
  }
  func.func @transform_1(%arg0: i32) -> (i32, i32, i32) {
    %c0_i32 = arith.constant 0 : i32
    %c0_i32_0 = arith.constant 0 : i32
    %c0_i32_1 = arith.constant 0 : i32
    return %arg0, %c0_i32, %c0_i32_0 : i32, i32, i32
  }
  func.func @transform_2(%arg0: i32) -> (i32, i32) {
    %c0_i32 = arith.constant 0 : i32
    %c0_i32_0 = arith.constant 0 : i32
    return %c0_i32, %arg0 : i32, i32
  }
  func.func @transform_3(%arg0: i32) -> (i32, i32) {
    %c0_i32 = arith.constant 0 : i32
    %c0_i32_0 = arith.constant 0 : i32
    %c0_i32_1 = arith.constant 0 : i32
    return %c0_i32, %c0_i32_0 : i32, i32
  }
  func.func @transform_4(%arg0: i32) -> (i32, i32) {
    %c0_i32 = arith.constant 0 : i32
    %c0_i32_0 = arith.constant 0 : i32
    return %c0_i32, %arg0 : i32, i32
  }
}

</mosaic_0001>

<llo_original>
// kernel: resnet_mil_forward.1
$region0: #{resnet_mil_forward.1}
  #allocation0 [shape = 'u32[]', space=smem, size = 0x4, offset = 0x4, fixed_abs, tag = 'smem constant byte address 0x4 - core index']
  #allocation1 [shape = 'u32[144,128]{1,0:T(1,128)}', space=vmem, size = 0x12000, scoped, tag = 'internal scratch']
  %s0 = inlined_call_operand.vmem [shape: bf16[112,2048], index: 0, kind: input, shape index: {}]
  %s1 = inlined_call_operand.hbm [shape: bf16[2,2048,512], index: 1, kind: input, shape index: {}]
  %s2 = inlined_call_operand.hbm [shape: f32[1,1024], index: 2, kind: input, shape index: {}]
  %s3 = inlined_call_operand.vmem [shape: bf16[2,112], index: 3, kind: input, shape index: {}]
  %s4 = inlined_call_operand.hbm [shape: f32[2,1024], index: 4, kind: output, shape index: {}]
  %s5 = sld [smem:[#allocation0]]
  $region57: #{resnet_mil_forward.1} parent=0
    _
  %s7 = ssub.s32 1, %s5
  %s8 = scalar_select 0, %s7, %s5
  $region1: #{resnet_mil_forward.1} parent=0
    #allocation2 [shape = 'u8[4194304]{0}', space=vmem, size = 0x400000, scoped, tag = 'input window, operand 1']
    #allocation3 [shape = 's32[2]{0}', space=sflag, size = 0x8, scoped, tag = 'scoped memory for resnet_mil_forward.1']
    #allocation4 [shape = 's32[2]{0}', space=sflag, size = 0x8, scoped, tag = 'scoped memory for resnet_mil_forward.1']
    #allocation5 [shape = 'u8[4096]{0}', space=vmem, size = 0x1000, scoped, tag = 'input window, operand 2']
    #allocation6 [shape = 's32[2]{0}', space=sflag, size = 0x8, scoped, tag = 'scoped memory for resnet_mil_forward.1']
    #allocation7 [shape = 'u8[8192]{0}', space=vmem, size = 0x2000, scoped, tag = 'output window, operand 0']
    %9 = vsyncpa [#allocation3], 0
    %s10 = scalar_lea.sflag [#allocation3], 1
    %11 = vsyncpa %s10, 0
    %12 = vsyncpa [#allocation6], 0
    %s13 = scalar_lea.sflag [#allocation6], 1
    %14 = vsyncpa %s13, 0
    %15 = vsyncpa [#allocation4], 0
    %s16 = scalar_lea.sflag [#allocation4], 1
    %17 = vsyncpa %s16, 0
    loop: start=0, step=1, limit=4
    $region2: #{resnet_mil_forward.1} parent=1 // loop_pre_header
      _
    $region3: #{resnet_mil_forward.1} parent=1 // loop_header
      %s19 = sphi 0, %s23
      %p20 = scmp.ge.s32.totalorder %s19, 4
      %s27 = sphi 0, %s27
      %s29 = sphi 0, %s27
      %s30 = sphi 0, %s29
      %s44 = sphi 0, %s30
      %s50 = sphi 0, %s52
      %s53 = sphi 0, %s50
      %s54 = sphi 0, %s53
      %s70 = sphi 0, %s54
      %s76 = sphi 0, %s78
      %s79 = sphi 0, %s76
      %s80 = sphi 0, %s79
      %s96 = sphi 0, %s80
      %s100 = sphi 0, %s100
      %s102 = sphi 0, %s100
      %s103 = sphi 0, %s102
      %s117 = sphi 0, %s103
      %s123 = sphi 0, %s125
      %s126 = sphi 0, %s123
      %s127 = sphi 0, %s126
      %s143 = sphi 0, %s127
    $region4: #{resnet_mil_forward.1} parent=1 // loop_header_branch
      %22 = sbr.rel (%p20) target = $region8
    $region5: #{resnet_mil_forward.1} parent=1 // loop_body
      %s24 = ssub.s32 %s19, 1
      %s25 = ssub.s32 %s19, 2
      %s26 = sadd.s32 %s19, 1
      %s28 = sadd.s32 %s27, 1
      %p31 = scmp.eq.s32.totalorder %s19, 1
      %p32 = scmp.ne.s32.totalorder %s27, %s29
      %p33 = scmp.eq.s32.totalorder %s19, 0
      %p34 = por %p32, %p33
      %p35 = scmp.ne.s32.totalorder %s27, %s29
      %p36 = scmp.eq.s32.totalorder %s24, 1
      %p37 = por %p35, %p36
      %p38 = scmp.ne.s32.totalorder %s29, %s30
      %p39 = scmp.eq.s32.totalorder %s24, 0
      %p40 = por %p38, %p39
      %p41 = scmp.ne.s32.totalorder %s29, %s30
      %p42 = scmp.eq.s32.totalorder %s25, 1
      %p43 = por %p41, %p42
      %p45 = scmp.ne.s32.totalorder %s30, %s44
      %p46 = scmp.eq.s32.totalorder %s25, 0
      %p47 = por %p45, %p46
      %s48 = ssub.s32 %s19, %s26
      %p49 = scmp.eq.s32.totalorder %s48, 0
      %s51 = sadd.s32 %s50, 1
      %s52 = scalar_select %p49, %s50, %s51
      %p55 = pneg %p49
      %p56 = scmp.eq.s32.totalorder %s19, 1
      %p57 = por %p55, %p56
      %p58 = scmp.ne.s32.totalorder %s50, %s53
      %p59 = scmp.eq.s32.totalorder %s19, 0
      %p60 = por %p58, %p59
      %p61 = scmp.ne.s32.totalorder %s50, %s53
      %p62 = scmp.eq.s32.totalorder %s24, 1
      %p63 = por %p61, %p62
      %p64 = scmp.ne.s32.totalorder %s53, %s54
      %p65 = scmp.eq.s32.totalorder %s24, 0
      %p66 = por %p64, %p65
      %p67 = scmp.ne.s32.totalorder %s53, %s54
      %p68 = scmp.eq.s32.totalorder %s25, 1
      %p69 = por %p67, %p68
      %p71 = scmp.ne.s32.totalorder %s54, %s70
      %p72 = scmp.eq.s32.totalorder %s25, 0
      %p73 = por %p71, %p72
      %s74 = ssub.s32 %s19, %s26
      %p75 = scmp.eq.s32.totalorder %s74, 0
      %s77 = sadd.s32 %s76, 1
      %s78 = scalar_select %p75, %s76, %s77
      %p81 = pneg %p75
      %p82 = scmp.eq.s32.totalorder %s19, 1
      %p83 = por %p81, %p82
      %p84 = scmp.ne.s32.totalorder %s76, %s79
      %p85 = scmp.eq.s32.totalorder %s19, 0
      %p86 = por %p84, %p85
      %p87 = scmp.ne.s32.totalorder %s76, %s79
      %p88 = scmp.eq.s32.totalorder %s24, 1
      %p89 = por %p87, %p88
      %p90 = scmp.ne.s32.totalorder %s79, %s80
      %p91 = scmp.eq.s32.totalorder %s24, 0
      %p92 = por %p90, %p91
      %p93 = scmp.ne.s32.totalorder %s79, %s80
      %p94 = scmp.eq.s32.totalorder %s25, 1
      %p95 = por %p93, %p94
      %p97 = scmp.ne.s32.totalorder %s80, %s96
      %p98 = scmp.eq.s32.totalorder %s25, 0
      %p99 = por %p97, %p98
      %s101 = sadd.s32 %s100, 1
      %p104 = scmp.eq.s32.totalorder %s19, 1
      %p105 = scmp.ne.s32.totalorder %s100, %s102
      %p106 = scmp.eq.s32.totalorder %s19, 0
      %p107 = por %p105, %p106
      %p108 = scmp.ne.s32.totalorder %s100, %s102
      %p109 = scmp.eq.s32.totalorder %s24, 1
      %p110 = por %p108, %p109
      %p111 = scmp.ne.s32.totalorder %s102, %s103
      %p112 = scmp.eq.s32.totalorder %s24, 0
      %p113 = por %p111, %p112
      %p114 = scmp.ne.s32.totalorder %s102, %s103
      %p115 = scmp.eq.s32.totalorder %s25, 1
      %p116 = por %p114, %p115
      %p118 = scmp.ne.s32.totalorder %s103, %s117
      %p119 = scmp.eq.s32.totalorder %s25, 0
      %p120 = por %p118, %p119
      %s121 = ssub.s32 %s19, %s26
      %p122 = scmp.eq.s32.totalorder %s121, 0
      %s124 = sadd.s32 %s123, 1
      %s125 = scalar_select %p122, %s123, %s124
      %p128 = pneg %p122
      %p129 = scmp.eq.s32.totalorder %s19, 1
      %p130 = por %p128, %p129
      %p131 = scmp.ne.s32.totalorder %s123, %s126
      %p132 = scmp.eq.s32.totalorder %s19, 0
      %p133 = por %p131, %p132
      %p134 = scmp.ne.s32.totalorder %s123, %s126
      %p135 = scmp.eq.s32.totalorder %s24, 1
      %p136 = por %p134, %p135
      %p137 = scmp.ne.s32.totalorder %s126, %s127
      %p138 = scmp.eq.s32.totalorder %s24, 0
      %p139 = por %p137, %p138
      %p140 = scmp.ne.s32.totalorder %s126, %s127
      %p141 = scmp.eq.s32.totalorder %s25, 1
      %p142 = por %p140, %p141
      %p144 = scmp.ne.s32.totalorder %s127, %s143
      %p145 = scmp.eq.s32.totalorder %s25, 0
      %p146 = por %p144, %p145
      %p147 = scmp.le.s32.totalorder 1, %s19
      %p148 = scmp.lt.s32.totalorder %s19, 3
      %p149 = pnand %p147, %p148
      %p150 = pneg %p149
      // Predicated region
      $region9: #{resnet_mil_forward.1} parent=5 // pred_check
        _
      $region10: #{resnet_mil_forward.1} parent=5 // pred_check_branch
        %152 = sbr.rel (%p149) target = $region12
      $region11: #{resnet_mil_forward.1} parent=5 // pred_region
        %s153 = ssub.s32 %s19, 1
        // Predicated region
        $region13: #{resnet_mil_forward.1} parent=11 // pred_check
          %p154 = pneg %p40
        $region14: #{resnet_mil_forward.1} parent=11 // pred_check_branch
          %156 = sbr.rel (%p154) target = $region16
        $region15: #{resnet_mil_forward.1} parent=11 // pred_region
          _
        $region16: #{resnet_mil_forward.1} parent=11 // pred_fallthru
          _
        // Predicated region
        $region17: #{resnet_mil_forward.1} parent=11 // pred_check
          %p157 = pneg %p113
        $region18: #{resnet_mil_forward.1} parent=11 // pred_check_branch
          %159 = sbr.rel (%p157) target = $region20
        $region19: #{resnet_mil_forward.1} parent=11 // pred_region
          _
        $region20: #{resnet_mil_forward.1} parent=11 // pred_fallthru
          _
      $region12: #{resnet_mil_forward.1} parent=5 // pred_fallthru
        _
      %p160 = scmp.lt.s32.totalorder %s19, 2
      // Predicated region
      $region21: #{resnet_mil_forward.1} parent=5 // pred_check
        %p161 = pneg %p160
      $region22: #{resnet_mil_forward.1} parent=5 // pred_check_branch
        %163 = sbr.rel (%p161) target = $region24
      $region23: #{resnet_mil_forward.1} parent=5 // pred_region
        // Predicated region
        $region25: #{resnet_mil_forward.1} parent=23 // pred_check
          %p164 = pneg %p60
        $region26: #{resnet_mil_forward.1} parent=23 // pred_check_branch
          %166 = sbr.rel (%p164) target = $region28
        $region27: #{resnet_mil_forward.1} parent=23 // pred_region
          %s167 = sand.u32 %s50, 1
          %s168 = scalar_lea.sflag [#allocation3], %s167
          %s169 = sand.u32 %s50, 1
          %s170 = smul.addr %s169, 4096
          %s171 = scalar_lea.vmem [#allocation2], %s170
          %s173 = ssub.s32 65536, 65536
          %174 = vsyncadd %s168, %s173
          %s175 = smul.addr %s19, 1024
          %s176 = smul.addr %s175, 64
          %s177 = scalar_lea.hbm %s1, %s176
          %s178 = sshll.u32 %s171, 4
          %s179 = int_to_ptr.vmem [resolvable:$true] %s178
          %184 = dma.hbm_to_vmem [thread:$0]  %s177, 65536, %s179, %s168, 256, 256, 16
        $region28: #{resnet_mil_forward.1} parent=23 // pred_fallthru
          _
        // Predicated region
        $region29: #{resnet_mil_forward.1} parent=23 // pred_check
          %p185 = pneg %p86
        $region30: #{resnet_mil_forward.1} parent=23 // pred_check_branch
          %187 = sbr.rel (%p185) target = $region32
        $region31: #{resnet_mil_forward.1} parent=23 // pred_region
          %s188 = sand.u32 %s76, 1
          %s189 = scalar_lea.sflag [#allocation6], %s188
          %s190 = sand.u32 %s76, 1
          %s191 = smul.addr %s190, 4
          %s192 = scalar_lea.vmem [#allocation5], %s191
          %s193 = smul.u32 4, %s19
          %s195 = ssub.s32 64, 64
          %196 = vsyncadd %s189, %s195
          %s197 = smul.addr %s193, 16
          %s198 = scalar_lea.hbm %s2, %s197
          %s200 = sshll.u32 %s192, 4
          %s201 = int_to_ptr.vmem [resolvable:$true] %s200
          %203 = dma.hbm_to_vmem [thread:$0]  %s198, 64, %s201, %s189
        $region32: #{resnet_mil_forward.1} parent=23 // pred_fallthru
          _
      $region24: #{resnet_mil_forward.1} parent=5 // pred_fallthru
        _
      %p204 = scmp.le.s32.totalorder 1, %s19
      %p205 = scmp.lt.s32.totalorder %s19, 3
      %p206 = pnand %p204, %p205
      %p207 = pneg %p206
      // Predicated region
      $region33: #{resnet_mil_forward.1} parent=5 // pred_check
        _
      $region34: #{resnet_mil_forward.1} parent=5 // pred_check_branch
        %209 = sbr.rel (%p206) target = $region36
      $region35: #{resnet_mil_forward.1} parent=5 // pred_region
        %s210 = ssub.s32 %s19, 1
        %s211 = sand.u32 %s53, 1
        %s212 = scalar_lea.sflag [#allocation3], %s211
        %s213 = sand.u32 %s53, 1
        %s214 = smul.addr %s213, 4096
        %s215 = scalar_lea.vmem [#allocation2], %s214
        // Predicated region
        $region37: #{resnet_mil_forward.1} parent=35 // pred_check
          %p216 = pneg %p66
        $region38: #{resnet_mil_forward.1} parent=35 // pred_check_branch
          %218 = sbr.rel (%p216) target = $region40
        $region39: #{resnet_mil_forward.1} parent=35 // pred_region
          %219 = dma.done %s212, 65536
        $region40: #{resnet_mil_forward.1} parent=35 // pred_fallthru
          _
        %s220 = sand.u32 %s79, 1
        %s221 = scalar_lea.sflag [#allocation6], %s220
        %s222 = sand.u32 %s79, 1
        %s223 = smul.addr %s222, 4
        %s224 = scalar_lea.vmem [#allocation5], %s223
        // Predicated region
        $region41: #{resnet_mil_forward.1} parent=35 // pred_check
          %p225 = pneg %p92
        $region42: #{resnet_mil_forward.1} parent=35 // pred_check_branch
          %227 = sbr.rel (%p225) target = $region44
        $region43: #{resnet_mil_forward.1} parent=35 // pred_region
          %228 = dma.done %s221, 64
        $region44: #{resnet_mil_forward.1} parent=35 // pred_fallthru
          _
        %p229 = pneg %p40
        %p230 = pneg %p37
        %s231 = sand.u32 %s53, 1
        %s232 = scalar_lea.sflag [#allocation3], %s231
        %s233 = sand.u32 %s53, 1
        %s234 = smul.addr %s233, 4096
        %s235 = scalar_lea.vmem [#allocation2], %s234
        %p236 = pneg %p66
        %p237 = pneg %p63
        %s238 = sand.u32 %s79, 1
        %s239 = scalar_lea.sflag [#allocation6], %s238
        %s240 = sand.u32 %s79, 1
        %s241 = smul.addr %s240, 4
        %s242 = scalar_lea.vmem [#allocation5], %s241
        %p243 = pneg %p92
        %p244 = pneg %p89
        %p245 = pneg %p113
        %p246 = pneg %p110
        %p247 = pneg %p139
        %p248 = pneg %p136
        %s249 = sand.u32 %s126, 1
        %s250 = scalar_lea.sflag [#allocation4], %s249
        %s251 = sand.u32 %s126, 1
        %s252 = smul.addr %s251, 8
        %s253 = scalar_lea.vmem [#allocation7], %s252
        %s254 = smul.u32 4, %s24
        %s255 = smul.u32 4, %s24
        %v257 = vld [vmem:[%s0] sm:$0xff]
        %v258 = vld [vmem:[%s0 + $0x8] sm:$0xff]
        %v259 = vld [vmem:[%s0 + $0x10] sm:$0xff]
        %v260 = vld [vmem:[%s0 + $0x18] sm:$0xff]
        %v261 = vld [vmem:[%s0 + $0x20] sm:$0xff]
        %v262 = vld [vmem:[%s0 + $0x28] sm:$0xff]
        %v263 = vld [vmem:[%s0 + $0x30] sm:$0xff]
        %v264 = vld [vmem:[%s0 + $0x38] sm:$0xff]
        %v265 = vld [vmem:[%s0 + $0x40] sm:$0xff]
        %v266 = vld [vmem:[%s0 + $0x48] sm:$0xff]
        %v267 = vld [vmem:[%s0 + $0x50] sm:$0xff]
        %v268 = vld [vmem:[%s0 + $0x58] sm:$0xff]
        %v269 = vld [vmem:[%s0 + $0x60] sm:$0xff]
        %v270 = vld [vmem:[%s0 + $0x68] sm:$0xff]
        %v271 = vld [vmem:[%s0 + $0x70] sm:$0xff]
        %v272 = vld [vmem:[%s0 + $0x78] sm:$0xff]
        %v273 = vld [vmem:[%s0 + $0x80] sm:$0xff]
        %v274 = vld [vmem:[%s0 + $0x88] sm:$0xff]
        %v275 = vld [vmem:[%s0 + $0x90] sm:$0xff]
        %v276 = vld [vmem:[%s0 + $0x98] sm:$0xff]
        %v277 = vld [vmem:[%s0 + $0xa0] sm:$0xff]
        %v278 = vld [vmem:[%s0 + $0xa8] sm:$0xff]
        %v279 = vld [vmem:[%s0 + $0xb0] sm:$0xff]
        %v280 = vld [vmem:[%s0 + $0xb8] sm:$0xff]
        %v281 = vld [vmem:[%s0 + $0xc0] sm:$0xff]
        %v282 = vld [vmem:[%s0 + $0xc8] sm:$0xff]
        %v283 = vld [vmem:[%s0 + $0xd0] sm:$0xff]
        %v284 = vld [vmem:[%s0 + $0xd8] sm:$0xff]
        %v285 = vld [vmem:[%s0 + $0xe0] sm:$0xff]
        %v286 = vld [vmem:[%s0 + $0xe8] sm:$0xff]
        %v287 = vld [vmem:[%s0 + $0xf0] sm:$0xff]
        %v288 = vld [vmem:[%s0 + $0xf8] sm:$0xff]
        %v289 = vld [vmem:[%s0 + $0x100] sm:$0xff]
        %v290 = vld [vmem:[%s0 + $0x108] sm:$0xff]
        %v291 = vld [vmem:[%s0 + $0x110] sm:$0xff]
        %v292 = vld [vmem:[%s0 + $0x118] sm:$0xff]
        %v293 = vld [vmem:[%s0 + $0x120] sm:$0xff]
        %v294 = vld [vmem:[%s0 + $0x128] sm:$0xff]
        %v295 = vld [vmem:[%s0 + $0x130] sm:$0xff]
        %v296 = vld [vmem:[%s0 + $0x138] sm:$0xff]
        %v297 = vld [vmem:[%s0 + $0x140] sm:$0xff]
        %v298 = vld [vmem:[%s0 + $0x148] sm:$0xff]
        %v299 = vld [vmem:[%s0 + $0x150] sm:$0xff]
        %v300 = vld [vmem:[%s0 + $0x158] sm:$0xff]
        %v301 = vld [vmem:[%s0 + $0x160] sm:$0xff]
        %v302 = vld [vmem:[%s0 + $0x168] sm:$0xff]
        %v303 = vld [vmem:[%s0 + $0x170] sm:$0xff]
        %v304 = vld [vmem:[%s0 + $0x178] sm:$0xff]
        %v305 = vld [vmem:[%s0 + $0x180] sm:$0xff]
        %v306 = vld [vmem:[%s0 + $0x188] sm:$0xff]
        %v307 = vld [vmem:[%s0 + $0x190] sm:$0xff]
        %v308 = vld [vmem:[%s0 + $0x198] sm:$0xff]
        %v309 = vld [vmem:[%s0 + $0x1a0] sm:$0xff]
        %v310 = vld [vmem:[%s0 + $0x1a8] sm:$0xff]
        %v311 = vld [vmem:[%s0 + $0x1b0] sm:$0xff]
        %v312 = vld [vmem:[%s0 + $0x1b8] sm:$0xff]
        %v313 = vld [vmem:[%s0 + $0x1c0] sm:$0xff]
        %v314 = vld [vmem:[%s0 + $0x1c8] sm:$0xff]
        %v315 = vld [vmem:[%s0 + $0x1d0] sm:$0xff]
        %v316 = vld [vmem:[%s0 + $0x1d8] sm:$0xff]
        %v317 = vld [vmem:[%s0 + $0x1e0] sm:$0xff]
        %v318 = vld [vmem:[%s0 + $0x1e8] sm:$0xff]
        %v319 = vld [vmem:[%s0 + $0x1f0] sm:$0xff]
        %v320 = vld [vmem:[%s0 + $0x1f8] sm:$0xff]
        %v321 = vld [vmem:[%s0 + $0x200] sm:$0xff]
        %v322 = vld [vmem:[%s0 + $0x208] sm:$0xff]
        %v323 = vld [vmem:[%s0 + $0x210] sm:$0xff]
        %v324 = vld [vmem:[%s0 + $0x218] sm:$0xff]
        %v325 = vld [vmem:[%s0 + $0x220] sm:$0xff]
        %v326 = vld [vmem:[%s0 + $0x228] sm:$0xff]
        %v327 = vld [vmem:[%s0 + $0x230] sm:$0xff]
        %v328 = vld [vmem:[%s0 + $0x238] sm:$0xff]
        %v329 = vld [vmem:[%s0 + $0x240] sm:$0xff]
        %v330 = vld [vmem:[%s0 + $0x248] sm:$0xff]
        %v331 = vld [vmem:[%s0 + $0x250] sm:$0xff]
        %v332 = vld [vmem:[%s0 + $0x258] sm:$0xff]
        %v333 = vld [vmem:[%s0 + $0x260] sm:$0xff]
        %v334 = vld [vmem:[%s0 + $0x268] sm:$0xff]
        %v335 = vld [vmem:[%s0 + $0x270] sm:$0xff]
        %v336 = vld [vmem:[%s0 + $0x278] sm:$0xff]
        %v337 = vld [vmem:[%s0 + $0x280] sm:$0xff]
        %v338 = vld [vmem:[%s0 + $0x288] sm:$0xff]
        %v339 = vld [vmem:[%s0 + $0x290] sm:$0xff]
        %v340 = vld [vmem:[%s0 + $0x298] sm:$0xff]
        %v341 = vld [vmem:[%s0 + $0x2a0] sm:$0xff]
        %v342 = vld [vmem:[%s0 + $0x2a8] sm:$0xff]
        %v343 = vld [vmem:[%s0 + $0x2b0] sm:$0xff]
        %v344 = vld [vmem:[%s0 + $0x2b8] sm:$0xff]
        %v345 = vld [vmem:[%s0 + $0x2c0] sm:$0xff]
        %v346 = vld [vmem:[%s0 + $0x2c8] sm:$0xff]
        %v347 = vld [vmem:[%s0 + $0x2d0] sm:$0xff]
        %v348 = vld [vmem:[%s0 + $0x2d8] sm:$0xff]
        %v349 = vld [vmem:[%s0 + $0x2e0] sm:$0xff]
        %v350 = vld [vmem:[%s0 + $0x2e8] sm:$0xff]
        %v351 = vld [vmem:[%s0 + $0x2f0] sm:$0xff]
        %v352 = vld [vmem:[%s0 + $0x2f8] sm:$0xff]
        %v353 = vld [vmem:[%s0 + $0x300] sm:$0xff]
        %v354 = vld [vmem:[%s0 + $0x308] sm:$0xff]
        %v355 = vld [vmem:[%s0 + $0x310] sm:$0xff]
        %v356 = vld [vmem:[%s0 + $0x318] sm:$0xff]
        %v357 = vld [vmem:[%s0 + $0x320] sm:$0xff]
        %v358 = vld [vmem:[%s0 + $0x328] sm:$0xff]
        %v359 = vld [vmem:[%s0 + $0x330] sm:$0xff]
        %v360 = vld [vmem:[%s0 + $0x338] sm:$0xff]
        %v361 = vld [vmem:[%s0 + $0x340] sm:$0xff]
        %v362 = vld [vmem:[%s0 + $0x348] sm:$0xff]
        %v363 = vld [vmem:[%s0 + $0x350] sm:$0xff]
        %v364 = vld [vmem:[%s0 + $0x358] sm:$0xff]
        %v365 = vld [vmem:[%s0 + $0x360] sm:$0xff]
        %v366 = vld [vmem:[%s0 + $0x368] sm:$0xff]
        %v367 = vld [vmem:[%s0 + $0x370] sm:$0xff]
        %v368 = vld [vmem:[%s0 + $0x378] sm:$0xff]
        %v369 = vld [vmem:[%s215] sm:$0xff]
        %v370 = vld [vmem:[%s215 + $0x8] sm:$0xff]
        %v371 = vld [vmem:[%s215 + $0x10] sm:$0xff]
        %v372 = vld [vmem:[%s215 + $0x18] sm:$0xff]
        %v373 = vld [vmem:[%s215 + $0x20] sm:$0xff]
        %v374 = vld [vmem:[%s215 + $0x28] sm:$0xff]
        %v375 = vld [vmem:[%s215 + $0x30] sm:$0xff]
        %v376 = vld [vmem:[%s215 + $0x38] sm:$0xff]
        %v377 = vld [vmem:[%s215 + $0x40] sm:$0xff]
        %v378 = vld [vmem:[%s215 + $0x48] sm:$0xff]
        %v379 = vld [vmem:[%s215 + $0x50] sm:$0xff]
        %v380 = vld [vmem:[%s215 + $0x58] sm:$0xff]
        %v381 = vld [vmem:[%s215 + $0x60] sm:$0xff]
        %v382 = vld [vmem:[%s215 + $0x68] sm:$0xff]
        %v383 = vld [vmem:[%s215 + $0x70] sm:$0xff]
        %v384 = vld [vmem:[%s215 + $0x78] sm:$0xff]
        %v385 = vld [vmem:[%s215 + $0x80] sm:$0xff]
        %v386 = vld [vmem:[%s215 + $0x88] sm:$0xff]
        %v387 = vld [vmem:[%s215 + $0x90] sm:$0xff]
        %v388 = vld [vmem:[%s215 + $0x98] sm:$0xff]
        %v389 = vld [vmem:[%s215 + $0xa0] sm:$0xff]
        %v390 = vld [vmem:[%s215 + $0xa8] sm:$0xff]
        %v391 = vld [vmem:[%s215 + $0xb0] sm:$0xff]
        %v392 = vld [vmem:[%s215 + $0xb8] sm:$0xff]
        %v393 = vld [vmem:[%s215 + $0xc0] sm:$0xff]
        %v394 = vld [vmem:[%s215 + $0xc8] sm:$0xff]
        %v395 = vld [vmem:[%s215 + $0xd0] sm:$0xff]
        %v396 = vld [vmem:[%s215 + $0xd8] sm:$0xff]
        %v397 = vld [vmem:[%s215 + $0xe0] sm:$0xff]
        %v398 = vld [vmem:[%s215 + $0xe8] sm:$0xff]
        %v399 = vld [vmem:[%s215 + $0xf0] sm:$0xff]
        %v400 = vld [vmem:[%s215 + $0xf8] sm:$0xff]
        %v401 = vld [vmem:[%s215 + $0x100] sm:$0xff]
        %v402 = vld [vmem:[%s215 + $0x108] sm:$0xff]
        %v403 = vld [vmem:[%s215 + $0x110] sm:$0xff]
        %v404 = vld [vmem:[%s215 + $0x118] sm:$0xff]
        %v405 = vld [vmem:[%s215 + $0x120] sm:$0xff]
        %v406 = vld [vmem:[%s215 + $0x128] sm:$0xff]
        %v407 = vld [vmem:[%s215 + $0x130] sm:$0xff]
        %v408 = vld [vmem:[%s215 + $0x138] sm:$0xff]
        %v409 = vld [vmem:[%s215 + $0x140] sm:$0xff]
        %v410 = vld [vmem:[%s215 + $0x148] sm:$0xff]
        %v411 = vld [vmem:[%s215 + $0x150] sm:$0xff]
        %v412 = vld [vmem:[%s215 + $0x158] sm:$0xff]
        %v413 = vld [vmem:[%s215 + $0x160] sm:$0xff]
        %v414 = vld [vmem:[%s215 + $0x168] sm:$0xff]
        %v415 = vld [vmem:[%s215 + $0x170] sm:$0xff]
        %v416 = vld [vmem:[%s215 + $0x178] sm:$0xff]
        %v417 = vld [vmem:[%s215 + $0x180] sm:$0xff]
        %v418 = vld [vmem:[%s215 + $0x188] sm:$0xff]
        %v419 = vld [vmem:[%s215 + $0x190] sm:$0xff]
        %v420 = vld [vmem:[%s215 + $0x198] sm:$0xff]
        %v421 = vld [vmem:[%s215 + $0x1a0] sm:$0xff]
        %v422 = vld [vmem:[%s215 + $0x1a8] sm:$0xff]
        %v423 = vld [vmem:[%s215 + $0x1b0] sm:$0xff]
        %v424 = vld [vmem:[%s215 + $0x1b8] sm:$0xff]
        %v425 = vld [vmem:[%s215 + $0x1c0] sm:$0xff]
        %v426 = vld [vmem:[%s215 + $0x1c8] sm:$0xff]
        %v427 = vld [vmem:[%s215 + $0x1d0] sm:$0xff]
        %v428 = vld [vmem:[%s215 + $0x1d8] sm:$0xff]
        %v429 = vld [vmem:[%s215 + $0x1e0] sm:$0xff]
        %v430 = vld [vmem:[%s215 + $0x1e8] sm:$0xff]
        %v431 = vld [vmem:[%s215 + $0x1f0] sm:$0xff]
        %v432 = vld [vmem:[%s215 + $0x1f8] sm:$0xff]
        %v433 = vld [vmem:[%s215 + $0x200] sm:$0xff]
        %v434 = vld [vmem:[%s215 + $0x208] sm:$0xff]
        %v435 = vld [vmem:[%s215 + $0x210] sm:$0xff]
        %v436 = vld [vmem:[%s215 + $0x218] sm:$0xff]
        %v437 = vld [vmem:[%s215 + $0x220] sm:$0xff]
        %v438 = vld [vmem:[%s215 + $0x228] sm:$0xff]
        %v439 = vld [vmem:[%s215 + $0x230] sm:$0xff]
        %v440 = vld [vmem:[%s215 + $0x238] sm:$0xff]
        %v441 = vld [vmem:[%s215 + $0x240] sm:$0xff]
        %v442 = vld [vmem:[%s215 + $0x248] sm:$0xff]
        %v443 = vld [vmem:[%s215 + $0x250] sm:$0xff]
        %v444 = vld [vmem:[%s215 + $0x258] sm:$0xff]
        %v445 = vld [vmem:[%s215 + $0x260] sm:$0xff]
        %v446 = vld [vmem:[%s215 + $0x268] sm:$0xff]
        %v447 = vld [vmem:[%s215 + $0x270] sm:$0xff]
        %v448 = vld [vmem:[%s215 + $0x278] sm:$0xff]
        %v449 = vld [vmem:[%s215 + $0x280] sm:$0xff]
        %v450 = vld [vmem:[%s215 + $0x288] sm:$0xff]
        %v451 = vld [vmem:[%s215 + $0x290] sm:$0xff]
        %v452 = vld [vmem:[%s215 + $0x298] sm:$0xff]
        %v453 = vld [vmem:[%s215 + $0x2a0] sm:$0xff]
        %v454 = vld [vmem:[%s215 + $0x2a8] sm:$0xff]
        %v455 = vld [vmem:[%s215 + $0x2b0] sm:$0xff]
        %v456 = vld [vmem:[%s215 + $0x2b8] sm:$0xff]
        %v457 = vld [vmem:[%s215 + $0x2c0] sm:$0xff]
        %v458 = vld [vmem:[%s215 + $0x2c8] sm:$0xff]
        %v459 = vld [vmem:[%s215 + $0x2d0] sm:$0xff]
        %v460 = vld [vmem:[%s215 + $0x2d8] sm:$0xff]
        %v461 = vld [vmem:[%s215 + $0x2e0] sm:$0xff]
        %v462 = vld [vmem:[%s215 + $0x2e8] sm:$0xff]
        %v463 = vld [vmem:[%s215 + $0x2f0] sm:$0xff]
        %v464 = vld [vmem:[%s215 + $0x2f8] sm:$0xff]
        %v465 = vld [vmem:[%s215 + $0x300] sm:$0xff]
        %v466 = vld [vmem:[%s215 + $0x308] sm:$0xff]
        %v467 = vld [vmem:[%s215 + $0x310] sm:$0xff]
        %v468 = vld [vmem:[%s215 + $0x318] sm:$0xff]
        %v469 = vld [vmem:[%s215 + $0x320] sm:$0xff]
        %v470 = vld [vmem:[%s215 + $0x328] sm:$0xff]
        %v471 = vld [vmem:[%s215 + $0x330] sm:$0xff]
        %v472 = vld [vmem:[%s215 + $0x338] sm:$0xff]
        %v473 = vld [vmem:[%s215 + $0x340] sm:$0xff]
        %v474 = vld [vmem:[%s215 + $0x348] sm:$0xff]
        %v475 = vld [vmem:[%s215 + $0x350] sm:$0xff]
        %v476 = vld [vmem:[%s215 + $0x358] sm:$0xff]
        %v477 = vld [vmem:[%s215 + $0x360] sm:$0xff]
        %v478 = vld [vmem:[%s215 + $0x368] sm:$0xff]
        %v479 = vld [vmem:[%s215 + $0x370] sm:$0xff]
        %v480 = vld [vmem:[%s215 + $0x378] sm:$0xff]
        %v481 = vld [vmem:[%s215 + $0x380] sm:$0xff]
        %v482 = vld [vmem:[%s215 + $0x388] sm:$0xff]
        %v483 = vld [vmem:[%s215 + $0x390] sm:$0xff]
        %v484 = vld [vmem:[%s215 + $0x398] sm:$0xff]
        %v485 = vld [vmem:[%s215 + $0x3a0] sm:$0xff]
        %v486 = vld [vmem:[%s215 + $0x3a8] sm:$0xff]
        %v487 = vld [vmem:[%s215 + $0x3b0] sm:$0xff]
        %v488 = vld [vmem:[%s215 + $0x3b8] sm:$0xff]
        %v489 = vld [vmem:[%s215 + $0x3c0] sm:$0xff]
        %v490 = vld [vmem:[%s215 + $0x3c8] sm:$0xff]
        %v491 = vld [vmem:[%s215 + $0x3d0] sm:$0xff]
        %v492 = vld [vmem:[%s215 + $0x3d8] sm:$0xff]
        %v493 = vld [vmem:[%s215 + $0x3e0] sm:$0xff]
        %v494 = vld [vmem:[%s215 + $0x3e8] sm:$0xff]
        %v495 = vld [vmem:[%s215 + $0x3f0] sm:$0xff]
        %v496 = vld [vmem:[%s215 + $0x3f8] sm:$0xff]
        %v497 = vld [vmem:[%s215 + $0x400] sm:$0xff]
        %v498 = vld [vmem:[%s215 + $0x408] sm:$0xff]
        %v499 = vld [vmem:[%s215 + $0x410] sm:$0xff]
        %v500 = vld [vmem:[%s215 + $0x418] sm:$0xff]
        %v501 = vld [vmem:[%s215 + $0x420] sm:$0xff]
        %v502 = vld [vmem:[%s215 + $0x428] sm:$0xff]
        %v503 = vld [vmem:[%s215 + $0x430] sm:$0xff]
        %v504 = vld [vmem:[%s215 + $0x438] sm:$0xff]
        %v505 = vld [vmem:[%s215 + $0x440] sm:$0xff]
        %v506 = vld [vmem:[%s215 + $0x448] sm:$0xff]
        %v507 = vld [vmem:[%s215 + $0x450] sm:$0xff]
        %v508 = vld [vmem:[%s215 + $0x458] sm:$0xff]
        %v509 = vld [vmem:[%s215 + $0x460] sm:$0xff]
        %v510 = vld [vmem:[%s215 + $0x468] sm:$0xff]
        %v511 = vld [vmem:[%s215 + $0x470] sm:$0xff]
        %v512 = vld [vmem:[%s215 + $0x478] sm:$0xff]
        %v513 = vld [vmem:[%s215 + $0x480] sm:$0xff]
        %v514 = vld [vmem:[%s215 + $0x488] sm:$0xff]
        %v515 = vld [vmem:[%s215 + $0x490] sm:$0xff]
        %v516 = vld [vmem:[%s215 + $0x498] sm:$0xff]
        %v517 = vld [vmem:[%s215 + $0x4a0] sm:$0xff]
        %v518 = vld [vmem:[%s215 + $0x4a8] sm:$0xff]
        %v519 = vld [vmem:[%s215 + $0x4b0] sm:$0xff]
        %v520 = vld [vmem:[%s215 + $0x4b8] sm:$0xff]
        %v521 = vld [vmem:[%s215 + $0x4c0] sm:$0xff]
        %v522 = vld [vmem:[%s215 + $0x4c8] sm:$0xff]
        %v523 = vld [vmem:[%s215 + $0x4d0] sm:$0xff]
        %v524 = vld [vmem:[%s215 + $0x4d8] sm:$0xff]
        %v525 = vld [vmem:[%s215 + $0x4e0] sm:$0xff]
        %v526 = vld [vmem:[%s215 + $0x4e8] sm:$0xff]
        %v527 = vld [vmem:[%s215 + $0x4f0] sm:$0xff]
        %v528 = vld [vmem:[%s215 + $0x4f8] sm:$0xff]
        %v529 = vld [vmem:[%s215 + $0x500] sm:$0xff]
        %v530 = vld [vmem:[%s215 + $0x508] sm:$0xff]
        %v531 = vld [vmem:[%s215 + $0x510] sm:$0xff]
        %v532 = vld [vmem:[%s215 + $0x518] sm:$0xff]
        %v533 = vld [vmem:[%s215 + $0x520] sm:$0xff]
        %v534 = vld [vmem:[%s215 + $0x528] sm:$0xff]
        %v535 = vld [vmem:[%s215 + $0x530] sm:$0xff]
        %v536 = vld [vmem:[%s215 + $0x538] sm:$0xff]
        %v537 = vld [vmem:[%s215 + $0x540] sm:$0xff]
        %v538 = vld [vmem:[%s215 + $0x548] sm:$0xff]
        %v539 = vld [vmem:[%s215 + $0x550] sm:$0xff]
        %v540 = vld [vmem:[%s215 + $0x558] sm:$0xff]
        %v541 = vld [vmem:[%s215 + $0x560] sm:$0xff]
        %v542 = vld [vmem:[%s215 + $0x568] sm:$0xff]
        %v543 = vld [vmem:[%s215 + $0x570] sm:$0xff]
        %v544 = vld [vmem:[%s215 + $0x578] sm:$0xff]
        %v545 = vld [vmem:[%s215 + $0x580] sm:$0xff]
        %v546 = vld [vmem:[%s215 + $0x588] sm:$0xff]
        %v547 = vld [vmem:[%s215 + $0x590] sm:$0xff]
        %v548 = vld [vmem:[%s215 + $0x598] sm:$0xff]
        %v549 = vld [vmem:[%s215 + $0x5a0] sm:$0xff]
        %v550 = vld [vmem:[%s215 + $0x5a8] sm:$0xff]
        %v551 = vld [vmem:[%s215 + $0x5b0] sm:$0xff]
        %v552 = vld [vmem:[%s215 + $0x5b8] sm:$0xff]
        %v553 = vld [vmem:[%s215 + $0x5c0] sm:$0xff]
        %v554 = vld [vmem:[%s215 + $0x5c8] sm:$0xff]
        %v555 = vld [vmem:[%s215 + $0x5d0] sm:$0xff]
        %v556 = vld [vmem:[%s215 + $0x5d8] sm:$0xff]
        %v557 = vld [vmem:[%s215 + $0x5e0] sm:$0xff]
        %v558 = vld [vmem:[%s215 + $0x5e8] sm:$0xff]
        %v559 = vld [vmem:[%s215 + $0x5f0] sm:$0xff]
        %v560 = vld [vmem:[%s215 + $0x5f8] sm:$0xff]
        %v561 = vld [vmem:[%s215 + $0x600] sm:$0xff]
        %v562 = vld [vmem:[%s215 + $0x608] sm:$0xff]
        %v563 = vld [vmem:[%s215 + $0x610] sm:$0xff]
        %v564 = vld [vmem:[%s215 + $0x618] sm:$0xff]
        %v565 = vld [vmem:[%s215 + $0x620] sm:$0xff]
        %v566 = vld [vmem:[%s215 + $0x628] sm:$0xff]
        %v567 = vld [vmem:[%s215 + $0x630] sm:$0xff]
        %v568 = vld [vmem:[%s215 + $0x638] sm:$0xff]
        %v569 = vld [vmem:[%s215 + $0x640] sm:$0xff]
        %v570 = vld [vmem:[%s215 + $0x648] sm:$0xff]
        %v571 = vld [vmem:[%s215 + $0x650] sm:$0xff]
        %v572 = vld [vmem:[%s215 + $0x658] sm:$0xff]
        %v573 = vld [vmem:[%s215 + $0x660] sm:$0xff]
        %v574 = vld [vmem:[%s215 + $0x668] sm:$0xff]
        %v575 = vld [vmem:[%s215 + $0x670] sm:$0xff]
        %v576 = vld [vmem:[%s215 + $0x678] sm:$0xff]
        %v577 = vld [vmem:[%s215 + $0x680] sm:$0xff]
        %v578 = vld [vmem:[%s215 + $0x688] sm:$0xff]
        %v579 = vld [vmem:[%s215 + $0x690] sm:$0xff]
        %v580 = vld [vmem:[%s215 + $0x698] sm:$0xff]
        %v581 = vld [vmem:[%s215 + $0x6a0] sm:$0xff]
        %v582 = vld [vmem:[%s215 + $0x6a8] sm:$0xff]
        %v583 = vld [vmem:[%s215 + $0x6b0] sm:$0xff]
        %v584 = vld [vmem:[%s215 + $0x6b8] sm:$0xff]
        %v585 = vld [vmem:[%s215 + $0x6c0] sm:$0xff]
        %v586 = vld [vmem:[%s215 + $0x6c8] sm:$0xff]
        %v587 = vld [vmem:[%s215 + $0x6d0] sm:$0xff]
        %v588 = vld [vmem:[%s215 + $0x6d8] sm:$0xff]
        %v589 = vld [vmem:[%s215 + $0x6e0] sm:$0xff]
        %v590 = vld [vmem:[%s215 + $0x6e8] sm:$0xff]
        %v591 = vld [vmem:[%s215 + $0x6f0] sm:$0xff]
        %v592 = vld [vmem:[%s215 + $0x6f8] sm:$0xff]
        %v593 = vld [vmem:[%s215 + $0x700] sm:$0xff]
        %v594 = vld [vmem:[%s215 + $0x708] sm:$0xff]
        %v595 = vld [vmem:[%s215 + $0x710] sm:$0xff]
        %v596 = vld [vmem:[%s215 + $0x718] sm:$0xff]
        %v597 = vld [vmem:[%s215 + $0x720] sm:$0xff]
        %v598 = vld [vmem:[%s215 + $0x728] sm:$0xff]
        %v599 = vld [vmem:[%s215 + $0x730] sm:$0xff]
        %v600 = vld [vmem:[%s215 + $0x738] sm:$0xff]
        %v601 = vld [vmem:[%s215 + $0x740] sm:$0xff]
        %v602 = vld [vmem:[%s215 + $0x748] sm:$0xff]
        %v603 = vld [vmem:[%s215 + $0x750] sm:$0xff]
        %v604 = vld [vmem:[%s215 + $0x758] sm:$0xff]
        %v605 = vld [vmem:[%s215 + $0x760] sm:$0xff]
        %v606 = vld [vmem:[%s215 + $0x768] sm:$0xff]
        %v607 = vld [vmem:[%s215 + $0x770] sm:$0xff]
        %v608 = vld [vmem:[%s215 + $0x778] sm:$0xff]
        %v609 = vld [vmem:[%s215 + $0x780] sm:$0xff]
        %v610 = vld [vmem:[%s215 + $0x788] sm:$0xff]
        %v611 = vld [vmem:[%s215 + $0x790] sm:$0xff]
        %v612 = vld [vmem:[%s215 + $0x798] sm:$0xff]
        %v613 = vld [vmem:[%s215 + $0x7a0] sm:$0xff]
        %v614 = vld [vmem:[%s215 + $0x7a8] sm:$0xff]
        %v615 = vld [vmem:[%s215 + $0x7b0] sm:$0xff]
        %v616 = vld [vmem:[%s215 + $0x7b8] sm:$0xff]
        %v617 = vld [vmem:[%s215 + $0x7c0] sm:$0xff]
        %v618 = vld [vmem:[%s215 + $0x7c8] sm:$0xff]
        %v619 = vld [vmem:[%s215 + $0x7d0] sm:$0xff]
        %v620 = vld [vmem:[%s215 + $0x7d8] sm:$0xff]
        %v621 = vld [vmem:[%s215 + $0x7e0] sm:$0xff]
        %v622 = vld [vmem:[%s215 + $0x7e8] sm:$0xff]
        %v623 = vld [vmem:[%s215 + $0x7f0] sm:$0xff]
        %v624 = vld [vmem:[%s215 + $0x7f8] sm:$0xff]
        %v625 = vld [vmem:[%s215 + $0x800] sm:$0xff]
        %v626 = vld [vmem:[%s215 + $0x808] sm:$0xff]
        %v627 = vld [vmem:[%s215 + $0x810] sm:$0xff]
        %v628 = vld [vmem:[%s215 + $0x818] sm:$0xff]
        %v629 = vld [vmem:[%s215 + $0x820] sm:$0xff]
        %v630 = vld [vmem:[%s215 + $0x828] sm:$0xff]
        %v631 = vld [vmem:[%s215 + $0x830] sm:$0xff]
        %v632 = vld [vmem:[%s215 + $0x838] sm:$0xff]
        %v633 = vld [vmem:[%s215 + $0x840] sm:$0xff]
        %v634 = vld [vmem:[%s215 + $0x848] sm:$0xff]
        %v635 = vld [vmem:[%s215 + $0x850] sm:$0xff]
        %v636 = vld [vmem:[%s215 + $0x858] sm:$0xff]
        %v637 = vld [vmem:[%s215 + $0x860] sm:$0xff]
        %v638 = vld [vmem:[%s215 + $0x868] sm:$0xff]
        %v639 = vld [vmem:[%s215 + $0x870] sm:$0xff]
        %v640 = vld [vmem:[%s215 + $0x878] sm:$0xff]
        %v641 = vld [vmem:[%s215 + $0x880] sm:$0xff]
        %v642 = vld [vmem:[%s215 + $0x888] sm:$0xff]
        %v643 = vld [vmem:[%s215 + $0x890] sm:$0xff]
        %v644 = vld [vmem:[%s215 + $0x898] sm:$0xff]
        %v645 = vld [vmem:[%s215 + $0x8a0] sm:$0xff]
        %v646 = vld [vmem:[%s215 + $0x8a8] sm:$0xff]
        %v647 = vld [vmem:[%s215 + $0x8b0] sm:$0xff]
        %v648 = vld [vmem:[%s215 + $0x8b8] sm:$0xff]
        %v649 = vld [vmem:[%s215 + $0x8c0] sm:$0xff]
        %v650 = vld [vmem:[%s215 + $0x8c8] sm:$0xff]
        %v651 = vld [vmem:[%s215 + $0x8d0] sm:$0xff]
        %v652 = vld [vmem:[%s215 + $0x8d8] sm:$0xff]
        %v653 = vld [vmem:[%s215 + $0x8e0] sm:$0xff]
        %v654 = vld [vmem:[%s215 + $0x8e8] sm:$0xff]
        %v655 = vld [vmem:[%s215 + $0x8f0] sm:$0xff]
        %v656 = vld [vmem:[%s215 + $0x8f8] sm:$0xff]
        %v657 = vld [vmem:[%s215 + $0x900] sm:$0xff]
        %v658 = vld [vmem:[%s215 + $0x908] sm:$0xff]
        %v659 = vld [vmem:[%s215 + $0x910] sm:$0xff]
        %v660 = vld [vmem:[%s215 + $0x918] sm:$0xff]
        %v661 = vld [vmem:[%s215 + $0x920] sm:$0xff]
        %v662 = vld [vmem:[%s215 + $0x928] sm:$0xff]
        %v663 = vld [vmem:[%s215 + $0x930] sm:$0xff]
        %v664 = vld [vmem:[%s215 + $0x938] sm:$0xff]
        %v665 = vld [vmem:[%s215 + $0x940] sm:$0xff]
        %v666 = vld [vmem:[%s215 + $0x948] sm:$0xff]
        %v667 = vld [vmem:[%s215 + $0x950] sm:$0xff]
        %v668 = vld [vmem:[%s215 + $0x958] sm:$0xff]
        %v669 = vld [vmem:[%s215 + $0x960] sm:$0xff]
        %v670 = vld [vmem:[%s215 + $0x968] sm:$0xff]
        %v671 = vld [vmem:[%s215 + $0x970] sm:$0xff]
        %v672 = vld [vmem:[%s215 + $0x978] sm:$0xff]
        %v673 = vld [vmem:[%s215 + $0x980] sm:$0xff]
        %v674 = vld [vmem:[%s215 + $0x988] sm:$0xff]
        %v675 = vld [vmem:[%s215 + $0x990] sm:$0xff]
        %v676 = vld [vmem:[%s215 + $0x998] sm:$0xff]
        %v677 = vld [vmem:[%s215 + $0x9a0] sm:$0xff]
        %v678 = vld [vmem:[%s215 + $0x9a8] sm:$0xff]
        %v679 = vld [vmem:[%s215 + $0x9b0] sm:$0xff]
        %v680 = vld [vmem:[%s215 + $0x9b8] sm:$0xff]
        %v681 = vld [vmem:[%s215 + $0x9c0] sm:$0xff]
        %v682 = vld [vmem:[%s215 + $0x9c8] sm:$0xff]
        %v683 = vld [vmem:[%s215 + $0x9d0] sm:$0xff]
        %v684 = vld [vmem:[%s215 + $0x9d8] sm:$0xff]
        %v685 = vld [vmem:[%s215 + $0x9e0] sm:$0xff]
        %v686 = vld [vmem:[%s215 + $0x9e8] sm:$0xff]
        %v687 = vld [vmem:[%s215 + $0x9f0] sm:$0xff]
        %v688 = vld [vmem:[%s215 + $0x9f8] sm:$0xff]
        %v689 = vld [vmem:[%s215 + $0xa00] sm:$0xff]
        %v690 = vld [vmem:[%s215 + $0xa08] sm:$0xff]
        %v691 = vld [vmem:[%s215 + $0xa10] sm:$0xff]
        %v692 = vld [vmem:[%s215 + $0xa18] sm:$0xff]
        %v693 = vld [vmem:[%s215 + $0xa20] sm:$0xff]
        %v694 = vld [vmem:[%s215 + $0xa28] sm:$0xff]
        %v695 = vld [vmem:[%s215 + $0xa30] sm:$0xff]
        %v696 = vld [vmem:[%s215 + $0xa38] sm:$0xff]
        %v697 = vld [vmem:[%s215 + $0xa40] sm:$0xff]
        %v698 = vld [vmem:[%s215 + $0xa48] sm:$0xff]
        %v699 = vld [vmem:[%s215 + $0xa50] sm:$0xff]
        %v700 = vld [vmem:[%s215 + $0xa58] sm:$0xff]
        %v701 = vld [vmem:[%s215 + $0xa60] sm:$0xff]
        %v702 = vld [vmem:[%s215 + $0xa68] sm:$0xff]
        %v703 = vld [vmem:[%s215 + $0xa70] sm:$0xff]
        %v704 = vld [vmem:[%s215 + $0xa78] sm:$0xff]
        %v705 = vld [vmem:[%s215 + $0xa80] sm:$0xff]
        %v706 = vld [vmem:[%s215 + $0xa88] sm:$0xff]
        %v707 = vld [vmem:[%s215 + $0xa90] sm:$0xff]
        %v708 = vld [vmem:[%s215 + $0xa98] sm:$0xff]
        %v709 = vld [vmem:[%s215 + $0xaa0] sm:$0xff]
        %v710 = vld [vmem:[%s215 + $0xaa8] sm:$0xff]
        %v711 = vld [vmem:[%s215 + $0xab0] sm:$0xff]
        %v712 = vld [vmem:[%s215 + $0xab8] sm:$0xff]
        %v713 = vld [vmem:[%s215 + $0xac0] sm:$0xff]
        %v714 = vld [vmem:[%s215 + $0xac8] sm:$0xff]
        %v715 = vld [vmem:[%s215 + $0xad0] sm:$0xff]
        %v716 = vld [vmem:[%s215 + $0xad8] sm:$0xff]
        %v717 = vld [vmem:[%s215 + $0xae0] sm:$0xff]
        %v718 = vld [vmem:[%s215 + $0xae8] sm:$0xff]
        %v719 = vld [vmem:[%s215 + $0xaf0] sm:$0xff]
        %v720 = vld [vmem:[%s215 + $0xaf8] sm:$0xff]
        %v721 = vld [vmem:[%s215 + $0xb00] sm:$0xff]
        %v722 = vld [vmem:[%s215 + $0xb08] sm:$0xff]
        %v723 = vld [vmem:[%s215 + $0xb10] sm:$0xff]
        %v724 = vld [vmem:[%s215 + $0xb18] sm:$0xff]
        %v725 = vld [vmem:[%s215 + $0xb20] sm:$0xff]
        %v726 = vld [vmem:[%s215 + $0xb28] sm:$0xff]
        %v727 = vld [vmem:[%s215 + $0xb30] sm:$0xff]
        %v728 = vld [vmem:[%s215 + $0xb38] sm:$0xff]
        %v729 = vld [vmem:[%s215 + $0xb40] sm:$0xff]
        %v730 = vld [vmem:[%s215 + $0xb48] sm:$0xff]
        %v731 = vld [vmem:[%s215 + $0xb50] sm:$0xff]
        %v732 = vld [vmem:[%s215 + $0xb58] sm:$0xff]
        %v733 = vld [vmem:[%s215 + $0xb60] sm:$0xff]
        %v734 = vld [vmem:[%s215 + $0xb68] sm:$0xff]
        %v735 = vld [vmem:[%s215 + $0xb70] sm:$0xff]
        %v736 = vld [vmem:[%s215 + $0xb78] sm:$0xff]
        %v737 = vld [vmem:[%s215 + $0xb80] sm:$0xff]
        %v738 = vld [vmem:[%s215 + $0xb88] sm:$0xff]
        %v739 = vld [vmem:[%s215 + $0xb90] sm:$0xff]
        %v740 = vld [vmem:[%s215 + $0xb98] sm:$0xff]
        %v741 = vld [vmem:[%s215 + $0xba0] sm:$0xff]
        %v742 = vld [vmem:[%s215 + $0xba8] sm:$0xff]
        %v743 = vld [vmem:[%s215 + $0xbb0] sm:$0xff]
        %v744 = vld [vmem:[%s215 + $0xbb8] sm:$0xff]
        %v745 = vld [vmem:[%s215 + $0xbc0] sm:$0xff]
        %v746 = vld [vmem:[%s215 + $0xbc8] sm:$0xff]
        %v747 = vld [vmem:[%s215 + $0xbd0] sm:$0xff]
        %v748 = vld [vmem:[%s215 + $0xbd8] sm:$0xff]
        %v749 = vld [vmem:[%s215 + $0xbe0] sm:$0xff]
        %v750 = vld [vmem:[%s215 + $0xbe8] sm:$0xff]
        %v751 = vld [vmem:[%s215 + $0xbf0] sm:$0xff]
        %v752 = vld [vmem:[%s215 + $0xbf8] sm:$0xff]
        %v753 = vld [vmem:[%s215 + $0xc00] sm:$0xff]
        %v754 = vld [vmem:[%s215 + $0xc08] sm:$0xff]
        %v755 = vld [vmem:[%s215 + $0xc10] sm:$0xff]
        %v756 = vld [vmem:[%s215 + $0xc18] sm:$0xff]
        %v757 = vld [vmem:[%s215 + $0xc20] sm:$0xff]
        %v758 = vld [vmem:[%s215 + $0xc28] sm:$0xff]
        %v759 = vld [vmem:[%s215 + $0xc30] sm:$0xff]
        %v760 = vld [vmem:[%s215 + $0xc38] sm:$0xff]
        %v761 = vld [vmem:[%s215 + $0xc40] sm:$0xff]
        %v762 = vld [vmem:[%s215 + $0xc48] sm:$0xff]
        %v763 = vld [vmem:[%s215 + $0xc50] sm:$0xff]
        %v764 = vld [vmem:[%s215 + $0xc58] sm:$0xff]
        %v765 = vld [vmem:[%s215 + $0xc60] sm:$0xff]
        %v766 = vld [vmem:[%s215 + $0xc68] sm:$0xff]
        %v767 = vld [vmem:[%s215 + $0xc70] sm:$0xff]
        %v768 = vld [vmem:[%s215 + $0xc78] sm:$0xff]
        %v769 = vld [vmem:[%s215 + $0xc80] sm:$0xff]
        %v770 = vld [vmem:[%s215 + $0xc88] sm:$0xff]
        %v771 = vld [vmem:[%s215 + $0xc90] sm:$0xff]
        %v772 = vld [vmem:[%s215 + $0xc98] sm:$0xff]
        %v773 = vld [vmem:[%s215 + $0xca0] sm:$0xff]
        %v774 = vld [vmem:[%s215 + $0xca8] sm:$0xff]
        %v775 = vld [vmem:[%s215 + $0xcb0] sm:$0xff]
        %v776 = vld [vmem:[%s215 + $0xcb8] sm:$0xff]
        %v777 = vld [vmem:[%s215 + $0xcc0] sm:$0xff]
        %v778 = vld [vmem:[%s215 + $0xcc8] sm:$0xff]
        %v779 = vld [vmem:[%s215 + $0xcd0] sm:$0xff]
        %v780 = vld [vmem:[%s215 + $0xcd8] sm:$0xff]
        %v781 = vld [vmem:[%s215 + $0xce0] sm:$0xff]
        %v782 = vld [vmem:[%s215 + $0xce8] sm:$0xff]
        %v783 = vld [vmem:[%s215 + $0xcf0] sm:$0xff]
        %v784 = vld [vmem:[%s215 + $0xcf8] sm:$0xff]
        %v785 = vld [vmem:[%s215 + $0xd00] sm:$0xff]
        %v786 = vld [vmem:[%s215 + $0xd08] sm:$0xff]
        %v787 = vld [vmem:[%s215 + $0xd10] sm:$0xff]
        %v788 = vld [vmem:[%s215 + $0xd18] sm:$0xff]
        %v789 = vld [vmem:[%s215 + $0xd20] sm:$0xff]
        %v790 = vld [vmem:[%s215 + $0xd28] sm:$0xff]
        %v791 = vld [vmem:[%s215 + $0xd30] sm:$0xff]
        %v792 = vld [vmem:[%s215 + $0xd38] sm:$0xff]
        %v793 = vld [vmem:[%s215 + $0xd40] sm:$0xff]
        %v794 = vld [vmem:[%s215 + $0xd48] sm:$0xff]
        %v795 = vld [vmem:[%s215 + $0xd50] sm:$0xff]
        %v796 = vld [vmem:[%s215 + $0xd58] sm:$0xff]
        %v797 = vld [vmem:[%s215 + $0xd60] sm:$0xff]
        %v798 = vld [vmem:[%s215 + $0xd68] sm:$0xff]
        %v799 = vld [vmem:[%s215 + $0xd70] sm:$0xff]
        %v800 = vld [vmem:[%s215 + $0xd78] sm:$0xff]
        %v801 = vld [vmem:[%s215 + $0xd80] sm:$0xff]
        %v802 = vld [vmem:[%s215 + $0xd88] sm:$0xff]
        %v803 = vld [vmem:[%s215 + $0xd90] sm:$0xff]
        %v804 = vld [vmem:[%s215 + $0xd98] sm:$0xff]
        %v805 = vld [vmem:[%s215 + $0xda0] sm:$0xff]
        %v806 = vld [vmem:[%s215 + $0xda8] sm:$0xff]
        %v807 = vld [vmem:[%s215 + $0xdb0] sm:$0xff]
        %v808 = vld [vmem:[%s215 + $0xdb8] sm:$0xff]
        %v809 = vld [vmem:[%s215 + $0xdc0] sm:$0xff]
        %v810 = vld [vmem:[%s215 + $0xdc8] sm:$0xff]
        %v811 = vld [vmem:[%s215 + $0xdd0] sm:$0xff]
        %v812 = vld [vmem:[%s215 + $0xdd8] sm:$0xff]
        %v813 = vld [vmem:[%s215 + $0xde0] sm:$0xff]
        %v814 = vld [vmem:[%s215 + $0xde8] sm:$0xff]
        %v815 = vld [vmem:[%s215 + $0xdf0] sm:$0xff]
        %v816 = vld [vmem:[%s215 + $0xdf8] sm:$0xff]
        %v817 = vld [vmem:[%s215 + $0xe00] sm:$0xff]
        %v818 = vld [vmem:[%s215 + $0xe08] sm:$0xff]
        %v819 = vld [vmem:[%s215 + $0xe10] sm:$0xff]
        %v820 = vld [vmem:[%s215 + $0xe18] sm:$0xff]
        %v821 = vld [vmem:[%s215 + $0xe20] sm:$0xff]
        %v822 = vld [vmem:[%s215 + $0xe28] sm:$0xff]
        %v823 = vld [vmem:[%s215 + $0xe30] sm:$0xff]
        %v824 = vld [vmem:[%s215 + $0xe38] sm:$0xff]
        %v825 = vld [vmem:[%s215 + $0xe40] sm:$0xff]
        %v826 = vld [vmem:[%s215 + $0xe48] sm:$0xff]
        %v827 = vld [vmem:[%s215 + $0xe50] sm:$0xff]
        %v828 = vld [vmem:[%s215 + $0xe58] sm:$0xff]
        %v829 = vld [vmem:[%s215 + $0xe60] sm:$0xff]
        %v830 = vld [vmem:[%s215 + $0xe68] sm:$0xff]
        %v831 = vld [vmem:[%s215 + $0xe70] sm:$0xff]
        %v832 = vld [vmem:[%s215 + $0xe78] sm:$0xff]
        %v833 = vld [vmem:[%s215 + $0xe80] sm:$0xff]
        %v834 = vld [vmem:[%s215 + $0xe88] sm:$0xff]
        %v835 = vld [vmem:[%s215 + $0xe90] sm:$0xff]
        %v836 = vld [vmem:[%s215 + $0xe98] sm:$0xff]
        %v837 = vld [vmem:[%s215 + $0xea0] sm:$0xff]
        %v838 = vld [vmem:[%s215 + $0xea8] sm:$0xff]
        %v839 = vld [vmem:[%s215 + $0xeb0] sm:$0xff]
        %v840 = vld [vmem:[%s215 + $0xeb8] sm:$0xff]
        %v841 = vld [vmem:[%s215 + $0xec0] sm:$0xff]
        %v842 = vld [vmem:[%s215 + $0xec8] sm:$0xff]
        %v843 = vld [vmem:[%s215 + $0xed0] sm:$0xff]
        %v844 = vld [vmem:[%s215 + $0xed8] sm:$0xff]
        %v845 = vld [vmem:[%s215 + $0xee0] sm:$0xff]
        %v846 = vld [vmem:[%s215 + $0xee8] sm:$0xff]
        %v847 = vld [vmem:[%s215 + $0xef0] sm:$0xff]
        %v848 = vld [vmem:[%s215 + $0xef8] sm:$0xff]
        %v849 = vld [vmem:[%s215 + $0xf00] sm:$0xff]
        %v850 = vld [vmem:[%s215 + $0xf08] sm:$0xff]
        %v851 = vld [vmem:[%s215 + $0xf10] sm:$0xff]
        %v852 = vld [vmem:[%s215 + $0xf18] sm:$0xff]
        %v853 = vld [vmem:[%s215 + $0xf20] sm:$0xff]
        %v854 = vld [vmem:[%s215 + $0xf28] sm:$0xff]
        %v855 = vld [vmem:[%s215 + $0xf30] sm:$0xff]
        %v856 = vld [vmem:[%s215 + $0xf38] sm:$0xff]
        %v857 = vld [vmem:[%s215 + $0xf40] sm:$0xff]
        %v858 = vld [vmem:[%s215 + $0xf48] sm:$0xff]
        %v859 = vld [vmem:[%s215 + $0xf50] sm:$0xff]
        %v860 = vld [vmem:[%s215 + $0xf58] sm:$0xff]
        %v861 = vld [vmem:[%s215 + $0xf60] sm:$0xff]
        %v862 = vld [vmem:[%s215 + $0xf68] sm:$0xff]
        %v863 = vld [vmem:[%s215 + $0xf70] sm:$0xff]
        %v864 = vld [vmem:[%s215 + $0xf78] sm:$0xff]
        %v865 = vld [vmem:[%s215 + $0xf80] sm:$0xff]
        %v866 = vld [vmem:[%s215 + $0xf88] sm:$0xff]
        %v867 = vld [vmem:[%s215 + $0xf90] sm:$0xff]
        %v868 = vld [vmem:[%s215 + $0xf98] sm:$0xff]
        %v869 = vld [vmem:[%s215 + $0xfa0] sm:$0xff]
        %v870 = vld [vmem:[%s215 + $0xfa8] sm:$0xff]
        %v871 = vld [vmem:[%s215 + $0xfb0] sm:$0xff]
        %v872 = vld [vmem:[%s215 + $0xfb8] sm:$0xff]
        %v873 = vld [vmem:[%s215 + $0xfc0] sm:$0xff]
        %v874 = vld [vmem:[%s215 + $0xfc8] sm:$0xff]
        %v875 = vld [vmem:[%s215 + $0xfd0] sm:$0xff]
        %v876 = vld [vmem:[%s215 + $0xfd8] sm:$0xff]
        %v877 = vld [vmem:[%s215 + $0xfe0] sm:$0xff]
        %v878 = vld [vmem:[%s215 + $0xfe8] sm:$0xff]
        %v879 = vld [vmem:[%s215 + $0xff0] sm:$0xff]
        %v880 = vld [vmem:[%s215 + $0xff8] sm:$0xff]
        %v881 = vld [vmem:[%s224] sm:$0xf]
        %v883 = vlaneseq
        %v884 = vshrl.u32 %v883, 7
        %v885 = vsub.s32 0, %v884
        %v886 = vrot.slane %v881, %v885
        %v887 = vlaneseq
        %v888 = vshrl.u32 %v887, 7
        %v889 = vsub.s32 1, %v888
        %v890 = vrot.slane %v881, %v889
        %v891 = vlaneseq
        %v892 = vshrl.u32 %v891, 7
        %v893 = vsub.s32 2, %v892
        %v894 = vrot.slane %v881, %v893
        %v895 = vlaneseq
        %v896 = vshrl.u32 %v895, 7
        %v897 = vsub.s32 3, %v896
        %v898 = vrot.slane %v881, %v897
        %v1015 = vunpack.c.l.b16 %v257
        %v1016 = vunpack.c.h.b16 %v257
        %v1017 = vunpack.c.l.b16 %v258
        %v1018 = vunpack.c.h.b16 %v258
        %v1019 = vunpack.c.l.b16 %v259
        %v1020 = vunpack.c.h.b16 %v259
        %v1021 = vunpack.c.l.b16 %v260
        %v1022 = vunpack.c.h.b16 %v260
        %v1023 = vunpack.c.l.b16 %v261
        %v1024 = vunpack.c.h.b16 %v261
        %v1025 = vunpack.c.l.b16 %v262
        %v1026 = vunpack.c.h.b16 %v262
        %v1027 = vunpack.c.l.b16 %v263
        %v1028 = vunpack.c.h.b16 %v263
        %v1029 = vunpack.c.l.b16 %v264
        %v1030 = vunpack.c.h.b16 %v264
        %v1031 = vunpack.c.l.b16 %v265
        %v1032 = vunpack.c.h.b16 %v265
        %v1033 = vunpack.c.l.b16 %v266
        %v1034 = vunpack.c.h.b16 %v266
        %v1035 = vunpack.c.l.b16 %v267
        %v1036 = vunpack.c.h.b16 %v267
        %v1037 = vunpack.c.l.b16 %v268
        %v1038 = vunpack.c.h.b16 %v268
        %v1039 = vunpack.c.l.b16 %v269
        %v1040 = vunpack.c.h.b16 %v269
        %v1041 = vunpack.c.l.b16 %v270
        %v1042 = vunpack.c.h.b16 %v270
        %v1043 = vunpack.c.l.b16 %v271
        %v1044 = vunpack.c.h.b16 %v271
        %v1045 = vunpack.c.l.b16 %v272
        %v1046 = vunpack.c.h.b16 %v272
        %v1047 = vunpack.c.l.b16 %v273
        %v1048 = vunpack.c.h.b16 %v273
        %v1049 = vunpack.c.l.b16 %v274
        %v1050 = vunpack.c.h.b16 %v274
        %v1051 = vunpack.c.l.b16 %v275
        %v1052 = vunpack.c.h.b16 %v275
        %v1053 = vunpack.c.l.b16 %v276
        %v1054 = vunpack.c.h.b16 %v276
        %v1055 = vunpack.c.l.b16 %v277
        %v1056 = vunpack.c.h.b16 %v277
        %v1057 = vunpack.c.l.b16 %v278
        %v1058 = vunpack.c.h.b16 %v278
        %v1059 = vunpack.c.l.b16 %v279
        %v1060 = vunpack.c.h.b16 %v279
        %v1061 = vunpack.c.l.b16 %v280
        %v1062 = vunpack.c.h.b16 %v280
        %v1063 = vunpack.c.l.b16 %v281
        %v1064 = vunpack.c.h.b16 %v281
        %v1065 = vunpack.c.l.b16 %v282
        %v1066 = vunpack.c.h.b16 %v282
        %v1067 = vunpack.c.l.b16 %v283
        %v1068 = vunpack.c.h.b16 %v283
        %v1069 = vunpack.c.l.b16 %v284
        %v1070 = vunpack.c.h.b16 %v284
        %v1071 = vunpack.c.l.b16 %v285
        %v1072 = vunpack.c.h.b16 %v285
        %v1073 = vunpack.c.l.b16 %v286
        %v1074 = vunpack.c.h.b16 %v286
        %v1075 = vunpack.c.l.b16 %v287
        %v1076 = vunpack.c.h.b16 %v287
        %v1077 = vunpack.c.l.b16 %v288
        %v1078 = vunpack.c.h.b16 %v288
        %v1079 = vunpack.c.l.b16 %v289
        %v1080 = vunpack.c.h.b16 %v289
        %v1081 = vunpack.c.l.b16 %v290
        %v1082 = vunpack.c.h.b16 %v290
        %v1083 = vunpack.c.l.b16 %v291
        %v1084 = vunpack.c.h.b16 %v291
        %v1085 = vunpack.c.l.b16 %v292
        %v1086 = vunpack.c.h.b16 %v292
        %v1087 = vunpack.c.l.b16 %v293
        %v1088 = vunpack.c.h.b16 %v293
        %v1089 = vunpack.c.l.b16 %v294
        %v1090 = vunpack.c.h.b16 %v294
        %v1091 = vunpack.c.l.b16 %v295
        %v1092 = vunpack.c.h.b16 %v295
        %v1093 = vunpack.c.l.b16 %v296
        %v1094 = vunpack.c.h.b16 %v296
        %v1095 = vunpack.c.l.b16 %v297
        %v1096 = vunpack.c.h.b16 %v297
        %v1097 = vunpack.c.l.b16 %v298
        %v1098 = vunpack.c.h.b16 %v298
        %v1099 = vunpack.c.l.b16 %v299
        %v1100 = vunpack.c.h.b16 %v299
        %v1101 = vunpack.c.l.b16 %v300
        %v1102 = vunpack.c.h.b16 %v300
        %v1103 = vunpack.c.l.b16 %v301
        %v1104 = vunpack.c.h.b16 %v301
        %v1105 = vunpack.c.l.b16 %v302
        %v1106 = vunpack.c.h.b16 %v302
        %v1107 = vunpack.c.l.b16 %v303
        %v1108 = vunpack.c.h.b16 %v303
        %v1109 = vunpack.c.l.b16 %v304
        %v1110 = vunpack.c.h.b16 %v304
        %v1111 = vunpack.c.l.b16 %v305
        %v1112 = vunpack.c.h.b16 %v305
        %v1113 = vunpack.c.l.b16 %v306
        %v1114 = vunpack.c.h.b16 %v306
        %v1115 = vunpack.c.l.b16 %v307
        %v1116 = vunpack.c.h.b16 %v307
        %v1117 = vunpack.c.l.b16 %v308
        %v1118 = vunpack.c.h.b16 %v308
        %v1119 = vunpack.c.l.b16 %v309
        %v1120 = vunpack.c.h.b16 %v309
        %v1121 = vunpack.c.l.b16 %v310
        %v1122 = vunpack.c.h.b16 %v310
        %v1123 = vunpack.c.l.b16 %v311
        %v1124 = vunpack.c.h.b16 %v311
        %v1125 = vunpack.c.l.b16 %v312
        %v1126 = vunpack.c.h.b16 %v312
        %v1127 = vunpack.c.l.b16 %v313
        %v1128 = vunpack.c.h.b16 %v313
        %v1129 = vunpack.c.l.b16 %v314
        %v1130 = vunpack.c.h.b16 %v314
        %v1131 = vunpack.c.l.b16 %v315
        %v1132 = vunpack.c.h.b16 %v315
        %v1133 = vunpack.c.l.b16 %v316
        %v1134 = vunpack.c.h.b16 %v316
        %v1135 = vunpack.c.l.b16 %v317
        %v1136 = vunpack.c.h.b16 %v317
        %v1137 = vunpack.c.l.b16 %v318
        %v1138 = vunpack.c.h.b16 %v318
        %v1139 = vunpack.c.l.b16 %v319
        %v1140 = vunpack.c.h.b16 %v319
        %v1141 = vunpack.c.l.b16 %v320
        %v1142 = vunpack.c.h.b16 %v320
        %v1143 = vunpack.c.l.b16 %v321
        %v1144 = vunpack.c.h.b16 %v321
        %v1145 = vunpack.c.l.b16 %v322
        %v1146 = vunpack.c.h.b16 %v322
        %v1147 = vunpack.c.l.b16 %v323
        %v1148 = vunpack.c.h.b16 %v323
        %v1149 = vunpack.c.l.b16 %v324
        %v1150 = vunpack.c.h.b16 %v324
        %v1151 = vunpack.c.l.b16 %v325
        %v1152 = vunpack.c.h.b16 %v325
        %v1153 = vunpack.c.l.b16 %v326
        %v1154 = vunpack.c.h.b16 %v326
        %v1155 = vunpack.c.l.b16 %v327
        %v1156 = vunpack.c.h.b16 %v327
        %v1157 = vunpack.c.l.b16 %v328
        %v1158 = vunpack.c.h.b16 %v328
        %v1159 = vunpack.c.l.b16 %v329
        %v1160 = vunpack.c.h.b16 %v329
        %v1161 = vunpack.c.l.b16 %v330
        %v1162 = vunpack.c.h.b16 %v330
        %v1163 = vunpack.c.l.b16 %v331
        %v1164 = vunpack.c.h.b16 %v331
        %v1165 = vunpack.c.l.b16 %v332
        %v1166 = vunpack.c.h.b16 %v332
        %v1167 = vunpack.c.l.b16 %v333
        %v1168 = vunpack.c.h.b16 %v333
        %v1169 = vunpack.c.l.b16 %v334
        %v1170 = vunpack.c.h.b16 %v334
        %v1171 = vunpack.c.l.b16 %v335
        %v1172 = vunpack.c.h.b16 %v335
        %v1173 = vunpack.c.l.b16 %v336
        %v1174 = vunpack.c.h.b16 %v336
        %v1175 = vunpack.c.l.b16 %v337
        %v1176 = vunpack.c.h.b16 %v337
        %v1177 = vunpack.c.l.b16 %v338
        %v1178 = vunpack.c.h.b16 %v338
        %v1179 = vunpack.c.l.b16 %v339
        %v1180 = vunpack.c.h.b16 %v339
        %v1181 = vunpack.c.l.b16 %v340
        %v1182 = vunpack.c.h.b16 %v340
        %v1183 = vunpack.c.l.b16 %v341
        %v1184 = vunpack.c.h.b16 %v341
        %v1185 = vunpack.c.l.b16 %v342
        %v1186 = vunpack.c.h.b16 %v342
        %v1187 = vunpack.c.l.b16 %v343
        %v1188 = vunpack.c.h.b16 %v343
        %v1189 = vunpack.c.l.b16 %v344
        %v1190 = vunpack.c.h.b16 %v344
        %v1191 = vunpack.c.l.b16 %v345
        %v1192 = vunpack.c.h.b16 %v345
        %v1193 = vunpack.c.l.b16 %v346
        %v1194 = vunpack.c.h.b16 %v346
        %v1195 = vunpack.c.l.b16 %v347
        %v1196 = vunpack.c.h.b16 %v347
        %v1197 = vunpack.c.l.b16 %v348
        %v1198 = vunpack.c.h.b16 %v348
        %v1199 = vunpack.c.l.b16 %v349
        %v1200 = vunpack.c.h.b16 %v349
        %v1201 = vunpack.c.l.b16 %v350
        %v1202 = vunpack.c.h.b16 %v350
        %v1203 = vunpack.c.l.b16 %v351
        %v1204 = vunpack.c.h.b16 %v351
        %v1205 = vunpack.c.l.b16 %v352
        %v1206 = vunpack.c.h.b16 %v352
        %v1207 = vunpack.c.l.b16 %v353
        %v1208 = vunpack.c.h.b16 %v353
        %v1209 = vunpack.c.l.b16 %v354
        %v1210 = vunpack.c.h.b16 %v354
        %v1211 = vunpack.c.l.b16 %v355
        %v1212 = vunpack.c.h.b16 %v355
        %v1213 = vunpack.c.l.b16 %v356
        %v1214 = vunpack.c.h.b16 %v356
        %v1215 = vunpack.c.l.b16 %v357
        %v1216 = vunpack.c.h.b16 %v357
        %v1217 = vunpack.c.l.b16 %v358
        %v1218 = vunpack.c.h.b16 %v358
        %v1219 = vunpack.c.l.b16 %v359
        %v1220 = vunpack.c.h.b16 %v359
        %v1221 = vunpack.c.l.b16 %v360
        %v1222 = vunpack.c.h.b16 %v360
        %v1223 = vunpack.c.l.b16 %v361
        %v1224 = vunpack.c.h.b16 %v361
        %v1225 = vunpack.c.l.b16 %v362
        %v1226 = vunpack.c.h.b16 %v362
        %v1227 = vunpack.c.l.b16 %v363
        %v1228 = vunpack.c.h.b16 %v363
        %v1229 = vunpack.c.l.b16 %v364
        %v1230 = vunpack.c.h.b16 %v364
        %v1231 = vunpack.c.l.b16 %v365
        %v1232 = vunpack.c.h.b16 %v365
        %v1233 = vunpack.c.l.b16 %v366
        %v1234 = vunpack.c.h.b16 %v366
        %v1235 = vunpack.c.l.b16 %v367
        %v1236 = vunpack.c.h.b16 %v367
        %v1237 = vunpack.c.l.b16 %v368
        %v1238 = vunpack.c.h.b16 %v368
        %v1239 = vpack.c.b16 %v1031, %v1015
        %v1240 = vpack.c.b16 %v1032, %v1016
        %v1241 = vpack.c.b16 %v1033, %v1017
        %v1242 = vpack.c.b16 %v1034, %v1018
        %v1243 = vpack.c.b16 %v1035, %v1019
        %v1244 = vpack.c.b16 %v1036, %v1020
        %v1245 = vpack.c.b16 %v1037, %v1021
        %v1246 = vpack.c.b16 %v1038, %v1022
        %v1247 = vpack.c.b16 %v1039, %v1023
        %v1248 = vpack.c.b16 %v1040, %v1024
        %v1249 = vpack.c.b16 %v1041, %v1025
        %v1250 = vpack.c.b16 %v1042, %v1026
        %v1251 = vpack.c.b16 %v1043, %v1027
        %v1252 = vpack.c.b16 %v1044, %v1028
        %v1253 = vpack.c.b16 %v1045, %v1029
        %v1254 = vpack.c.b16 %v1046, %v1030
        %v1255 = vpack.c.b16 %v1063, %v1047
        %v1256 = vpack.c.b16 %v1064, %v1048
        %v1257 = vpack.c.b16 %v1065, %v1049
        %v1258 = vpack.c.b16 %v1066, %v1050
        %v1259 = vpack.c.b16 %v1067, %v1051
        %v1260 = vpack.c.b16 %v1068, %v1052
        %v1261 = vpack.c.b16 %v1069, %v1053
        %v1262 = vpack.c.b16 %v1070, %v1054
        %v1263 = vpack.c.b16 %v1071, %v1055
        %v1264 = vpack.c.b16 %v1072, %v1056
        %v1265 = vpack.c.b16 %v1073, %v1057
        %v1266 = vpack.c.b16 %v1074, %v1058
        %v1267 = vpack.c.b16 %v1075, %v1059
        %v1268 = vpack.c.b16 %v1076, %v1060
        %v1269 = vpack.c.b16 %v1077, %v1061
        %v1270 = vpack.c.b16 %v1078, %v1062
        %v1271 = vpack.c.b16 %v1095, %v1079
        %v1272 = vpack.c.b16 %v1096, %v1080
        %v1273 = vpack.c.b16 %v1097, %v1081
        %v1274 = vpack.c.b16 %v1098, %v1082
        %v1275 = vpack.c.b16 %v1099, %v1083
        %v1276 = vpack.c.b16 %v1100, %v1084
        %v1277 = vpack.c.b16 %v1101, %v1085
        %v1278 = vpack.c.b16 %v1102, %v1086
        %v1279 = vpack.c.b16 %v1103, %v1087
        %v1280 = vpack.c.b16 %v1104, %v1088
        %v1281 = vpack.c.b16 %v1105, %v1089
        %v1282 = vpack.c.b16 %v1106, %v1090
        %v1283 = vpack.c.b16 %v1107, %v1091
        %v1284 = vpack.c.b16 %v1108, %v1092
        %v1285 = vpack.c.b16 %v1109, %v1093
        %v1286 = vpack.c.b16 %v1110, %v1094
        %v1287 = vpack.c.b16 %v1127, %v1111
        %v1288 = vpack.c.b16 %v1128, %v1112
        %v1289 = vpack.c.b16 %v1129, %v1113
        %v1290 = vpack.c.b16 %v1130, %v1114
        %v1291 = vpack.c.b16 %v1131, %v1115
        %v1292 = vpack.c.b16 %v1132, %v1116
        %v1293 = vpack.c.b16 %v1133, %v1117
        %v1294 = vpack.c.b16 %v1134, %v1118
        %v1295 = vpack.c.b16 %v1135, %v1119
        %v1296 = vpack.c.b16 %v1136, %v1120
        %v1297 = vpack.c.b16 %v1137, %v1121
        %v1298 = vpack.c.b16 %v1138, %v1122
        %v1299 = vpack.c.b16 %v1139, %v1123
        %v1300 = vpack.c.b16 %v1140, %v1124
        %v1301 = vpack.c.b16 %v1141, %v1125
        %v1302 = vpack.c.b16 %v1142, %v1126
        %v1303 = vpack.c.b16 %v1159, %v1143
        %v1304 = vpack.c.b16 %v1160, %v1144
        %v1305 = vpack.c.b16 %v1161, %v1145
        %v1306 = vpack.c.b16 %v1162, %v1146
        %v1307 = vpack.c.b16 %v1163, %v1147
        %v1308 = vpack.c.b16 %v1164, %v1148
        %v1309 = vpack.c.b16 %v1165, %v1149
        %v1310 = vpack.c.b16 %v1166, %v1150
        %v1311 = vpack.c.b16 %v1167, %v1151
        %v1312 = vpack.c.b16 %v1168, %v1152
        %v1313 = vpack.c.b16 %v1169, %v1153
        %v1314 = vpack.c.b16 %v1170, %v1154
        %v1315 = vpack.c.b16 %v1171, %v1155
        %v1316 = vpack.c.b16 %v1172, %v1156
        %v1317 = vpack.c.b16 %v1173, %v1157
        %v1318 = vpack.c.b16 %v1174, %v1158
        %v1319 = vpack.c.b16 %v1191, %v1175
        %v1320 = vpack.c.b16 %v1192, %v1176
        %v1321 = vpack.c.b16 %v1193, %v1177
        %v1322 = vpack.c.b16 %v1194, %v1178
        %v1323 = vpack.c.b16 %v1195, %v1179
        %v1324 = vpack.c.b16 %v1196, %v1180
        %v1325 = vpack.c.b16 %v1197, %v1181
        %v1326 = vpack.c.b16 %v1198, %v1182
        %v1327 = vpack.c.b16 %v1199, %v1183
        %v1328 = vpack.c.b16 %v1200, %v1184
        %v1329 = vpack.c.b16 %v1201, %v1185
        %v1330 = vpack.c.b16 %v1202, %v1186
        %v1331 = vpack.c.b16 %v1203, %v1187
        %v1332 = vpack.c.b16 %v1204, %v1188
        %v1333 = vpack.c.b16 %v1205, %v1189
        %v1334 = vpack.c.b16 %v1206, %v1190
        %v1335 = vpack.c.b16 %v1223, %v1207
        %v1336 = vpack.c.b16 %v1224, %v1208
        %v1337 = vpack.c.b16 %v1225, %v1209
        %v1338 = vpack.c.b16 %v1226, %v1210
        %v1339 = vpack.c.b16 %v1227, %v1211
        %v1340 = vpack.c.b16 %v1228, %v1212
        %v1341 = vpack.c.b16 %v1229, %v1213
        %v1342 = vpack.c.b16 %v1230, %v1214
        %v1343 = vpack.c.b16 %v1231, %v1215
        %v1344 = vpack.c.b16 %v1232, %v1216
        %v1345 = vpack.c.b16 %v1233, %v1217
        %v1346 = vpack.c.b16 %v1234, %v1218
        %v1347 = vpack.c.b16 %v1235, %v1219
        %v1348 = vpack.c.b16 %v1236, %v1220
        %v1349 = vpack.c.b16 %v1237, %v1221
        %v1350 = vpack.c.b16 %v1238, %v1222
        %v1975 = vunpack.c.l.b16 %v369
        %v1976 = vunpack.c.h.b16 %v369
        %v1977 = vunpack.c.l.b16 %v370
        %v1978 = vunpack.c.h.b16 %v370
        %v1979 = vunpack.c.l.b16 %v371
        %v1980 = vunpack.c.h.b16 %v371
        %v1981 = vunpack.c.l.b16 %v372
        %v1982 = vunpack.c.h.b16 %v372
        %v1983 = vunpack.c.l.b16 %v373
        %v1984 = vunpack.c.h.b16 %v373
        %v1985 = vunpack.c.l.b16 %v374
        %v1986 = vunpack.c.h.b16 %v374
        %v1987 = vunpack.c.l.b16 %v375
        %v1988 = vunpack.c.h.b16 %v375
        %v1989 = vunpack.c.l.b16 %v376
        %v1990 = vunpack.c.h.b16 %v376
        %v1991 = vunpack.c.l.b16 %v377
        %v1992 = vunpack.c.h.b16 %v377
        %v1993 = vunpack.c.l.b16 %v378
        %v1994 = vunpack.c.h.b16 %v378
        %v1995 = vunpack.c.l.b16 %v379
        %v1996 = vunpack.c.h.b16 %v379
        %v1997 = vunpack.c.l.b16 %v380
        %v1998 = vunpack.c.h.b16 %v380
        %v1999 = vunpack.c.l.b16 %v381
        %v2000 = vunpack.c.h.b16 %v381
        %v2001 = vunpack.c.l.b16 %v382
        %v2002 = vunpack.c.h.b16 %v382
        %v2003 = vunpack.c.l.b16 %v383
        %v2004 = vunpack.c.h.b16 %v383
        %v2005 = vunpack.c.l.b16 %v384
        %v2006 = vunpack.c.h.b16 %v384
        %v2007 = vunpack.c.l.b16 %v385
        %v2008 = vunpack.c.h.b16 %v385
        %v2009 = vunpack.c.l.b16 %v386
        %v2010 = vunpack.c.h.b16 %v386
        %v2011 = vunpack.c.l.b16 %v387
        %v2012 = vunpack.c.h.b16 %v387
        %v2013 = vunpack.c.l.b16 %v388
        %v2014 = vunpack.c.h.b16 %v388
        %v2015 = vunpack.c.l.b16 %v389
        %v2016 = vunpack.c.h.b16 %v389
        %v2017 = vunpack.c.l.b16 %v390
        %v2018 = vunpack.c.h.b16 %v390
        %v2019 = vunpack.c.l.b16 %v391
        %v2020 = vunpack.c.h.b16 %v391
        %v2021 = vunpack.c.l.b16 %v392
        %v2022 = vunpack.c.h.b16 %v392
        %v2023 = vunpack.c.l.b16 %v393
        %v2024 = vunpack.c.h.b16 %v393
        %v2025 = vunpack.c.l.b16 %v394
        %v2026 = vunpack.c.h.b16 %v394
        %v2027 = vunpack.c.l.b16 %v395
        %v2028 = vunpack.c.h.b16 %v395
        %v2029 = vunpack.c.l.b16 %v396
        %v2030 = vunpack.c.h.b16 %v396
        %v2031 = vunpack.c.l.b16 %v397
        %v2032 = vunpack.c.h.b16 %v397
        %v2033 = vunpack.c.l.b16 %v398
        %v2034 = vunpack.c.h.b16 %v398
        %v2035 = vunpack.c.l.b16 %v399
        %v2036 = vunpack.c.h.b16 %v399
        %v2037 = vunpack.c.l.b16 %v400
        %v2038 = vunpack.c.h.b16 %v400
        %v2039 = vunpack.c.l.b16 %v401
        %v2040 = vunpack.c.h.b16 %v401
        %v2041 = vunpack.c.l.b16 %v402
        %v2042 = vunpack.c.h.b16 %v402
        %v2043 = vunpack.c.l.b16 %v403
        %v2044 = vunpack.c.h.b16 %v403
        %v2045 = vunpack.c.l.b16 %v404
        %v2046 = vunpack.c.h.b16 %v404
        %v2047 = vunpack.c.l.b16 %v405
        %v2048 = vunpack.c.h.b16 %v405
        %v2049 = vunpack.c.l.b16 %v406
        %v2050 = vunpack.c.h.b16 %v406
        %v2051 = vunpack.c.l.b16 %v407
        %v2052 = vunpack.c.h.b16 %v407
        %v2053 = vunpack.c.l.b16 %v408
        %v2054 = vunpack.c.h.b16 %v408
        %v2055 = vunpack.c.l.b16 %v409
        %v2056 = vunpack.c.h.b16 %v409
        %v2057 = vunpack.c.l.b16 %v410
        %v2058 = vunpack.c.h.b16 %v410
        %v2059 = vunpack.c.l.b16 %v411
        %v2060 = vunpack.c.h.b16 %v411
        %v2061 = vunpack.c.l.b16 %v412
        %v2062 = vunpack.c.h.b16 %v412
        %v2063 = vunpack.c.l.b16 %v413
        %v2064 = vunpack.c.h.b16 %v413
        %v2065 = vunpack.c.l.b16 %v414
        %v2066 = vunpack.c.h.b16 %v414
        %v2067 = vunpack.c.l.b16 %v415
        %v2068 = vunpack.c.h.b16 %v415
        %v2069 = vunpack.c.l.b16 %v416
        %v2070 = vunpack.c.h.b16 %v416
        %v2071 = vunpack.c.l.b16 %v417
        %v2072 = vunpack.c.h.b16 %v417
        %v2073 = vunpack.c.l.b16 %v418
        %v2074 = vunpack.c.h.b16 %v418
        %v2075 = vunpack.c.l.b16 %v419
        %v2076 = vunpack.c.h.b16 %v419
        %v2077 = vunpack.c.l.b16 %v420
        %v2078 = vunpack.c.h.b16 %v420
        %v2079 = vunpack.c.l.b16 %v421
        %v2080 = vunpack.c.h.b16 %v421
        %v2081 = vunpack.c.l.b16 %v422
        %v2082 = vunpack.c.h.b16 %v422
        %v2083 = vunpack.c.l.b16 %v423
        %v2084 = vunpack.c.h.b16 %v423
        %v2085 = vunpack.c.l.b16 %v424
        %v2086 = vunpack.c.h.b16 %v424
        %v2087 = vunpack.c.l.b16 %v425
        %v2088 = vunpack.c.h.b16 %v425
        %v2089 = vunpack.c.l.b16 %v426
        %v2090 = vunpack.c.h.b16 %v426
        %v2091 = vunpack.c.l.b16 %v427
        %v2092 = vunpack.c.h.b16 %v427
        %v2093 = vunpack.c.l.b16 %v428
        %v2094 = vunpack.c.h.b16 %v428
        %v2095 = vunpack.c.l.b16 %v429
        %v2096 = vunpack.c.h.b16 %v429
        %v2097 = vunpack.c.l.b16 %v430
        %v2098 = vunpack.c.h.b16 %v430
        %v2099 = vunpack.c.l.b16 %v431
        %v2100 = vunpack.c.h.b16 %v431
        %v2101 = vunpack.c.l.b16 %v432
        %v2102 = vunpack.c.h.b16 %v432
        %v2103 = vunpack.c.l.b16 %v433
        %v2104 = vunpack.c.h.b16 %v433
        %v2105 = vunpack.c.l.b16 %v434
        %v2106 = vunpack.c.h.b16 %v434
        %v2107 = vunpack.c.l.b16 %v435
        %v2108 = vunpack.c.h.b16 %v435
        %v2109 = vunpack.c.l.b16 %v436
        %v2110 = vunpack.c.h.b16 %v436
        %v2111 = vunpack.c.l.b16 %v437
        %v2112 = vunpack.c.h.b16 %v437
        %v2113 = vunpack.c.l.b16 %v438
        %v2114 = vunpack.c.h.b16 %v438
        %v2115 = vunpack.c.l.b16 %v439
        %v2116 = vunpack.c.h.b16 %v439
        %v2117 = vunpack.c.l.b16 %v440
        %v2118 = vunpack.c.h.b16 %v440
        %v2119 = vunpack.c.l.b16 %v441
        %v2120 = vunpack.c.h.b16 %v441
        %v2121 = vunpack.c.l.b16 %v442
        %v2122 = vunpack.c.h.b16 %v442
        %v2123 = vunpack.c.l.b16 %v443
        %v2124 = vunpack.c.h.b16 %v443
        %v2125 = vunpack.c.l.b16 %v444
        %v2126 = vunpack.c.h.b16 %v444
        %v2127 = vunpack.c.l.b16 %v445
        %v2128 = vunpack.c.h.b16 %v445
        %v2129 = vunpack.c.l.b16 %v446
        %v2130 = vunpack.c.h.b16 %v446
        %v2131 = vunpack.c.l.b16 %v447
        %v2132 = vunpack.c.h.b16 %v447
        %v2133 = vunpack.c.l.b16 %v448
        %v2134 = vunpack.c.h.b16 %v448
        %v2135 = vunpack.c.l.b16 %v449
        %v2136 = vunpack.c.h.b16 %v449
        %v2137 = vunpack.c.l.b16 %v450
        %v2138 = vunpack.c.h.b16 %v450
        %v2139 = vunpack.c.l.b16 %v451
        %v2140 = vunpack.c.h.b16 %v451
        %v2141 = vunpack.c.l.b16 %v452
        %v2142 = vunpack.c.h.b16 %v452
        %v2143 = vunpack.c.l.b16 %v453
        %v2144 = vunpack.c.h.b16 %v453
        %v2145 = vunpack.c.l.b16 %v454
        %v2146 = vunpack.c.h.b16 %v454
        %v2147 = vunpack.c.l.b16 %v455
        %v2148 = vunpack.c.h.b16 %v455
        %v2149 = vunpack.c.l.b16 %v456
        %v2150 = vunpack.c.h.b16 %v456
        %v2151 = vunpack.c.l.b16 %v457
        %v2152 = vunpack.c.h.b16 %v457
        %v2153 = vunpack.c.l.b16 %v458
        %v2154 = vunpack.c.h.b16 %v458
        %v2155 = vunpack.c.l.b16 %v459
        %v2156 = vunpack.c.h.b16 %v459
        %v2157 = vunpack.c.l.b16 %v460
        %v2158 = vunpack.c.h.b16 %v460
        %v2159 = vunpack.c.l.b16 %v461
        %v2160 = vunpack.c.h.b16 %v461
        %v2161 = vunpack.c.l.b16 %v462
        %v2162 = vunpack.c.h.b16 %v462
        %v2163 = vunpack.c.l.b16 %v463
        %v2164 = vunpack.c.h.b16 %v463
        %v2165 = vunpack.c.l.b16 %v464
        %v2166 = vunpack.c.h.b16 %v464
        %v2167 = vunpack.c.l.b16 %v465
        %v2168 = vunpack.c.h.b16 %v465
        %v2169 = vunpack.c.l.b16 %v466
        %v2170 = vunpack.c.h.b16 %v466
        %v2171 = vunpack.c.l.b16 %v467
        %v2172 = vunpack.c.h.b16 %v467
        %v2173 = vunpack.c.l.b16 %v468
        %v2174 = vunpack.c.h.b16 %v468
        %v2175 = vunpack.c.l.b16 %v469
        %v2176 = vunpack.c.h.b16 %v469
        %v2177 = vunpack.c.l.b16 %v470
        %v2178 = vunpack.c.h.b16 %v470
        %v2179 = vunpack.c.l.b16 %v471
        %v2180 = vunpack.c.h.b16 %v471
        %v2181 = vunpack.c.l.b16 %v472
        %v2182 = vunpack.c.h.b16 %v472
        %v2183 = vunpack.c.l.b16 %v473
        %v2184 = vunpack.c.h.b16 %v473
        %v2185 = vunpack.c.l.b16 %v474
        %v2186 = vunpack.c.h.b16 %v474
        %v2187 = vunpack.c.l.b16 %v475
        %v2188 = vunpack.c.h.b16 %v475
        %v2189 = vunpack.c.l.b16 %v476
        %v2190 = vunpack.c.h.b16 %v476
        %v2191 = vunpack.c.l.b16 %v477
        %v2192 = vunpack.c.h.b16 %v477
        %v2193 = vunpack.c.l.b16 %v478
        %v2194 = vunpack.c.h.b16 %v478
        %v2195 = vunpack.c.l.b16 %v479
        %v2196 = vunpack.c.h.b16 %v479
        %v2197 = vunpack.c.l.b16 %v480
        %v2198 = vunpack.c.h.b16 %v480
        %v2199 = vunpack.c.l.b16 %v481
        %v2200 = vunpack.c.h.b16 %v481
        %v2201 = vunpack.c.l.b16 %v482
        %v2202 = vunpack.c.h.b16 %v482
        %v2203 = vunpack.c.l.b16 %v483
        %v2204 = vunpack.c.h.b16 %v483
        %v2205 = vunpack.c.l.b16 %v484
        %v2206 = vunpack.c.h.b16 %v484
        %v2207 = vunpack.c.l.b16 %v485
        %v2208 = vunpack.c.h.b16 %v485
        %v2209 = vunpack.c.l.b16 %v486
        %v2210 = vunpack.c.h.b16 %v486
        %v2211 = vunpack.c.l.b16 %v487
        %v2212 = vunpack.c.h.b16 %v487
        %v2213 = vunpack.c.l.b16 %v488
        %v2214 = vunpack.c.h.b16 %v488
        %v2215 = vunpack.c.l.b16 %v489
        %v2216 = vunpack.c.h.b16 %v489
        %v2217 = vunpack.c.l.b16 %v490
        %v2218 = vunpack.c.h.b16 %v490
        %v2219 = vunpack.c.l.b16 %v491
        %v2220 = vunpack.c.h.b16 %v491
        %v2221 = vunpack.c.l.b16 %v492
        %v2222 = vunpack.c.h.b16 %v492
        %v2223 = vunpack.c.l.b16 %v493
        %v2224 = vunpack.c.h.b16 %v493
        %v2225 = vunpack.c.l.b16 %v494
        %v2226 = vunpack.c.h.b16 %v494
        %v2227 = vunpack.c.l.b16 %v495
        %v2228 = vunpack.c.h.b16 %v495
        %v2229 = vunpack.c.l.b16 %v496
        %v2230 = vunpack.c.h.b16 %v496
        %v2231 = vunpack.c.l.b16 %v497
        %v2232 = vunpack.c.h.b16 %v497
        %v2233 = vunpack.c.l.b16 %v498
        %v2234 = vunpack.c.h.b16 %v498
        %v2235 = vunpack.c.l.b16 %v499
        %v2236 = vunpack.c.h.b16 %v499
        %v2237 = vunpack.c.l.b16 %v500
        %v2238 = vunpack.c.h.b16 %v500
        %v2239 = vunpack.c.l.b16 %v501
        %v2240 = vunpack.c.h.b16 %v501
        %v2241 = vunpack.c.l.b16 %v502
        %v2242 = vunpack.c.h.b16 %v502
        %v2243 = vunpack.c.l.b16 %v503
        %v2244 = vunpack.c.h.b16 %v503
        %v2245 = vunpack.c.l.b16 %v504
        %v2246 = vunpack.c.h.b16 %v504
        %v2247 = vunpack.c.l.b16 %v505
        %v2248 = vunpack.c.h.b16 %v505
        %v2249 = vunpack.c.l.b16 %v506
        %v2250 = vunpack.c.h.b16 %v506
        %v2251 = vunpack.c.l.b16 %v507
        %v2252 = vunpack.c.h.b16 %v507
        %v2253 = vunpack.c.l.b16 %v508
        %v2254 = vunpack.c.h.b16 %v508
        %v2255 = vunpack.c.l.b16 %v509
        %v2256 = vunpack.c.h.b16 %v509
        %v2257 = vunpack.c.l.b16 %v510
        %v2258 = vunpack.c.h.b16 %v510
        %v2259 = vunpack.c.l.b16 %v511
        %v2260 = vunpack.c.h.b16 %v511
        %v2261 = vunpack.c.l.b16 %v512
        %v2262 = vunpack.c.h.b16 %v512
        %v2263 = vunpack.c.l.b16 %v513
        %v2264 = vunpack.c.h.b16 %v513
        %v2265 = vunpack.c.l.b16 %v514
        %v2266 = vunpack.c.h.b16 %v514
        %v2267 = vunpack.c.l.b16 %v515
        %v2268 = vunpack.c.h.b16 %v515
        %v2269 = vunpack.c.l.b16 %v516
        %v2270 = vunpack.c.h.b16 %v516
        %v2271 = vunpack.c.l.b16 %v517
        %v2272 = vunpack.c.h.b16 %v517
        %v2273 = vunpack.c.l.b16 %v518
        %v2274 = vunpack.c.h.b16 %v518
        %v2275 = vunpack.c.l.b16 %v519
        %v2276 = vunpack.c.h.b16 %v519
        %v2277 = vunpack.c.l.b16 %v520
        %v2278 = vunpack.c.h.b16 %v520
        %v2279 = vunpack.c.l.b16 %v521
        %v2280 = vunpack.c.h.b16 %v521
        %v2281 = vunpack.c.l.b16 %v522
        %v2282 = vunpack.c.h.b16 %v522
        %v2283 = vunpack.c.l.b16 %v523
        %v2284 = vunpack.c.h.b16 %v523
        %v2285 = vunpack.c.l.b16 %v524
        %v2286 = vunpack.c.h.b16 %v524
        %v2287 = vunpack.c.l.b16 %v525
        %v2288 = vunpack.c.h.b16 %v525
        %v2289 = vunpack.c.l.b16 %v526
        %v2290 = vunpack.c.h.b16 %v526
        %v2291 = vunpack.c.l.b16 %v527
        %v2292 = vunpack.c.h.b16 %v527
        %v2293 = vunpack.c.l.b16 %v528
        %v2294 = vunpack.c.h.b16 %v528
        %v2295 = vunpack.c.l.b16 %v529
        %v2296 = vunpack.c.h.b16 %v529
        %v2297 = vunpack.c.l.b16 %v530
        %v2298 = vunpack.c.h.b16 %v530
        %v2299 = vunpack.c.l.b16 %v531
        %v2300 = vunpack.c.h.b16 %v531
        %v2301 = vunpack.c.l.b16 %v532
        %v2302 = vunpack.c.h.b16 %v532
        %v2303 = vunpack.c.l.b16 %v533
        %v2304 = vunpack.c.h.b16 %v533
        %v2305 = vunpack.c.l.b16 %v534
        %v2306 = vunpack.c.h.b16 %v534
        %v2307 = vunpack.c.l.b16 %v535
        %v2308 = vunpack.c.h.b16 %v535
        %v2309 = vunpack.c.l.b16 %v536
        %v2310 = vunpack.c.h.b16 %v536
        %v2311 = vunpack.c.l.b16 %v537
        %v2312 = vunpack.c.h.b16 %v537
        %v2313 = vunpack.c.l.b16 %v538
        %v2314 = vunpack.c.h.b16 %v538
        %v2315 = vunpack.c.l.b16 %v539
        %v2316 = vunpack.c.h.b16 %v539
        %v2317 = vunpack.c.l.b16 %v540
        %v2318 = vunpack.c.h.b16 %v540
        %v2319 = vunpack.c.l.b16 %v541
        %v2320 = vunpack.c.h.b16 %v541
        %v2321 = vunpack.c.l.b16 %v542
        %v2322 = vunpack.c.h.b16 %v542
        %v2323 = vunpack.c.l.b16 %v543
        %v2324 = vunpack.c.h.b16 %v543
        %v2325 = vunpack.c.l.b16 %v544
        %v2326 = vunpack.c.h.b16 %v544
        %v2327 = vunpack.c.l.b16 %v545
        %v2328 = vunpack.c.h.b16 %v545
        %v2329 = vunpack.c.l.b16 %v546
        %v2330 = vunpack.c.h.b16 %v546
        %v2331 = vunpack.c.l.b16 %v547
        %v2332 = vunpack.c.h.b16 %v547
        %v2333 = vunpack.c.l.b16 %v548
        %v2334 = vunpack.c.h.b16 %v548
        %v2335 = vunpack.c.l.b16 %v549
        %v2336 = vunpack.c.h.b16 %v549
        %v2337 = vunpack.c.l.b16 %v550
        %v2338 = vunpack.c.h.b16 %v550
        %v2339 = vunpack.c.l.b16 %v551
        %v2340 = vunpack.c.h.b16 %v551
        %v2341 = vunpack.c.l.b16 %v552
        %v2342 = vunpack.c.h.b16 %v552
        %v2343 = vunpack.c.l.b16 %v553
        %v2344 = vunpack.c.h.b16 %v553
        %v2345 = vunpack.c.l.b16 %v554
        %v2346 = vunpack.c.h.b16 %v554
        %v2347 = vunpack.c.l.b16 %v555
        %v2348 = vunpack.c.h.b16 %v555
        %v2349 = vunpack.c.l.b16 %v556
        %v2350 = vunpack.c.h.b16 %v556
        %v2351 = vunpack.c.l.b16 %v557
        %v2352 = vunpack.c.h.b16 %v557
        %v2353 = vunpack.c.l.b16 %v558
        %v2354 = vunpack.c.h.b16 %v558
        %v2355 = vunpack.c.l.b16 %v559
        %v2356 = vunpack.c.h.b16 %v559
        %v2357 = vunpack.c.l.b16 %v560
        %v2358 = vunpack.c.h.b16 %v560
        %v2359 = vunpack.c.l.b16 %v561
        %v2360 = vunpack.c.h.b16 %v561
        %v2361 = vunpack.c.l.b16 %v562
        %v2362 = vunpack.c.h.b16 %v562
        %v2363 = vunpack.c.l.b16 %v563
        %v2364 = vunpack.c.h.b16 %v563
        %v2365 = vunpack.c.l.b16 %v564
        %v2366 = vunpack.c.h.b16 %v564
        %v2367 = vunpack.c.l.b16 %v565
        %v2368 = vunpack.c.h.b16 %v565
        %v2369 = vunpack.c.l.b16 %v566
        %v2370 = vunpack.c.h.b16 %v566
        %v2371 = vunpack.c.l.b16 %v567
        %v2372 = vunpack.c.h.b16 %v567
        %v2373 = vunpack.c.l.b16 %v568
        %v2374 = vunpack.c.h.b16 %v568
        %v2375 = vunpack.c.l.b16 %v569
        %v2376 = vunpack.c.h.b16 %v569
        %v2377 = vunpack.c.l.b16 %v570
        %v2378 = vunpack.c.h.b16 %v570
        %v2379 = vunpack.c.l.b16 %v571
        %v2380 = vunpack.c.h.b16 %v571
        %v2381 = vunpack.c.l.b16 %v572
        %v2382 = vunpack.c.h.b16 %v572
        %v2383 = vunpack.c.l.b16 %v573
        %v2384 = vunpack.c.h.b16 %v573
        %v2385 = vunpack.c.l.b16 %v574
        %v2386 = vunpack.c.h.b16 %v574
        %v2387 = vunpack.c.l.b16 %v575
        %v2388 = vunpack.c.h.b16 %v575
        %v2389 = vunpack.c.l.b16 %v576
        %v2390 = vunpack.c.h.b16 %v576
        %v2391 = vunpack.c.l.b16 %v577
        %v2392 = vunpack.c.h.b16 %v577
        %v2393 = vunpack.c.l.b16 %v578
        %v2394 = vunpack.c.h.b16 %v578
        %v2395 = vunpack.c.l.b16 %v579
        %v2396 = vunpack.c.h.b16 %v579
        %v2397 = vunpack.c.l.b16 %v580
        %v2398 = vunpack.c.h.b16 %v580
        %v2399 = vunpack.c.l.b16 %v581
        %v2400 = vunpack.c.h.b16 %v581
        %v2401 = vunpack.c.l.b16 %v582
        %v2402 = vunpack.c.h.b16 %v582
        %v2403 = vunpack.c.l.b16 %v583
        %v2404 = vunpack.c.h.b16 %v583
        %v2405 = vunpack.c.l.b16 %v584
        %v2406 = vunpack.c.h.b16 %v584
        %v2407 = vunpack.c.l.b16 %v585
        %v2408 = vunpack.c.h.b16 %v585
        %v2409 = vunpack.c.l.b16 %v586
        %v2410 = vunpack.c.h.b16 %v586
        %v2411 = vunpack.c.l.b16 %v587
        %v2412 = vunpack.c.h.b16 %v587
        %v2413 = vunpack.c.l.b16 %v588
        %v2414 = vunpack.c.h.b16 %v588
        %v2415 = vunpack.c.l.b16 %v589
        %v2416 = vunpack.c.h.b16 %v589
        %v2417 = vunpack.c.l.b16 %v590
        %v2418 = vunpack.c.h.b16 %v590
        %v2419 = vunpack.c.l.b16 %v591
        %v2420 = vunpack.c.h.b16 %v591
        %v2421 = vunpack.c.l.b16 %v592
        %v2422 = vunpack.c.h.b16 %v592
        %v2423 = vunpack.c.l.b16 %v593
        %v2424 = vunpack.c.h.b16 %v593
        %v2425 = vunpack.c.l.b16 %v594
        %v2426 = vunpack.c.h.b16 %v594
        %v2427 = vunpack.c.l.b16 %v595
        %v2428 = vunpack.c.h.b16 %v595
        %v2429 = vunpack.c.l.b16 %v596
        %v2430 = vunpack.c.h.b16 %v596
        %v2431 = vunpack.c.l.b16 %v597
        %v2432 = vunpack.c.h.b16 %v597
        %v2433 = vunpack.c.l.b16 %v598
        %v2434 = vunpack.c.h.b16 %v598
        %v2435 = vunpack.c.l.b16 %v599
        %v2436 = vunpack.c.h.b16 %v599
        %v2437 = vunpack.c.l.b16 %v600
        %v2438 = vunpack.c.h.b16 %v600
        %v2439 = vunpack.c.l.b16 %v601
        %v2440 = vunpack.c.h.b16 %v601
        %v2441 = vunpack.c.l.b16 %v602
        %v2442 = vunpack.c.h.b16 %v602
        %v2443 = vunpack.c.l.b16 %v603
        %v2444 = vunpack.c.h.b16 %v603
        %v2445 = vunpack.c.l.b16 %v604
        %v2446 = vunpack.c.h.b16 %v604
        %v2447 = vunpack.c.l.b16 %v605
        %v2448 = vunpack.c.h.b16 %v605
        %v2449 = vunpack.c.l.b16 %v606
        %v2450 = vunpack.c.h.b16 %v606
        %v2451 = vunpack.c.l.b16 %v607
        %v2452 = vunpack.c.h.b16 %v607
        %v2453 = vunpack.c.l.b16 %v608
        %v2454 = vunpack.c.h.b16 %v608
        %v2455 = vunpack.c.l.b16 %v609
        %v2456 = vunpack.c.h.b16 %v609
        %v2457 = vunpack.c.l.b16 %v610
        %v2458 = vunpack.c.h.b16 %v610
        %v2459 = vunpack.c.l.b16 %v611
        %v2460 = vunpack.c.h.b16 %v611
        %v2461 = vunpack.c.l.b16 %v612
        %v2462 = vunpack.c.h.b16 %v612
        %v2463 = vunpack.c.l.b16 %v613
        %v2464 = vunpack.c.h.b16 %v613
        %v2465 = vunpack.c.l.b16 %v614
        %v2466 = vunpack.c.h.b16 %v614
        %v2467 = vunpack.c.l.b16 %v615
        %v2468 = vunpack.c.h.b16 %v615
        %v2469 = vunpack.c.l.b16 %v616
        %v2470 = vunpack.c.h.b16 %v616
        %v2471 = vunpack.c.l.b16 %v617
        %v2472 = vunpack.c.h.b16 %v617
        %v2473 = vunpack.c.l.b16 %v618
        %v2474 = vunpack.c.h.b16 %v618
        %v2475 = vunpack.c.l.b16 %v619
        %v2476 = vunpack.c.h.b16 %v619
        %v2477 = vunpack.c.l.b16 %v620
        %v2478 = vunpack.c.h.b16 %v620
        %v2479 = vunpack.c.l.b16 %v621
        %v2480 = vunpack.c.h.b16 %v621
        %v2481 = vunpack.c.l.b16 %v622
        %v2482 = vunpack.c.h.b16 %v622
        %v2483 = vunpack.c.l.b16 %v623
        %v2484 = vunpack.c.h.b16 %v623
        %v2485 = vunpack.c.l.b16 %v624
        %v2486 = vunpack.c.h.b16 %v624
        %v2487 = vunpack.c.l.b16 %v625
        %v2488 = vunpack.c.h.b16 %v625
        %v2489 = vunpack.c.l.b16 %v626
        %v2490 = vunpack.c.h.b16 %v626
        %v2491 = vunpack.c.l.b16 %v627
        %v2492 = vunpack.c.h.b16 %v627
        %v2493 = vunpack.c.l.b16 %v628
        %v2494 = vunpack.c.h.b16 %v628
        %v2495 = vunpack.c.l.b16 %v629
        %v2496 = vunpack.c.h.b16 %v629
        %v2497 = vunpack.c.l.b16 %v630
        %v2498 = vunpack.c.h.b16 %v630
        %v2499 = vunpack.c.l.b16 %v631
        %v2500 = vunpack.c.h.b16 %v631
        %v2501 = vunpack.c.l.b16 %v632
        %v2502 = vunpack.c.h.b16 %v632
        %v2503 = vunpack.c.l.b16 %v633
        %v2504 = vunpack.c.h.b16 %v633
        %v2505 = vunpack.c.l.b16 %v634
        %v2506 = vunpack.c.h.b16 %v634
        %v2507 = vunpack.c.l.b16 %v635
        %v2508 = vunpack.c.h.b16 %v635
        %v2509 = vunpack.c.l.b16 %v636
        %v2510 = vunpack.c.h.b16 %v636
        %v2511 = vunpack.c.l.b16 %v637
        %v2512 = vunpack.c.h.b16 %v637
        %v2513 = vunpack.c.l.b16 %v638
        %v2514 = vunpack.c.h.b16 %v638
        %v2515 = vunpack.c.l.b16 %v639
        %v2516 = vunpack.c.h.b16 %v639
        %v2517 = vunpack.c.l.b16 %v640
        %v2518 = vunpack.c.h.b16 %v640
        %v2519 = vunpack.c.l.b16 %v641
        %v2520 = vunpack.c.h.b16 %v641
        %v2521 = vunpack.c.l.b16 %v642
        %v2522 = vunpack.c.h.b16 %v642
        %v2523 = vunpack.c.l.b16 %v643
        %v2524 = vunpack.c.h.b16 %v643
        %v2525 = vunpack.c.l.b16 %v644
        %v2526 = vunpack.c.h.b16 %v644
        %v2527 = vunpack.c.l.b16 %v645
        %v2528 = vunpack.c.h.b16 %v645
        %v2529 = vunpack.c.l.b16 %v646
        %v2530 = vunpack.c.h.b16 %v646
        %v2531 = vunpack.c.l.b16 %v647
        %v2532 = vunpack.c.h.b16 %v647
        %v2533 = vunpack.c.l.b16 %v648
        %v2534 = vunpack.c.h.b16 %v648
        %v2535 = vunpack.c.l.b16 %v649
        %v2536 = vunpack.c.h.b16 %v649
        %v2537 = vunpack.c.l.b16 %v650
        %v2538 = vunpack.c.h.b16 %v650
        %v2539 = vunpack.c.l.b16 %v651
        %v2540 = vunpack.c.h.b16 %v651
        %v2541 = vunpack.c.l.b16 %v652
        %v2542 = vunpack.c.h.b16 %v652
        %v2543 = vunpack.c.l.b16 %v653
        %v2544 = vunpack.c.h.b16 %v653
        %v2545 = vunpack.c.l.b16 %v654
        %v2546 = vunpack.c.h.b16 %v654
        %v2547 = vunpack.c.l.b16 %v655
        %v2548 = vunpack.c.h.b16 %v655
        %v2549 = vunpack.c.l.b16 %v656
        %v2550 = vunpack.c.h.b16 %v656
        %v2551 = vunpack.c.l.b16 %v657
        %v2552 = vunpack.c.h.b16 %v657
        %v2553 = vunpack.c.l.b16 %v658
        %v2554 = vunpack.c.h.b16 %v658
        %v2555 = vunpack.c.l.b16 %v659
        %v2556 = vunpack.c.h.b16 %v659
        %v2557 = vunpack.c.l.b16 %v660
        %v2558 = vunpack.c.h.b16 %v660
        %v2559 = vunpack.c.l.b16 %v661
        %v2560 = vunpack.c.h.b16 %v661
        %v2561 = vunpack.c.l.b16 %v662
        %v2562 = vunpack.c.h.b16 %v662
        %v2563 = vunpack.c.l.b16 %v663
        %v2564 = vunpack.c.h.b16 %v663
        %v2565 = vunpack.c.l.b16 %v664
        %v2566 = vunpack.c.h.b16 %v664
        %v2567 = vunpack.c.l.b16 %v665
        %v2568 = vunpack.c.h.b16 %v665
        %v2569 = vunpack.c.l.b16 %v666
        %v2570 = vunpack.c.h.b16 %v666
        %v2571 = vunpack.c.l.b16 %v667
        %v2572 = vunpack.c.h.b16 %v667
        %v2573 = vunpack.c.l.b16 %v668
        %v2574 = vunpack.c.h.b16 %v668
        %v2575 = vunpack.c.l.b16 %v669
        %v2576 = vunpack.c.h.b16 %v669
        %v2577 = vunpack.c.l.b16 %v670
        %v2578 = vunpack.c.h.b16 %v670
        %v2579 = vunpack.c.l.b16 %v671
        %v2580 = vunpack.c.h.b16 %v671
        %v2581 = vunpack.c.l.b16 %v672
        %v2582 = vunpack.c.h.b16 %v672
        %v2583 = vunpack.c.l.b16 %v673
        %v2584 = vunpack.c.h.b16 %v673
        %v2585 = vunpack.c.l.b16 %v674
        %v2586 = vunpack.c.h.b16 %v674
        %v2587 = vunpack.c.l.b16 %v675
        %v2588 = vunpack.c.h.b16 %v675
        %v2589 = vunpack.c.l.b16 %v676
        %v2590 = vunpack.c.h.b16 %v676
        %v2591 = vunpack.c.l.b16 %v677
        %v2592 = vunpack.c.h.b16 %v677
        %v2593 = vunpack.c.l.b16 %v678
        %v2594 = vunpack.c.h.b16 %v678
        %v2595 = vunpack.c.l.b16 %v679
        %v2596 = vunpack.c.h.b16 %v679
        %v2597 = vunpack.c.l.b16 %v680
        %v2598 = vunpack.c.h.b16 %v680
        %v2599 = vunpack.c.l.b16 %v681
        %v2600 = vunpack.c.h.b16 %v681
        %v2601 = vunpack.c.l.b16 %v682
        %v2602 = vunpack.c.h.b16 %v682
        %v2603 = vunpack.c.l.b16 %v683
        %v2604 = vunpack.c.h.b16 %v683
        %v2605 = vunpack.c.l.b16 %v684
        %v2606 = vunpack.c.h.b16 %v684
        %v2607 = vunpack.c.l.b16 %v685
        %v2608 = vunpack.c.h.b16 %v685
        %v2609 = vunpack.c.l.b16 %v686
        %v2610 = vunpack.c.h.b16 %v686
        %v2611 = vunpack.c.l.b16 %v687
        %v2612 = vunpack.c.h.b16 %v687
        %v2613 = vunpack.c.l.b16 %v688
        %v2614 = vunpack.c.h.b16 %v688
        %v2615 = vunpack.c.l.b16 %v689
        %v2616 = vunpack.c.h.b16 %v689
        %v2617 = vunpack.c.l.b16 %v690
        %v2618 = vunpack.c.h.b16 %v690
        %v2619 = vunpack.c.l.b16 %v691
        %v2620 = vunpack.c.h.b16 %v691
        %v2621 = vunpack.c.l.b16 %v692
        %v2622 = vunpack.c.h.b16 %v692
        %v2623 = vunpack.c.l.b16 %v693
        %v2624 = vunpack.c.h.b16 %v693
        %v2625 = vunpack.c.l.b16 %v694
        %v2626 = vunpack.c.h.b16 %v694
        %v2627 = vunpack.c.l.b16 %v695
        %v2628 = vunpack.c.h.b16 %v695
        %v2629 = vunpack.c.l.b16 %v696
        %v2630 = vunpack.c.h.b16 %v696
        %v2631 = vunpack.c.l.b16 %v697
        %v2632 = vunpack.c.h.b16 %v697
        %v2633 = vunpack.c.l.b16 %v698
        %v2634 = vunpack.c.h.b16 %v698
        %v2635 = vunpack.c.l.b16 %v699
        %v2636 = vunpack.c.h.b16 %v699
        %v2637 = vunpack.c.l.b16 %v700
        %v2638 = vunpack.c.h.b16 %v700
        %v2639 = vunpack.c.l.b16 %v701
        %v2640 = vunpack.c.h.b16 %v701
        %v2641 = vunpack.c.l.b16 %v702
        %v2642 = vunpack.c.h.b16 %v702
        %v2643 = vunpack.c.l.b16 %v703
        %v2644 = vunpack.c.h.b16 %v703
        %v2645 = vunpack.c.l.b16 %v704
        %v2646 = vunpack.c.h.b16 %v704
        %v2647 = vunpack.c.l.b16 %v705
        %v2648 = vunpack.c.h.b16 %v705
        %v2649 = vunpack.c.l.b16 %v706
        %v2650 = vunpack.c.h.b16 %v706
        %v2651 = vunpack.c.l.b16 %v707
        %v2652 = vunpack.c.h.b16 %v707
        %v2653 = vunpack.c.l.b16 %v708
        %v2654 = vunpack.c.h.b16 %v708
        %v2655 = vunpack.c.l.b16 %v709
        %v2656 = vunpack.c.h.b16 %v709
        %v2657 = vunpack.c.l.b16 %v710
        %v2658 = vunpack.c.h.b16 %v710
        %v2659 = vunpack.c.l.b16 %v711
        %v2660 = vunpack.c.h.b16 %v711
        %v2661 = vunpack.c.l.b16 %v712
        %v2662 = vunpack.c.h.b16 %v712
        %v2663 = vunpack.c.l.b16 %v713
        %v2664 = vunpack.c.h.b16 %v713
        %v2665 = vunpack.c.l.b16 %v714
        %v2666 = vunpack.c.h.b16 %v714
        %v2667 = vunpack.c.l.b16 %v715
        %v2668 = vunpack.c.h.b16 %v715
        %v2669 = vunpack.c.l.b16 %v716
        %v2670 = vunpack.c.h.b16 %v716
        %v2671 = vunpack.c.l.b16 %v717
        %v2672 = vunpack.c.h.b16 %v717
        %v2673 = vunpack.c.l.b16 %v718
        %v2674 = vunpack.c.h.b16 %v718
        %v2675 = vunpack.c.l.b16 %v719
        %v2676 = vunpack.c.h.b16 %v719
        %v2677 = vunpack.c.l.b16 %v720
        %v2678 = vunpack.c.h.b16 %v720
        %v2679 = vunpack.c.l.b16 %v721
        %v2680 = vunpack.c.h.b16 %v721
        %v2681 = vunpack.c.l.b16 %v722
        %v2682 = vunpack.c.h.b16 %v722
        %v2683 = vunpack.c.l.b16 %v723
        %v2684 = vunpack.c.h.b16 %v723
        %v2685 = vunpack.c.l.b16 %v724
        %v2686 = vunpack.c.h.b16 %v724
        %v2687 = vunpack.c.l.b16 %v725
        %v2688 = vunpack.c.h.b16 %v725
        %v2689 = vunpack.c.l.b16 %v726
        %v2690 = vunpack.c.h.b16 %v726
        %v2691 = vunpack.c.l.b16 %v727
        %v2692 = vunpack.c.h.b16 %v727
        %v2693 = vunpack.c.l.b16 %v728
        %v2694 = vunpack.c.h.b16 %v728
        %v2695 = vunpack.c.l.b16 %v729
        %v2696 = vunpack.c.h.b16 %v729
        %v2697 = vunpack.c.l.b16 %v730
        %v2698 = vunpack.c.h.b16 %v730
        %v2699 = vunpack.c.l.b16 %v731
        %v2700 = vunpack.c.h.b16 %v731
        %v2701 = vunpack.c.l.b16 %v732
        %v2702 = vunpack.c.h.b16 %v732
        %v2703 = vunpack.c.l.b16 %v733
        %v2704 = vunpack.c.h.b16 %v733
        %v2705 = vunpack.c.l.b16 %v734
        %v2706 = vunpack.c.h.b16 %v734
        %v2707 = vunpack.c.l.b16 %v735
        %v2708 = vunpack.c.h.b16 %v735
        %v2709 = vunpack.c.l.b16 %v736
        %v2710 = vunpack.c.h.b16 %v736
        %v2711 = vunpack.c.l.b16 %v737
        %v2712 = vunpack.c.h.b16 %v737
        %v2713 = vunpack.c.l.b16 %v738
        %v2714 = vunpack.c.h.b16 %v738
        %v2715 = vunpack.c.l.b16 %v739
        %v2716 = vunpack.c.h.b16 %v739
        %v2717 = vunpack.c.l.b16 %v740
        %v2718 = vunpack.c.h.b16 %v740
        %v2719 = vunpack.c.l.b16 %v741
        %v2720 = vunpack.c.h.b16 %v741
        %v2721 = vunpack.c.l.b16 %v742
        %v2722 = vunpack.c.h.b16 %v742
        %v2723 = vunpack.c.l.b16 %v743
        %v2724 = vunpack.c.h.b16 %v743
        %v2725 = vunpack.c.l.b16 %v744
        %v2726 = vunpack.c.h.b16 %v744
        %v2727 = vunpack.c.l.b16 %v745
        %v2728 = vunpack.c.h.b16 %v745
        %v2729 = vunpack.c.l.b16 %v746
        %v2730 = vunpack.c.h.b16 %v746
        %v2731 = vunpack.c.l.b16 %v747
        %v2732 = vunpack.c.h.b16 %v747
        %v2733 = vunpack.c.l.b16 %v748
        %v2734 = vunpack.c.h.b16 %v748
        %v2735 = vunpack.c.l.b16 %v749
        %v2736 = vunpack.c.h.b16 %v749
        %v2737 = vunpack.c.l.b16 %v750
        %v2738 = vunpack.c.h.b16 %v750
        %v2739 = vunpack.c.l.b16 %v751
        %v2740 = vunpack.c.h.b16 %v751
        %v2741 = vunpack.c.l.b16 %v752
        %v2742 = vunpack.c.h.b16 %v752
        %v2743 = vunpack.c.l.b16 %v753
        %v2744 = vunpack.c.h.b16 %v753
        %v2745 = vunpack.c.l.b16 %v754
        %v2746 = vunpack.c.h.b16 %v754
        %v2747 = vunpack.c.l.b16 %v755
        %v2748 = vunpack.c.h.b16 %v755
        %v2749 = vunpack.c.l.b16 %v756
        %v2750 = vunpack.c.h.b16 %v756
        %v2751 = vunpack.c.l.b16 %v757
        %v2752 = vunpack.c.h.b16 %v757
        %v2753 = vunpack.c.l.b16 %v758
        %v2754 = vunpack.c.h.b16 %v758
        %v2755 = vunpack.c.l.b16 %v759
        %v2756 = vunpack.c.h.b16 %v759
        %v2757 = vunpack.c.l.b16 %v760
        %v2758 = vunpack.c.h.b16 %v760
        %v2759 = vunpack.c.l.b16 %v761
        %v2760 = vunpack.c.h.b16 %v761
        %v2761 = vunpack.c.l.b16 %v762
        %v2762 = vunpack.c.h.b16 %v762
        %v2763 = vunpack.c.l.b16 %v763
        %v2764 = vunpack.c.h.b16 %v763
        %v2765 = vunpack.c.l.b16 %v764
        %v2766 = vunpack.c.h.b16 %v764
        %v2767 = vunpack.c.l.b16 %v765
        %v2768 = vunpack.c.h.b16 %v765
        %v2769 = vunpack.c.l.b16 %v766
        %v2770 = vunpack.c.h.b16 %v766
        %v2771 = vunpack.c.l.b16 %v767
        %v2772 = vunpack.c.h.b16 %v767
        %v2773 = vunpack.c.l.b16 %v768
        %v2774 = vunpack.c.h.b16 %v768
        %v2775 = vunpack.c.l.b16 %v769
        %v2776 = vunpack.c.h.b16 %v769
        %v2777 = vunpack.c.l.b16 %v770
        %v2778 = vunpack.c.h.b16 %v770
        %v2779 = vunpack.c.l.b16 %v771
        %v2780 = vunpack.c.h.b16 %v771
        %v2781 = vunpack.c.l.b16 %v772
        %v2782 = vunpack.c.h.b16 %v772
        %v2783 = vunpack.c.l.b16 %v773
        %v2784 = vunpack.c.h.b16 %v773
        %v2785 = vunpack.c.l.b16 %v774
        %v2786 = vunpack.c.h.b16 %v774
        %v2787 = vunpack.c.l.b16 %v775
        %v2788 = vunpack.c.h.b16 %v775
        %v2789 = vunpack.c.l.b16 %v776
        %v2790 = vunpack.c.h.b16 %v776
        %v2791 = vunpack.c.l.b16 %v777
        %v2792 = vunpack.c.h.b16 %v777
        %v2793 = vunpack.c.l.b16 %v778
        %v2794 = vunpack.c.h.b16 %v778
        %v2795 = vunpack.c.l.b16 %v779
        %v2796 = vunpack.c.h.b16 %v779
        %v2797 = vunpack.c.l.b16 %v780
        %v2798 = vunpack.c.h.b16 %v780
        %v2799 = vunpack.c.l.b16 %v781
        %v2800 = vunpack.c.h.b16 %v781
        %v2801 = vunpack.c.l.b16 %v782
        %v2802 = vunpack.c.h.b16 %v782
        %v2803 = vunpack.c.l.b16 %v783
        %v2804 = vunpack.c.h.b16 %v783
        %v2805 = vunpack.c.l.b16 %v784
        %v2806 = vunpack.c.h.b16 %v784
        %v2807 = vunpack.c.l.b16 %v785
        %v2808 = vunpack.c.h.b16 %v785
        %v2809 = vunpack.c.l.b16 %v786
        %v2810 = vunpack.c.h.b16 %v786
        %v2811 = vunpack.c.l.b16 %v787
        %v2812 = vunpack.c.h.b16 %v787
        %v2813 = vunpack.c.l.b16 %v788
        %v2814 = vunpack.c.h.b16 %v788
        %v2815 = vunpack.c.l.b16 %v789
        %v2816 = vunpack.c.h.b16 %v789
        %v2817 = vunpack.c.l.b16 %v790
        %v2818 = vunpack.c.h.b16 %v790
        %v2819 = vunpack.c.l.b16 %v791
        %v2820 = vunpack.c.h.b16 %v791
        %v2821 = vunpack.c.l.b16 %v792
        %v2822 = vunpack.c.h.b16 %v792
        %v2823 = vunpack.c.l.b16 %v793
        %v2824 = vunpack.c.h.b16 %v793
        %v2825 = vunpack.c.l.b16 %v794
        %v2826 = vunpack.c.h.b16 %v794
        %v2827 = vunpack.c.l.b16 %v795
        %v2828 = vunpack.c.h.b16 %v795
        %v2829 = vunpack.c.l.b16 %v796
        %v2830 = vunpack.c.h.b16 %v796
        %v2831 = vunpack.c.l.b16 %v797
        %v2832 = vunpack.c.h.b16 %v797
        %v2833 = vunpack.c.l.b16 %v798
        %v2834 = vunpack.c.h.b16 %v798
        %v2835 = vunpack.c.l.b16 %v799
        %v2836 = vunpack.c.h.b16 %v799
        %v2837 = vunpack.c.l.b16 %v800
        %v2838 = vunpack.c.h.b16 %v800
        %v2839 = vunpack.c.l.b16 %v801
        %v2840 = vunpack.c.h.b16 %v801
        %v2841 = vunpack.c.l.b16 %v802
        %v2842 = vunpack.c.h.b16 %v802
        %v2843 = vunpack.c.l.b16 %v803
        %v2844 = vunpack.c.h.b16 %v803
        %v2845 = vunpack.c.l.b16 %v804
        %v2846 = vunpack.c.h.b16 %v804
        %v2847 = vunpack.c.l.b16 %v805
        %v2848 = vunpack.c.h.b16 %v805
        %v2849 = vunpack.c.l.b16 %v806
        %v2850 = vunpack.c.h.b16 %v806
        %v2851 = vunpack.c.l.b16 %v807
        %v2852 = vunpack.c.h.b16 %v807
        %v2853 = vunpack.c.l.b16 %v808
        %v2854 = vunpack.c.h.b16 %v808
        %v2855 = vunpack.c.l.b16 %v809
        %v2856 = vunpack.c.h.b16 %v809
        %v2857 = vunpack.c.l.b16 %v810
        %v2858 = vunpack.c.h.b16 %v810
        %v2859 = vunpack.c.l.b16 %v811
        %v2860 = vunpack.c.h.b16 %v811
        %v2861 = vunpack.c.l.b16 %v812
        %v2862 = vunpack.c.h.b16 %v812
        %v2863 = vunpack.c.l.b16 %v813
        %v2864 = vunpack.c.h.b16 %v813
        %v2865 = vunpack.c.l.b16 %v814
        %v2866 = vunpack.c.h.b16 %v814
        %v2867 = vunpack.c.l.b16 %v815
        %v2868 = vunpack.c.h.b16 %v815
        %v2869 = vunpack.c.l.b16 %v816
        %v2870 = vunpack.c.h.b16 %v816
        %v2871 = vunpack.c.l.b16 %v817
        %v2872 = vunpack.c.h.b16 %v817
        %v2873 = vunpack.c.l.b16 %v818
        %v2874 = vunpack.c.h.b16 %v818
        %v2875 = vunpack.c.l.b16 %v819
        %v2876 = vunpack.c.h.b16 %v819
        %v2877 = vunpack.c.l.b16 %v820
        %v2878 = vunpack.c.h.b16 %v820
        %v2879 = vunpack.c.l.b16 %v821
        %v2880 = vunpack.c.h.b16 %v821
        %v2881 = vunpack.c.l.b16 %v822
        %v2882 = vunpack.c.h.b16 %v822
        %v2883 = vunpack.c.l.b16 %v823
        %v2884 = vunpack.c.h.b16 %v823
        %v2885 = vunpack.c.l.b16 %v824
        %v2886 = vunpack.c.h.b16 %v824
        %v2887 = vunpack.c.l.b16 %v825
        %v2888 = vunpack.c.h.b16 %v825
        %v2889 = vunpack.c.l.b16 %v826
        %v2890 = vunpack.c.h.b16 %v826
        %v2891 = vunpack.c.l.b16 %v827
        %v2892 = vunpack.c.h.b16 %v827
        %v2893 = vunpack.c.l.b16 %v828
        %v2894 = vunpack.c.h.b16 %v828
        %v2895 = vunpack.c.l.b16 %v829
        %v2896 = vunpack.c.h.b16 %v829
        %v2897 = vunpack.c.l.b16 %v830
        %v2898 = vunpack.c.h.b16 %v830
        %v2899 = vunpack.c.l.b16 %v831
        %v2900 = vunpack.c.h.b16 %v831
        %v2901 = vunpack.c.l.b16 %v832
        %v2902 = vunpack.c.h.b16 %v832
        %v2903 = vunpack.c.l.b16 %v833
        %v2904 = vunpack.c.h.b16 %v833
        %v2905 = vunpack.c.l.b16 %v834
        %v2906 = vunpack.c.h.b16 %v834
        %v2907 = vunpack.c.l.b16 %v835
        %v2908 = vunpack.c.h.b16 %v835
        %v2909 = vunpack.c.l.b16 %v836
        %v2910 = vunpack.c.h.b16 %v836
        %v2911 = vunpack.c.l.b16 %v837
        %v2912 = vunpack.c.h.b16 %v837
        %v2913 = vunpack.c.l.b16 %v838
        %v2914 = vunpack.c.h.b16 %v838
        %v2915 = vunpack.c.l.b16 %v839
        %v2916 = vunpack.c.h.b16 %v839
        %v2917 = vunpack.c.l.b16 %v840
        %v2918 = vunpack.c.h.b16 %v840
        %v2919 = vunpack.c.l.b16 %v841
        %v2920 = vunpack.c.h.b16 %v841
        %v2921 = vunpack.c.l.b16 %v842
        %v2922 = vunpack.c.h.b16 %v842
        %v2923 = vunpack.c.l.b16 %v843
        %v2924 = vunpack.c.h.b16 %v843
        %v2925 = vunpack.c.l.b16 %v844
        %v2926 = vunpack.c.h.b16 %v844
        %v2927 = vunpack.c.l.b16 %v845
        %v2928 = vunpack.c.h.b16 %v845
        %v2929 = vunpack.c.l.b16 %v846
        %v2930 = vunpack.c.h.b16 %v846
        %v2931 = vunpack.c.l.b16 %v847
        %v2932 = vunpack.c.h.b16 %v847
        %v2933 = vunpack.c.l.b16 %v848
        %v2934 = vunpack.c.h.b16 %v848
        %v2935 = vunpack.c.l.b16 %v849
        %v2936 = vunpack.c.h.b16 %v849
        %v2937 = vunpack.c.l.b16 %v850
        %v2938 = vunpack.c.h.b16 %v850
        %v2939 = vunpack.c.l.b16 %v851
        %v2940 = vunpack.c.h.b16 %v851
        %v2941 = vunpack.c.l.b16 %v852
        %v2942 = vunpack.c.h.b16 %v852
        %v2943 = vunpack.c.l.b16 %v853
        %v2944 = vunpack.c.h.b16 %v853
        %v2945 = vunpack.c.l.b16 %v854
        %v2946 = vunpack.c.h.b16 %v854
        %v2947 = vunpack.c.l.b16 %v855
        %v2948 = vunpack.c.h.b16 %v855
        %v2949 = vunpack.c.l.b16 %v856
        %v2950 = vunpack.c.h.b16 %v856
        %v2951 = vunpack.c.l.b16 %v857
        %v2952 = vunpack.c.h.b16 %v857
        %v2953 = vunpack.c.l.b16 %v858
        %v2954 = vunpack.c.h.b16 %v858
        %v2955 = vunpack.c.l.b16 %v859
        %v2956 = vunpack.c.h.b16 %v859
        %v2957 = vunpack.c.l.b16 %v860
        %v2958 = vunpack.c.h.b16 %v860
        %v2959 = vunpack.c.l.b16 %v861
        %v2960 = vunpack.c.h.b16 %v861
        %v2961 = vunpack.c.l.b16 %v862
        %v2962 = vunpack.c.h.b16 %v862
        %v2963 = vunpack.c.l.b16 %v863
        %v2964 = vunpack.c.h.b16 %v863
        %v2965 = vunpack.c.l.b16 %v864
        %v2966 = vunpack.c.h.b16 %v864
        %v2967 = vunpack.c.l.b16 %v865
        %v2968 = vunpack.c.h.b16 %v865
        %v2969 = vunpack.c.l.b16 %v866
        %v2970 = vunpack.c.h.b16 %v866
        %v2971 = vunpack.c.l.b16 %v867
        %v2972 = vunpack.c.h.b16 %v867
        %v2973 = vunpack.c.l.b16 %v868
        %v2974 = vunpack.c.h.b16 %v868
        %v2975 = vunpack.c.l.b16 %v869
        %v2976 = vunpack.c.h.b16 %v869
        %v2977 = vunpack.c.l.b16 %v870
        %v2978 = vunpack.c.h.b16 %v870
        %v2979 = vunpack.c.l.b16 %v871
        %v2980 = vunpack.c.h.b16 %v871
        %v2981 = vunpack.c.l.b16 %v872
        %v2982 = vunpack.c.h.b16 %v872
        %v2983 = vunpack.c.l.b16 %v873
        %v2984 = vunpack.c.h.b16 %v873
        %v2985 = vunpack.c.l.b16 %v874
        %v2986 = vunpack.c.h.b16 %v874
        %v2987 = vunpack.c.l.b16 %v875
        %v2988 = vunpack.c.h.b16 %v875
        %v2989 = vunpack.c.l.b16 %v876
        %v2990 = vunpack.c.h.b16 %v876
        %v2991 = vunpack.c.l.b16 %v877
        %v2992 = vunpack.c.h.b16 %v877
        %v2993 = vunpack.c.l.b16 %v878
        %v2994 = vunpack.c.h.b16 %v878
        %v2995 = vunpack.c.l.b16 %v879
        %v2996 = vunpack.c.h.b16 %v879
        %v2997 = vunpack.c.l.b16 %v880
        %v2998 = vunpack.c.h.b16 %v880
        %v2999 = vpack.c.b16 %v1979, %v1975
        %v3000 = vpack.c.b16 %v1980, %v1976
        %v3001 = vpack.c.b16 %v1981, %v1977
        %v3002 = vpack.c.b16 %v1982, %v1978
        %v3003 = vpack.c.b16 %v1987, %v1983
        %v3004 = vpack.c.b16 %v1988, %v1984
        %v3005 = vpack.c.b16 %v1989, %v1985
        %v3006 = vpack.c.b16 %v1990, %v1986
        %v3007 = vpack.c.b16 %v1995, %v1991
        %v3008 = vpack.c.b16 %v1996, %v1992
        %v3009 = vpack.c.b16 %v1997, %v1993
        %v3010 = vpack.c.b16 %v1998, %v1994
        %v3011 = vpack.c.b16 %v2003, %v1999
        %v3012 = vpack.c.b16 %v2004, %v2000
        %v3013 = vpack.c.b16 %v2005, %v2001
        %v3014 = vpack.c.b16 %v2006, %v2002
        %v3015 = vpack.c.b16 %v2011, %v2007
        %v3016 = vpack.c.b16 %v2012, %v2008
        %v3017 = vpack.c.b16 %v2013, %v2009
        %v3018 = vpack.c.b16 %v2014, %v2010
        %v3019 = vpack.c.b16 %v2019, %v2015
        %v3020 = vpack.c.b16 %v2020, %v2016
        %v3021 = vpack.c.b16 %v2021, %v2017
        %v3022 = vpack.c.b16 %v2022, %v2018
        %v3023 = vpack.c.b16 %v2027, %v2023
        %v3024 = vpack.c.b16 %v2028, %v2024
        %v3025 = vpack.c.b16 %v2029, %v2025
        %v3026 = vpack.c.b16 %v2030, %v2026
        %v3027 = vpack.c.b16 %v2035, %v2031
        %v3028 = vpack.c.b16 %v2036, %v2032
        %v3029 = vpack.c.b16 %v2037, %v2033
        %v3030 = vpack.c.b16 %v2038, %v2034
        %v3031 = vpack.c.b16 %v2043, %v2039
        %v3032 = vpack.c.b16 %v2044, %v2040
        %v3033 = vpack.c.b16 %v2045, %v2041
        %v3034 = vpack.c.b16 %v2046, %v2042
        %v3035 = vpack.c.b16 %v2051, %v2047
        %v3036 = vpack.c.b16 %v2052, %v2048
        %v3037 = vpack.c.b16 %v2053, %v2049
        %v3038 = vpack.c.b16 %v2054, %v2050
        %v3039 = vpack.c.b16 %v2059, %v2055
        %v3040 = vpack.c.b16 %v2060, %v2056
        %v3041 = vpack.c.b16 %v2061, %v2057
        %v3042 = vpack.c.b16 %v2062, %v2058
        %v3043 = vpack.c.b16 %v2067, %v2063
        %v3044 = vpack.c.b16 %v2068, %v2064
        %v3045 = vpack.c.b16 %v2069, %v2065
        %v3046 = vpack.c.b16 %v2070, %v2066
        %v3047 = vpack.c.b16 %v2075, %v2071
        %v3048 = vpack.c.b16 %v2076, %v2072
        %v3049 = vpack.c.b16 %v2077, %v2073
        %v3050 = vpack.c.b16 %v2078, %v2074
        %v3051 = vpack.c.b16 %v2083, %v2079
        %v3052 = vpack.c.b16 %v2084, %v2080
        %v3053 = vpack.c.b16 %v2085, %v2081
        %v3054 = vpack.c.b16 %v2086, %v2082
        %v3055 = vpack.c.b16 %v2091, %v2087
        %v3056 = vpack.c.b16 %v2092, %v2088
        %v3057 = vpack.c.b16 %v2093, %v2089
        %v3058 = vpack.c.b16 %v2094, %v2090
        %v3059 = vpack.c.b16 %v2099, %v2095
        %v3060 = vpack.c.b16 %v2100, %v2096
        %v3061 = vpack.c.b16 %v2101, %v2097
        %v3062 = vpack.c.b16 %v2102, %v2098
        %v3063 = vpack.c.b16 %v2107, %v2103
        %v3064 = vpack.c.b16 %v2108, %v2104
        %v3065 = vpack.c.b16 %v2109, %v2105
        %v3066 = vpack.c.b16 %v2110, %v2106
        %v3067 = vpack.c.b16 %v2115, %v2111
        %v3068 = vpack.c.b16 %v2116, %v2112
        %v3069 = vpack.c.b16 %v2117, %v2113
        %v3070 = vpack.c.b16 %v2118, %v2114
        %v3071 = vpack.c.b16 %v2123, %v2119
        %v3072 = vpack.c.b16 %v2124, %v2120
        %v3073 = vpack.c.b16 %v2125, %v2121
        %v3074 = vpack.c.b16 %v2126, %v2122
        %v3075 = vpack.c.b16 %v2131, %v2127
        %v3076 = vpack.c.b16 %v2132, %v2128
        %v3077 = vpack.c.b16 %v2133, %v2129
        %v3078 = vpack.c.b16 %v2134, %v2130
        %v3079 = vpack.c.b16 %v2139, %v2135
        %v3080 = vpack.c.b16 %v2140, %v2136
        %v3081 = vpack.c.b16 %v2141, %v2137
        %v3082 = vpack.c.b16 %v2142, %v2138
        %v3083 = vpack.c.b16 %v2147, %v2143
        %v3084 = vpack.c.b16 %v2148, %v2144
        %v3085 = vpack.c.b16 %v2149, %v2145
        %v3086 = vpack.c.b16 %v2150, %v2146
        %v3087 = vpack.c.b16 %v2155, %v2151
        %v3088 = vpack.c.b16 %v2156, %v2152
        %v3089 = vpack.c.b16 %v2157, %v2153
        %v3090 = vpack.c.b16 %v2158, %v2154
        %v3091 = vpack.c.b16 %v2163, %v2159
        %v3092 = vpack.c.b16 %v2164, %v2160
        %v3093 = vpack.c.b16 %v2165, %v2161
        %v3094 = vpack.c.b16 %v2166, %v2162
        %v3095 = vpack.c.b16 %v2171, %v2167
        %v3096 = vpack.c.b16 %v2172, %v2168
        %v3097 = vpack.c.b16 %v2173, %v2169
        %v3098 = vpack.c.b16 %v2174, %v2170
        %v3099 = vpack.c.b16 %v2179, %v2175
        %v3100 = vpack.c.b16 %v2180, %v2176
        %v3101 = vpack.c.b16 %v2181, %v2177
        %v3102 = vpack.c.b16 %v2182, %v2178
        %v3103 = vpack.c.b16 %v2187, %v2183
        %v3104 = vpack.c.b16 %v2188, %v2184
        %v3105 = vpack.c.b16 %v2189, %v2185
        %v3106 = vpack.c.b16 %v2190, %v2186
        %v3107 = vpack.c.b16 %v2195, %v2191
        %v3108 = vpack.c.b16 %v2196, %v2192
        %v3109 = vpack.c.b16 %v2197, %v2193
        %v3110 = vpack.c.b16 %v2198, %v2194
        %v3111 = vpack.c.b16 %v2203, %v2199
        %v3112 = vpack.c.b16 %v2204, %v2200
        %v3113 = vpack.c.b16 %v2205, %v2201
        %v3114 = vpack.c.b16 %v2206, %v2202
        %v3115 = vpack.c.b16 %v2211, %v2207
        %v3116 = vpack.c.b16 %v2212, %v2208
        %v3117 = vpack.c.b16 %v2213, %v2209
        %v3118 = vpack.c.b16 %v2214, %v2210
        %v3119 = vpack.c.b16 %v2219, %v2215
        %v3120 = vpack.c.b16 %v2220, %v2216
        %v3121 = vpack.c.b16 %v2221, %v2217
        %v3122 = vpack.c.b16 %v2222, %v2218
        %v3123 = vpack.c.b16 %v2227, %v2223
        %v3124 = vpack.c.b16 %v2228, %v2224
        %v3125 = vpack.c.b16 %v2229, %v2225
        %v3126 = vpack.c.b16 %v2230, %v2226
        %v3127 = vpack.c.b16 %v2235, %v2231
        %v3128 = vpack.c.b16 %v2236, %v2232
        %v3129 = vpack.c.b16 %v2237, %v2233
        %v3130 = vpack.c.b16 %v2238, %v2234
        %v3131 = vpack.c.b16 %v2243, %v2239
        %v3132 = vpack.c.b16 %v2244, %v2240
        %v3133 = vpack.c.b16 %v2245, %v2241
        %v3134 = vpack.c.b16 %v2246, %v2242
        %v3135 = vpack.c.b16 %v2251, %v2247
        %v3136 = vpack.c.b16 %v2252, %v2248
        %v3137 = vpack.c.b16 %v2253, %v2249
        %v3138 = vpack.c.b16 %v2254, %v2250
        %v3139 = vpack.c.b16 %v2259, %v2255
        %v3140 = vpack.c.b16 %v2260, %v2256
        %v3141 = vpack.c.b16 %v2261, %v2257
        %v3142 = vpack.c.b16 %v2262, %v2258
        %v3143 = vpack.c.b16 %v2267, %v2263
        %v3144 = vpack.c.b16 %v2268, %v2264
        %v3145 = vpack.c.b16 %v2269, %v2265
        %v3146 = vpack.c.b16 %v2270, %v2266
        %v3147 = vpack.c.b16 %v2275, %v2271
        %v3148 = vpack.c.b16 %v2276, %v2272
        %v3149 = vpack.c.b16 %v2277, %v2273
        %v3150 = vpack.c.b16 %v2278, %v2274
        %v3151 = vpack.c.b16 %v2283, %v2279
        %v3152 = vpack.c.b16 %v2284, %v2280
        %v3153 = vpack.c.b16 %v2285, %v2281
        %v3154 = vpack.c.b16 %v2286, %v2282
        %v3155 = vpack.c.b16 %v2291, %v2287
        %v3156 = vpack.c.b16 %v2292, %v2288
        %v3157 = vpack.c.b16 %v2293, %v2289
        %v3158 = vpack.c.b16 %v2294, %v2290
        %v3159 = vpack.c.b16 %v2299, %v2295
        %v3160 = vpack.c.b16 %v2300, %v2296
        %v3161 = vpack.c.b16 %v2301, %v2297
        %v3162 = vpack.c.b16 %v2302, %v2298
        %v3163 = vpack.c.b16 %v2307, %v2303
        %v3164 = vpack.c.b16 %v2308, %v2304
        %v3165 = vpack.c.b16 %v2309, %v2305
        %v3166 = vpack.c.b16 %v2310, %v2306
        %v3167 = vpack.c.b16 %v2315, %v2311
        %v3168 = vpack.c.b16 %v2316, %v2312
        %v3169 = vpack.c.b16 %v2317, %v2313
        %v3170 = vpack.c.b16 %v2318, %v2314
        %v3171 = vpack.c.b16 %v2323, %v2319
        %v3172 = vpack.c.b16 %v2324, %v2320
        %v3173 = vpack.c.b16 %v2325, %v2321
        %v3174 = vpack.c.b16 %v2326, %v2322
        %v3175 = vpack.c.b16 %v2331, %v2327
        %v3176 = vpack.c.b16 %v2332, %v2328
        %v3177 = vpack.c.b16 %v2333, %v2329
        %v3178 = vpack.c.b16 %v2334, %v2330
        %v3179 = vpack.c.b16 %v2339, %v2335
        %v3180 = vpack.c.b16 %v2340, %v2336
        %v3181 = vpack.c.b16 %v2341, %v2337
        %v3182 = vpack.c.b16 %v2342, %v2338
        %v3183 = vpack.c.b16 %v2347, %v2343
        %v3184 = vpack.c.b16 %v2348, %v2344
        %v3185 = vpack.c.b16 %v2349, %v2345
        %v3186 = vpack.c.b16 %v2350, %v2346
        %v3187 = vpack.c.b16 %v2355, %v2351
        %v3188 = vpack.c.b16 %v2356, %v2352
        %v3189 = vpack.c.b16 %v2357, %v2353
        %v3190 = vpack.c.b16 %v2358, %v2354
        %v3191 = vpack.c.b16 %v2363, %v2359
        %v3192 = vpack.c.b16 %v2364, %v2360
        %v3193 = vpack.c.b16 %v2365, %v2361
        %v3194 = vpack.c.b16 %v2366, %v2362
        %v3195 = vpack.c.b16 %v2371, %v2367
        %v3196 = vpack.c.b16 %v2372, %v2368
        %v3197 = vpack.c.b16 %v2373, %v2369
        %v3198 = vpack.c.b16 %v2374, %v2370
        %v3199 = vpack.c.b16 %v2379, %v2375
        %v3200 = vpack.c.b16 %v2380, %v2376
        %v3201 = vpack.c.b16 %v2381, %v2377
        %v3202 = vpack.c.b16 %v2382, %v2378
        %v3203 = vpack.c.b16 %v2387, %v2383
        %v3204 = vpack.c.b16 %v2388, %v2384
        %v3205 = vpack.c.b16 %v2389, %v2385
        %v3206 = vpack.c.b16 %v2390, %v2386
        %v3207 = vpack.c.b16 %v2395, %v2391
        %v3208 = vpack.c.b16 %v2396, %v2392
        %v3209 = vpack.c.b16 %v2397, %v2393
        %v3210 = vpack.c.b16 %v2398, %v2394
        %v3211 = vpack.c.b16 %v2403, %v2399
        %v3212 = vpack.c.b16 %v2404, %v2400
        %v3213 = vpack.c.b16 %v2405, %v2401
        %v3214 = vpack.c.b16 %v2406, %v2402
        %v3215 = vpack.c.b16 %v2411, %v2407
        %v3216 = vpack.c.b16 %v2412, %v2408
        %v3217 = vpack.c.b16 %v2413, %v2409
        %v3218 = vpack.c.b16 %v2414, %v2410
        %v3219 = vpack.c.b16 %v2419, %v2415
        %v3220 = vpack.c.b16 %v2420, %v2416
        %v3221 = vpack.c.b16 %v2421, %v2417
        %v3222 = vpack.c.b16 %v2422, %v2418
        %v3223 = vpack.c.b16 %v2427, %v2423
        %v3224 = vpack.c.b16 %v2428, %v2424
        %v3225 = vpack.c.b16 %v2429, %v2425
        %v3226 = vpack.c.b16 %v2430, %v2426
        %v3227 = vpack.c.b16 %v2435, %v2431
        %v3228 = vpack.c.b16 %v2436, %v2432
        %v3229 = vpack.c.b16 %v2437, %v2433
        %v3230 = vpack.c.b16 %v2438, %v2434
        %v3231 = vpack.c.b16 %v2443, %v2439
        %v3232 = vpack.c.b16 %v2444, %v2440
        %v3233 = vpack.c.b16 %v2445, %v2441
        %v3234 = vpack.c.b16 %v2446, %v2442
        %v3235 = vpack.c.b16 %v2451, %v2447
        %v3236 = vpack.c.b16 %v2452, %v2448
        %v3237 = vpack.c.b16 %v2453, %v2449
        %v3238 = vpack.c.b16 %v2454, %v2450
        %v3239 = vpack.c.b16 %v2459, %v2455
        %v3240 = vpack.c.b16 %v2460, %v2456
        %v3241 = vpack.c.b16 %v2461, %v2457
        %v3242 = vpack.c.b16 %v2462, %v2458
        %v3243 = vpack.c.b16 %v2467, %v2463
        %v3244 = vpack.c.b16 %v2468, %v2464
        %v3245 = vpack.c.b16 %v2469, %v2465
        %v3246 = vpack.c.b16 %v2470, %v2466
        %v3247 = vpack.c.b16 %v2475, %v2471
        %v3248 = vpack.c.b16 %v2476, %v2472
        %v3249 = vpack.c.b16 %v2477, %v2473
        %v3250 = vpack.c.b16 %v2478, %v2474
        %v3251 = vpack.c.b16 %v2483, %v2479
        %v3252 = vpack.c.b16 %v2484, %v2480
        %v3253 = vpack.c.b16 %v2485, %v2481
        %v3254 = vpack.c.b16 %v2486, %v2482
        %v3255 = vpack.c.b16 %v2491, %v2487
        %v3256 = vpack.c.b16 %v2492, %v2488
        %v3257 = vpack.c.b16 %v2493, %v2489
        %v3258 = vpack.c.b16 %v2494, %v2490
        %v3259 = vpack.c.b16 %v2499, %v2495
        %v3260 = vpack.c.b16 %v2500, %v2496
        %v3261 = vpack.c.b16 %v2501, %v2497
        %v3262 = vpack.c.b16 %v2502, %v2498
        %v3263 = vpack.c.b16 %v2507, %v2503
        %v3264 = vpack.c.b16 %v2508, %v2504
        %v3265 = vpack.c.b16 %v2509, %v2505
        %v3266 = vpack.c.b16 %v2510, %v2506
        %v3267 = vpack.c.b16 %v2515, %v2511
        %v3268 = vpack.c.b16 %v2516, %v2512
        %v3269 = vpack.c.b16 %v2517, %v2513
        %v3270 = vpack.c.b16 %v2518, %v2514
        %v3271 = vpack.c.b16 %v2523, %v2519
        %v3272 = vpack.c.b16 %v2524, %v2520
        %v3273 = vpack.c.b16 %v2525, %v2521
        %v3274 = vpack.c.b16 %v2526, %v2522
        %v3275 = vpack.c.b16 %v2531, %v2527
        %v3276 = vpack.c.b16 %v2532, %v2528
        %v3277 = vpack.c.b16 %v2533, %v2529
        %v3278 = vpack.c.b16 %v2534, %v2530
        %v3279 = vpack.c.b16 %v2539, %v2535
        %v3280 = vpack.c.b16 %v2540, %v2536
        %v3281 = vpack.c.b16 %v2541, %v2537
        %v3282 = vpack.c.b16 %v2542, %v2538
        %v3283 = vpack.c.b16 %v2547, %v2543
        %v3284 = vpack.c.b16 %v2548, %v2544
        %v3285 = vpack.c.b16 %v2549, %v2545
        %v3286 = vpack.c.b16 %v2550, %v2546
        %v3287 = vpack.c.b16 %v2555, %v2551
        %v3288 = vpack.c.b16 %v2556, %v2552
        %v3289 = vpack.c.b16 %v2557, %v2553
        %v3290 = vpack.c.b16 %v2558, %v2554
        %v3291 = vpack.c.b16 %v2563, %v2559
        %v3292 = vpack.c.b16 %v2564, %v2560
        %v3293 = vpack.c.b16 %v2565, %v2561
        %v3294 = vpack.c.b16 %v2566, %v2562
        %v3295 = vpack.c.b16 %v2571, %v2567
        %v3296 = vpack.c.b16 %v2572, %v2568
        %v3297 = vpack.c.b16 %v2573, %v2569
        %v3298 = vpack.c.b16 %v2574, %v2570
        %v3299 = vpack.c.b16 %v2579, %v2575
        %v3300 = vpack.c.b16 %v2580, %v2576
        %v3301 = vpack.c.b16 %v2581, %v2577
        %v3302 = vpack.c.b16 %v2582, %v2578
        %v3303 = vpack.c.b16 %v2587, %v2583
        %v3304 = vpack.c.b16 %v2588, %v2584
        %v3305 = vpack.c.b16 %v2589, %v2585
        %v3306 = vpack.c.b16 %v2590, %v2586
        %v3307 = vpack.c.b16 %v2595, %v2591
        %v3308 = vpack.c.b16 %v2596, %v2592
        %v3309 = vpack.c.b16 %v2597, %v2593
        %v3310 = vpack.c.b16 %v2598, %v2594
        %v3311 = vpack.c.b16 %v2603, %v2599
        %v3312 = vpack.c.b16 %v2604, %v2600
        %v3313 = vpack.c.b16 %v2605, %v2601
        %v3314 = vpack.c.b16 %v2606, %v2602
        %v3315 = vpack.c.b16 %v2611, %v2607
        %v3316 = vpack.c.b16 %v2612, %v2608
        %v3317 = vpack.c.b16 %v2613, %v2609
        %v3318 = vpack.c.b16 %v2614, %v2610
        %v3319 = vpack.c.b16 %v2619, %v2615
        %v3320 = vpack.c.b16 %v2620, %v2616
        %v3321 = vpack.c.b16 %v2621, %v2617
        %v3322 = vpack.c.b16 %v2622, %v2618
        %v3323 = vpack.c.b16 %v2627, %v2623
        %v3324 = vpack.c.b16 %v2628, %v2624
        %v3325 = vpack.c.b16 %v2629, %v2625
        %v3326 = vpack.c.b16 %v2630, %v2626
        %v3327 = vpack.c.b16 %v2635, %v2631
        %v3328 = vpack.c.b16 %v2636, %v2632
        %v3329 = vpack.c.b16 %v2637, %v2633
        %v3330 = vpack.c.b16 %v2638, %v2634
        %v3331 = vpack.c.b16 %v2643, %v2639
        %v3332 = vpack.c.b16 %v2644, %v2640
        %v3333 = vpack.c.b16 %v2645, %v2641
        %v3334 = vpack.c.b16 %v2646, %v2642
        %v3335 = vpack.c.b16 %v2651, %v2647
        %v3336 = vpack.c.b16 %v2652, %v2648
        %v3337 = vpack.c.b16 %v2653, %v2649
        %v3338 = vpack.c.b16 %v2654, %v2650
        %v3339 = vpack.c.b16 %v2659, %v2655
        %v3340 = vpack.c.b16 %v2660, %v2656
        %v3341 = vpack.c.b16 %v2661, %v2657
        %v3342 = vpack.c.b16 %v2662, %v2658
        %v3343 = vpack.c.b16 %v2667, %v2663
        %v3344 = vpack.c.b16 %v2668, %v2664
        %v3345 = vpack.c.b16 %v2669, %v2665
        %v3346 = vpack.c.b16 %v2670, %v2666
        %v3347 = vpack.c.b16 %v2675, %v2671
        %v3348 = vpack.c.b16 %v2676, %v2672
        %v3349 = vpack.c.b16 %v2677, %v2673
        %v3350 = vpack.c.b16 %v2678, %v2674
        %v3351 = vpack.c.b16 %v2683, %v2679
        %v3352 = vpack.c.b16 %v2684, %v2680
        %v3353 = vpack.c.b16 %v2685, %v2681
        %v3354 = vpack.c.b16 %v2686, %v2682
        %v3355 = vpack.c.b16 %v2691, %v2687
        %v3356 = vpack.c.b16 %v2692, %v2688
        %v3357 = vpack.c.b16 %v2693, %v2689
        %v3358 = vpack.c.b16 %v2694, %v2690
        %v3359 = vpack.c.b16 %v2699, %v2695
        %v3360 = vpack.c.b16 %v2700, %v2696
        %v3361 = vpack.c.b16 %v2701, %v2697
        %v3362 = vpack.c.b16 %v2702, %v2698
        %v3363 = vpack.c.b16 %v2707, %v2703
        %v3364 = vpack.c.b16 %v2708, %v2704
        %v3365 = vpack.c.b16 %v2709, %v2705
        %v3366 = vpack.c.b16 %v2710, %v2706
        %v3367 = vpack.c.b16 %v2715, %v2711
        %v3368 = vpack.c.b16 %v2716, %v2712
        %v3369 = vpack.c.b16 %v2717, %v2713
        %v3370 = vpack.c.b16 %v2718, %v2714
        %v3371 = vpack.c.b16 %v2723, %v2719
        %v3372 = vpack.c.b16 %v2724, %v2720
        %v3373 = vpack.c.b16 %v2725, %v2721
        %v3374 = vpack.c.b16 %v2726, %v2722
        %v3375 = vpack.c.b16 %v2731, %v2727
        %v3376 = vpack.c.b16 %v2732, %v2728
        %v3377 = vpack.c.b16 %v2733, %v2729
        %v3378 = vpack.c.b16 %v2734, %v2730
        %v3379 = vpack.c.b16 %v2739, %v2735
        %v3380 = vpack.c.b16 %v2740, %v2736
        %v3381 = vpack.c.b16 %v2741, %v2737
        %v3382 = vpack.c.b16 %v2742, %v2738
        %v3383 = vpack.c.b16 %v2747, %v2743
        %v3384 = vpack.c.b16 %v2748, %v2744
        %v3385 = vpack.c.b16 %v2749, %v2745
        %v3386 = vpack.c.b16 %v2750, %v2746
        %v3387 = vpack.c.b16 %v2755, %v2751
        %v3388 = vpack.c.b16 %v2756, %v2752
        %v3389 = vpack.c.b16 %v2757, %v2753
        %v3390 = vpack.c.b16 %v2758, %v2754
        %v3391 = vpack.c.b16 %v2763, %v2759
        %v3392 = vpack.c.b16 %v2764, %v2760
        %v3393 = vpack.c.b16 %v2765, %v2761
        %v3394 = vpack.c.b16 %v2766, %v2762
        %v3395 = vpack.c.b16 %v2771, %v2767
        %v3396 = vpack.c.b16 %v2772, %v2768
        %v3397 = vpack.c.b16 %v2773, %v2769
        %v3398 = vpack.c.b16 %v2774, %v2770
        %v3399 = vpack.c.b16 %v2779, %v2775
        %v3400 = vpack.c.b16 %v2780, %v2776
        %v3401 = vpack.c.b16 %v2781, %v2777
        %v3402 = vpack.c.b16 %v2782, %v2778
        %v3403 = vpack.c.b16 %v2787, %v2783
        %v3404 = vpack.c.b16 %v2788, %v2784
        %v3405 = vpack.c.b16 %v2789, %v2785
        %v3406 = vpack.c.b16 %v2790, %v2786
        %v3407 = vpack.c.b16 %v2795, %v2791
        %v3408 = vpack.c.b16 %v2796, %v2792
        %v3409 = vpack.c.b16 %v2797, %v2793
        %v3410 = vpack.c.b16 %v2798, %v2794
        %v3411 = vpack.c.b16 %v2803, %v2799
        %v3412 = vpack.c.b16 %v2804, %v2800
        %v3413 = vpack.c.b16 %v2805, %v2801
        %v3414 = vpack.c.b16 %v2806, %v2802
        %v3415 = vpack.c.b16 %v2811, %v2807
        %v3416 = vpack.c.b16 %v2812, %v2808
        %v3417 = vpack.c.b16 %v2813, %v2809
        %v3418 = vpack.c.b16 %v2814, %v2810
        %v3419 = vpack.c.b16 %v2819, %v2815
        %v3420 = vpack.c.b16 %v2820, %v2816
        %v3421 = vpack.c.b16 %v2821, %v2817
        %v3422 = vpack.c.b16 %v2822, %v2818
        %v3423 = vpack.c.b16 %v2827, %v2823
        %v3424 = vpack.c.b16 %v2828, %v2824
        %v3425 = vpack.c.b16 %v2829, %v2825
        %v3426 = vpack.c.b16 %v2830, %v2826
        %v3427 = vpack.c.b16 %v2835, %v2831
        %v3428 = vpack.c.b16 %v2836, %v2832
        %v3429 = vpack.c.b16 %v2837, %v2833
        %v3430 = vpack.c.b16 %v2838, %v2834
        %v3431 = vpack.c.b16 %v2843, %v2839
        %v3432 = vpack.c.b16 %v2844, %v2840
        %v3433 = vpack.c.b16 %v2845, %v2841
        %v3434 = vpack.c.b16 %v2846, %v2842
        %v3435 = vpack.c.b16 %v2851, %v2847
        %v3436 = vpack.c.b16 %v2852, %v2848
        %v3437 = vpack.c.b16 %v2853, %v2849
        %v3438 = vpack.c.b16 %v2854, %v2850
        %v3439 = vpack.c.b16 %v2859, %v2855
        %v3440 = vpack.c.b16 %v2860, %v2856
        %v3441 = vpack.c.b16 %v2861, %v2857
        %v3442 = vpack.c.b16 %v2862, %v2858
        %v3443 = vpack.c.b16 %v2867, %v2863
        %v3444 = vpack.c.b16 %v2868, %v2864
        %v3445 = vpack.c.b16 %v2869, %v2865
        %v3446 = vpack.c.b16 %v2870, %v2866
        %v3447 = vpack.c.b16 %v2875, %v2871
        %v3448 = vpack.c.b16 %v2876, %v2872
        %v3449 = vpack.c.b16 %v2877, %v2873
        %v3450 = vpack.c.b16 %v2878, %v2874
        %v3451 = vpack.c.b16 %v2883, %v2879
        %v3452 = vpack.c.b16 %v2884, %v2880
        %v3453 = vpack.c.b16 %v2885, %v2881
        %v3454 = vpack.c.b16 %v2886, %v2882
        %v3455 = vpack.c.b16 %v2891, %v2887
        %v3456 = vpack.c.b16 %v2892, %v2888
        %v3457 = vpack.c.b16 %v2893, %v2889
        %v3458 = vpack.c.b16 %v2894, %v2890
        %v3459 = vpack.c.b16 %v2899, %v2895
        %v3460 = vpack.c.b16 %v2900, %v2896
        %v3461 = vpack.c.b16 %v2901, %v2897
        %v3462 = vpack.c.b16 %v2902, %v2898
        %v3463 = vpack.c.b16 %v2907, %v2903
        %v3464 = vpack.c.b16 %v2908, %v2904
        %v3465 = vpack.c.b16 %v2909, %v2905
        %v3466 = vpack.c.b16 %v2910, %v2906
        %v3467 = vpack.c.b16 %v2915, %v2911
        %v3468 = vpack.c.b16 %v2916, %v2912
        %v3469 = vpack.c.b16 %v2917, %v2913
        %v3470 = vpack.c.b16 %v2918, %v2914
        %v3471 = vpack.c.b16 %v2923, %v2919
        %v3472 = vpack.c.b16 %v2924, %v2920
        %v3473 = vpack.c.b16 %v2925, %v2921
        %v3474 = vpack.c.b16 %v2926, %v2922
        %v3475 = vpack.c.b16 %v2931, %v2927
        %v3476 = vpack.c.b16 %v2932, %v2928
        %v3477 = vpack.c.b16 %v2933, %v2929
        %v3478 = vpack.c.b16 %v2934, %v2930
        %v3479 = vpack.c.b16 %v2939, %v2935
        %v3480 = vpack.c.b16 %v2940, %v2936
        %v3481 = vpack.c.b16 %v2941, %v2937
        %v3482 = vpack.c.b16 %v2942, %v2938
        %v3483 = vpack.c.b16 %v2947, %v2943
        %v3484 = vpack.c.b16 %v2948, %v2944
        %v3485 = vpack.c.b16 %v2949, %v2945
        %v3486 = vpack.c.b16 %v2950, %v2946
        %v3487 = vpack.c.b16 %v2955, %v2951
        %v3488 = vpack.c.b16 %v2956, %v2952
        %v3489 = vpack.c.b16 %v2957, %v2953
        %v3490 = vpack.c.b16 %v2958, %v2954
        %v3491 = vpack.c.b16 %v2963, %v2959
        %v3492 = vpack.c.b16 %v2964, %v2960
        %v3493 = vpack.c.b16 %v2965, %v2961
        %v3494 = vpack.c.b16 %v2966, %v2962
        %v3495 = vpack.c.b16 %v2971, %v2967
        %v3496 = vpack.c.b16 %v2972, %v2968
        %v3497 = vpack.c.b16 %v2973, %v2969
        %v3498 = vpack.c.b16 %v2974, %v2970
        %v3499 = vpack.c.b16 %v2979, %v2975
        %v3500 = vpack.c.b16 %v2980, %v2976
        %v3501 = vpack.c.b16 %v2981, %v2977
        %v3502 = vpack.c.b16 %v2982, %v2978
        %v3503 = vpack.c.b16 %v2987, %v2983
        %v3504 = vpack.c.b16 %v2988, %v2984
        %v3505 = vpack.c.b16 %v2989, %v2985
        %v3506 = vpack.c.b16 %v2990, %v2986
        %v3507 = vpack.c.b16 %v2995, %v2991
        %v3508 = vpack.c.b16 %v2996, %v2992
        %v3509 = vpack.c.b16 %v2997, %v2993
        %v3510 = vpack.c.b16 %v2998, %v2994
        %4023 = vmatprep.subr.bf16.mxu0 %v3000
        %4024 = vmatpush1.bf16.msra.mxu0 %v2999
        %4025 = vmatprep.subr.bf16.mxu0 %v3004
        %4026 = vmatpush1.bf16.msra.mxu0 %v3003
        %4027 = vmatprep.subr.bf16.mxu0 %v3008
        %4028 = vmatpush1.bf16.msra.mxu0 %v3007
        %4029 = vmatprep.subr.bf16.mxu0 %v3012
        %4030 = vmatpush1.bf16.msra.mxu0 %v3011
        %4031 = vmatprep.subr.bf16.mxu0 %v3016
        %4032 = vmatpush1.bf16.msra.mxu0 %v3015
        %4033 = vmatprep.subr.bf16.mxu0 %v3020
        %4034 = vmatpush1.bf16.msra.mxu0 %v3019
        %4035 = vmatprep.subr.bf16.mxu0 %v3024
        %4036 = vmatpush1.bf16.msra.mxu0 %v3023
        %4037 = vmatprep.subr.bf16.mxu0 %v3028
        %4038 = vmatpush1.bf16.msra.mxu0 %v3027
        %4039 = vmatprep.subr.bf16.mxu0 %v3032
        %4040 = vmatpush1.bf16.msra.mxu0 %v3031
        %4041 = vmatprep.subr.bf16.mxu0 %v3036
        %4042 = vmatpush1.bf16.msra.mxu0 %v3035
        %4043 = vmatprep.subr.bf16.mxu0 %v3040
        %4044 = vmatpush1.bf16.msra.mxu0 %v3039
        %4045 = vmatprep.subr.bf16.mxu0 %v3044
        %4046 = vmatpush1.bf16.msra.mxu0 %v3043
        %4047 = vmatprep.subr.bf16.mxu0 %v3048
        %4048 = vmatpush1.bf16.msra.mxu0 %v3047
        %4049 = vmatprep.subr.bf16.mxu0 %v3052
        %4050 = vmatpush1.bf16.msra.mxu0 %v3051
        %4051 = vmatprep.subr.bf16.mxu0 %v3056
        %4052 = vmatpush1.bf16.msra.mxu0 %v3055
        %4053 = vmatprep.subr.bf16.mxu0 %v3060
        %4054 = vmatpush1.bf16.msra.mxu0 %v3059
        %4055 = vmatprep.mubr.bf16.mxu0 %v1240
        %4056 = vmatmul.mubr.bf16.gmra.mrb[0].mxu0 %v1239
        %v4057 = vpop.f32.mrb[0].mxu0
        %v4058 = vadd.f32 %v886, %v4057
        %v4059 = vpop.f32.mrb[0].mxu0
        %v4060 = vadd.f32 %v890, %v4059
        %v4061 = vpop.f32.mrb[0].mxu0
        %v4062 = vadd.f32 %v886, %v4061
        %v4063 = vpop.f32.mrb[0].mxu0
        %v4064 = vadd.f32 %v890, %v4063
        %4065 = vmatprep.mubr.bf16.mxu0 %v1256
        %4066 = vmatmul.mubr.bf16.gmra.mrb[0].mxu0 %v1255
        %v4067 = vpop.f32.mrb[0].mxu0
        %v4068 = vadd.f32 %v886, %v4067
        %v4069 = vpop.f32.mrb[0].mxu0
        %v4070 = vadd.f32 %v890, %v4069
        %v4071 = vpop.f32.mrb[0].mxu0
        %v4072 = vadd.f32 %v886, %v4071
        %v4073 = vpop.f32.mrb[0].mxu0
        %v4074 = vadd.f32 %v890, %v4073
        %4075 = vmatprep.mubr.bf16.mxu0 %v1272
        %4076 = vmatmul.mubr.bf16.gmra.mrb[0].mxu0 %v1271
        %v4077 = vpop.f32.mrb[0].mxu0
        %v4078 = vadd.f32 %v886, %v4077
        %v4079 = vpop.f32.mrb[0].mxu0
        %v4080 = vadd.f32 %v890, %v4079
        %v4081 = vpop.f32.mrb[0].mxu0
        %v4082 = vadd.f32 %v886, %v4081
        %v4083 = vpop.f32.mrb[0].mxu0
        %v4084 = vadd.f32 %v890, %v4083
        %4085 = vmatprep.mubr.bf16.mxu0 %v1288
        %4086 = vmatmul.mubr.bf16.gmra.mrb[0].mxu0 %v1287
        %v4087 = vpop.f32.mrb[0].mxu0
        %v4088 = vadd.f32 %v886, %v4087
        %v4089 = vpop.f32.mrb[0].mxu0
        %v4090 = vadd.f32 %v890, %v4089
        %v4091 = vpop.f32.mrb[0].mxu0
        %v4092 = vadd.f32 %v886, %v4091
        %v4093 = vpop.f32.mrb[0].mxu0
        %v4094 = vadd.f32 %v890, %v4093
        %4095 = vmatprep.mubr.bf16.mxu0 %v1304
        %4096 = vmatmul.mubr.bf16.gmra.mrb[0].mxu0 %v1303
        %v4097 = vpop.f32.mrb[0].mxu0
        %v4098 = vadd.f32 %v886, %v4097
        %v4099 = vpop.f32.mrb[0].mxu0
        %v4100 = vadd.f32 %v890, %v4099
        %v4101 = vpop.f32.mrb[0].mxu0
        %v4102 = vadd.f32 %v886, %v4101
        %v4103 = vpop.f32.mrb[0].mxu0
        %v4104 = vadd.f32 %v890, %v4103
        %4105 = vmatprep.mubr.bf16.mxu0 %v1320
        %4106 = vmatmul.mubr.bf16.gmra.mrb[0].mxu0 %v1319
        %v4107 = vpop.f32.mrb[0].mxu0
        %v4108 = vadd.f32 %v886, %v4107
        %v4109 = vpop.f32.mrb[0].mxu0
        %v4110 = vadd.f32 %v890, %v4109
        %v4111 = vpop.f32.mrb[0].mxu0
        %v4112 = vadd.f32 %v886, %v4111
        %v4113 = vpop.f32.mrb[0].mxu0
        %v4114 = vadd.f32 %v890, %v4113
        %4115 = vmatprep.mubr.bf16.mxu0 %v1336
        %4116 = vmatmul.mubr.bf16.gmra.mrb[0].mxu0 %v1335
        %v4117 = vpop.f32.mrb[0].mxu0
        %v4118 = vadd.f32 %v886, %v4117
        %v4119 = vpop.f32.mrb[0].mxu0
        %v4120 = vadd.f32 %v890, %v4119
        %v4121 = vpop.f32.mrb[0].mxu0
        %v4122 = vadd.f32 %v886, %v4121
        %v4123 = vpop.f32.mrb[0].mxu0
        %v4124 = vadd.f32 %v890, %v4123
        %4125 = vdwg.mxu0
        %4126 = vmatprep.subr.bf16.mxu0 %v3064
        %4127 = vmatpush1.bf16.msra.mxu0 %v3063
        %4128 = vmatprep.subr.bf16.mxu0 %v3068
        %4129 = vmatpush1.bf16.msra.mxu0 %v3067
        %4130 = vmatprep.subr.bf16.mxu0 %v3072
        %4131 = vmatpush1.bf16.msra.mxu0 %v3071
        %4132 = vmatprep.subr.bf16.mxu0 %v3076
        %4133 = vmatpush1.bf16.msra.mxu0 %v3075
        %4134 = vmatprep.subr.bf16.mxu0 %v3080
        %4135 = vmatpush1.bf16.msra.mxu0 %v3079
        %4136 = vmatprep.subr.bf16.mxu0 %v3084
        %4137 = vmatpush1.bf16.msra.mxu0 %v3083
        %4138 = vmatprep.subr.bf16.mxu0 %v3088
        %4139 = vmatpush1.bf16.msra.mxu0 %v3087
        %4140 = vmatprep.subr.bf16.mxu0 %v3092
        %4141 = vmatpush1.bf16.msra.mxu0 %v3091
        %4142 = vmatprep.subr.bf16.mxu0 %v3096
        %4143 = vmatpush1.bf16.msra.mxu0 %v3095
        %4144 = vmatprep.subr.bf16.mxu0 %v3100
        %4145 = vmatpush1.bf16.msra.mxu0 %v3099
        %4146 = vmatprep.subr.bf16.mxu0 %v3104
        %4147 = vmatpush1.bf16.msra.mxu0 %v3103
        %4148 = vmatprep.subr.bf16.mxu0 %v3108
        %4149 = vmatpush1.bf16.msra.mxu0 %v3107
        %4150 = vmatprep.subr.bf16.mxu0 %v3112
        %4151 = vmatpush1.bf16.msra.mxu0 %v3111
        %4152 = vmatprep.subr.bf16.mxu0 %v3116
        %4153 = vmatpush1.bf16.msra.mxu0 %v3115
        %4154 = vmatprep.subr.bf16.mxu0 %v3120
        %4155 = vmatpush1.bf16.msra.mxu0 %v3119
        %4156 = vmatprep.subr.bf16.mxu0 %v3124
        %4157 = vmatpush1.bf16.msra.mxu0 %v3123
        %4158 = vmatprep.mubr.bf16.mxu0 %v1242
        %4159 = vmatmul.mubr.bf16.gmra.mrb[0].mxu0 %v1241
        %v4160 = vpop.f32.mrb[0].mxu0
        %v4161 = vadd.f32 %v4058, %v4160
        %v4162 = vpop.f32.mrb[0].mxu0
        %v4163 = vadd.f32 %v4060, %v4162
        %v4164 = vpop.f32.mrb[0].mxu0
        %v4165 = vadd.f32 %v4062, %v4164
        %v4166 = vpop.f32.mrb[0].mxu0
        %v4167 = vadd.f32 %v4064, %v4166
        %4168 = vmatprep.mubr.bf16.mxu0 %v1258
        %4169 = vmatmul.mubr.bf16.gmra.mrb[0].mxu0 %v1257
        %v4170 = vpop.f32.mrb[0].mxu0
        %v4171 = vadd.f32 %v4068, %v4170
        %v4172 = vpop.f32.mrb[0].mxu0
        %v4173 = vadd.f32 %v4070, %v4172
        %v4174 = vpop.f32.mrb[0].mxu0
        %v4175 = vadd.f32 %v4072, %v4174
        %v4176 = vpop.f32.mrb[0].mxu0
        %v4177 = vadd.f32 %v4074, %v4176
        %4178 = vmatprep.mubr.bf16.mxu0 %v1274
        %4179 = vmatmul.mubr.bf16.gmra.mrb[0].mxu0 %v1273
        %v4180 = vpop.f32.mrb[0].mxu0
        %v4181 = vadd.f32 %v4078, %v4180
        %v4182 = vpop.f32.mrb[0].mxu0
        %v4183 = vadd.f32 %v4080, %v4182
        %v4184 = vpop.f32.mrb[0].mxu0
        %v4185 = vadd.f32 %v4082, %v4184
        %v4186 = vpop.f32.mrb[0].mxu0
        %v4187 = vadd.f32 %v4084, %v4186
        %4188 = vmatprep.mubr.bf16.mxu0 %v1290
        %4189 = vmatmul.mubr.bf16.gmra.mrb[0].mxu0 %v1289
        %v4190 = vpop.f32.mrb[0].mxu0
        %v4191 = vadd.f32 %v4088, %v4190
        %v4192 = vpop.f32.mrb[0].mxu0
        %v4193 = vadd.f32 %v4090, %v4192
        %v4194 = vpop.f32.mrb[0].mxu0
        %v4195 = vadd.f32 %v4092, %v4194
        %v4196 = vpop.f32.mrb[0].mxu0
        %v4197 = vadd.f32 %v4094, %v4196
        %4198 = vmatprep.mubr.bf16.mxu0 %v1306
        %4199 = vmatmul.mubr.bf16.gmra.mrb[0].mxu0 %v1305
        %v4200 = vpop.f32.mrb[0].mxu0
        %v4201 = vadd.f32 %v4098, %v4200
        %v4202 = vpop.f32.mrb[0].mxu0
        %v4203 = vadd.f32 %v4100, %v4202
        %v4204 = vpop.f32.mrb[0].mxu0
        %v4205 = vadd.f32 %v4102, %v4204
        %v4206 = vpop.f32.mrb[0].mxu0
        %v4207 = vadd.f32 %v4104, %v4206
        %4208 = vmatprep.mubr.bf16.mxu0 %v1322
        %4209 = vmatmul.mubr.bf16.gmra.mrb[0].mxu0 %v1321
        %v4210 = vpop.f32.mrb[0].mxu0
        %v4211 = vadd.f32 %v4108, %v4210
        %v4212 = vpop.f32.mrb[0].mxu0
        %v4213 = vadd.f32 %v4110, %v4212
        %v4214 = vpop.f32.mrb[0].mxu0
        %v4215 = vadd.f32 %v4112, %v4214
        %v4216 = vpop.f32.mrb[0].mxu0
        %v4217 = vadd.f32 %v4114, %v4216
        %4218 = vmatprep.mubr.bf16.mxu0 %v1338
        %4219 = vmatmul.mubr.bf16.gmra.mrb[0].mxu0 %v1337
        %v4220 = vpop.f32.mrb[0].mxu0
        %v4221 = vadd.f32 %v4118, %v4220
        %v4222 = vpop.f32.mrb[0].mxu0
        %v4223 = vadd.f32 %v4120, %v4222
        %v4224 = vpop.f32.mrb[0].mxu0
        %v4225 = vadd.f32 %v4122, %v4224
        %v4226 = vpop.f32.mrb[0].mxu0
        %v4227 = vadd.f32 %v4124, %v4226
        %4228 = vdwg.mxu0
        %4229 = vmatprep.subr.bf16.mxu0 %v3128
        %4230 = vmatpush1.bf16.msra.mxu0 %v3127
        %4231 = vmatprep.subr.bf16.mxu0 %v3132
        %4232 = vmatpush1.bf16.msra.mxu0 %v3131
        %4233 = vmatprep.subr.bf16.mxu0 %v3136
        %4234 = vmatpush1.bf16.msra.mxu0 %v3135
        %4235 = vmatprep.subr.bf16.mxu0 %v3140
        %4236 = vmatpush1.bf16.msra.mxu0 %v3139
        %4237 = vmatprep.subr.bf16.mxu0 %v3144
        %4238 = vmatpush1.bf16.msra.mxu0 %v3143
        %4239 = vmatprep.subr.bf16.mxu0 %v3148
        %4240 = vmatpush1.bf16.msra.mxu0 %v3147
        %4241 = vmatprep.subr.bf16.mxu0 %v3152
        %4242 = vmatpush1.bf16.msra.mxu0 %v3151
        %4243 = vmatprep.subr.bf16.mxu0 %v3156
        %4244 = vmatpush1.bf16.msra.mxu0 %v3155
        %4245 = vmatprep.subr.bf16.mxu0 %v3160
        %4246 = vmatpush1.bf16.msra.mxu0 %v3159
        %4247 = vmatprep.subr.bf16.mxu0 %v3164
        %4248 = vmatpush1.bf16.msra.mxu0 %v3163
        %4249 = vmatprep.subr.bf16.mxu0 %v3168
        %4250 = vmatpush1.bf16.msra.mxu0 %v3167
        %4251 = vmatprep.subr.bf16.mxu0 %v3172
        %4252 = vmatpush1.bf16.msra.mxu0 %v3171
        %4253 = vmatprep.subr.bf16.mxu0 %v3176
        %4254 = vmatpush1.bf16.msra.mxu0 %v3175
        %4255 = vmatprep.subr.bf16.mxu0 %v3180
        %4256 = vmatpush1.bf16.msra.mxu0 %v3179
        %4257 = vmatprep.subr.bf16.mxu0 %v3184
        %4258 = vmatpush1.bf16.msra.mxu0 %v3183
        %4259 = vmatprep.subr.bf16.mxu0 %v3188
        %4260 = vmatpush1.bf16.msra.mxu0 %v3187
        %4261 = vmatprep.mubr.bf16.mxu0 %v1244
        %4262 = vmatmul.mubr.bf16.gmra.mrb[0].mxu0 %v1243
        %v4263 = vpop.f32.mrb[0].mxu0
        %v4264 = vadd.f32 %v4161, %v4263
        %v4265 = vpop.f32.mrb[0].mxu0
        %v4266 = vadd.f32 %v4163, %v4265
        %v4267 = vpop.f32.mrb[0].mxu0
        %v4268 = vadd.f32 %v4165, %v4267
        %v4269 = vpop.f32.mrb[0].mxu0
        %v4270 = vadd.f32 %v4167, %v4269
        %4271 = vmatprep.mubr.bf16.mxu0 %v1260
        %4272 = vmatmul.mubr.bf16.gmra.mrb[0].mxu0 %v1259
        %v4273 = vpop.f32.mrb[0].mxu0
        %v4274 = vadd.f32 %v4171, %v4273
        %v4275 = vpop.f32.mrb[0].mxu0
        %v4276 = vadd.f32 %v4173, %v4275
        %v4277 = vpop.f32.mrb[0].mxu0
        %v4278 = vadd.f32 %v4175, %v4277
        %v4279 = vpop.f32.mrb[0].mxu0
        %v4280 = vadd.f32 %v4177, %v4279
        %4281 = vmatprep.mubr.bf16.mxu0 %v1276
        %4282 = vmatmul.mubr.bf16.gmra.mrb[0].mxu0 %v1275
        %v4283 = vpop.f32.mrb[0].mxu0
        %v4284 = vadd.f32 %v4181, %v4283
        %v4285 = vpop.f32.mrb[0].mxu0
        %v4286 = vadd.f32 %v4183, %v4285
        %v4287 = vpop.f32.mrb[0].mxu0
        %v4288 = vadd.f32 %v4185, %v4287
        %v4289 = vpop.f32.mrb[0].mxu0
        %v4290 = vadd.f32 %v4187, %v4289
        %4291 = vmatprep.mubr.bf16.mxu0 %v1292
        %4292 = vmatmul.mubr.bf16.gmra.mrb[0].mxu0 %v1291
        %v4293 = vpop.f32.mrb[0].mxu0
        %v4294 = vadd.f32 %v4191, %v4293
        %v4295 = vpop.f32.mrb[0].mxu0
        %v4296 = vadd.f32 %v4193, %v4295
        %v4297 = vpop.f32.mrb[0].mxu0
        %v4298 = vadd.f32 %v4195, %v4297
        %v4299 = vpop.f32.mrb[0].mxu0
        %v4300 = vadd.f32 %v4197, %v4299
        %4301 = vmatprep.mubr.bf16.mxu0 %v1308
        %4302 = vmatmul.mubr.bf16.gmra.mrb[0].mxu0 %v1307
        %v4303 = vpop.f32.mrb[0].mxu0
        %v4304 = vadd.f32 %v4201, %v4303
        %v4305 = vpop.f32.mrb[0].mxu0
        %v4306 = vadd.f32 %v4203, %v4305
        %v4307 = vpop.f32.mrb[0].mxu0
        %v4308 = vadd.f32 %v4205, %v4307
        %v4309 = vpop.f32.mrb[0].mxu0
        %v4310 = vadd.f32 %v4207, %v4309
        %4311 = vmatprep.mubr.bf16.mxu0 %v1324
        %4312 = vmatmul.mubr.bf16.gmra.mrb[0].mxu0 %v1323
        %v4313 = vpop.f32.mrb[0].mxu0
        %v4314 = vadd.f32 %v4211, %v4313
        %v4315 = vpop.f32.mrb[0].mxu0
        %v4316 = vadd.f32 %v4213, %v4315
        %v4317 = vpop.f32.mrb[0].mxu0
        %v4318 = vadd.f32 %v4215, %v4317
        %v4319 = vpop.f32.mrb[0].mxu0
        %v4320 = vadd.f32 %v4217, %v4319
        %4321 = vmatprep.mubr.bf16.mxu0 %v1340
        %4322 = vmatmul.mubr.bf16.gmra.mrb[0].mxu0 %v1339
        %v4323 = vpop.f32.mrb[0].mxu0
        %v4324 = vadd.f32 %v4221, %v4323
        %v4325 = vpop.f32.mrb[0].mxu0
        %v4326 = vadd.f32 %v4223, %v4325
        %v4327 = vpop.f32.mrb[0].mxu0
        %v4328 = vadd.f32 %v4225, %v4327
        %v4329 = vpop.f32.mrb[0].mxu0
        %v4330 = vadd.f32 %v4227, %v4329
        %4331 = vdwg.mxu0
        %4332 = vmatprep.subr.bf16.mxu0 %v3192
        %4333 = vmatpush1.bf16.msra.mxu0 %v3191
        %4334 = vmatprep.subr.bf16.mxu0 %v3196
        %4335 = vmatpush1.bf16.msra.mxu0 %v3195
        %4336 = vmatprep.subr.bf16.mxu0 %v3200
        %4337 = vmatpush1.bf16.msra.mxu0 %v3199
        %4338 = vmatprep.subr.bf16.mxu0 %v3204
        %4339 = vmatpush1.bf16.msra.mxu0 %v3203
        %4340 = vmatprep.subr.bf16.mxu0 %v3208
        %4341 = vmatpush1.bf16.msra.mxu0 %v3207
        %4342 = vmatprep.subr.bf16.mxu0 %v3212
        %4343 = vmatpush1.bf16.msra.mxu0 %v3211
        %4344 = vmatprep.subr.bf16.mxu0 %v3216
        %4345 = vmatpush1.bf16.msra.mxu0 %v3215
        %4346 = vmatprep.subr.bf16.mxu0 %v3220
        %4347 = vmatpush1.bf16.msra.mxu0 %v3219
        %4348 = vmatprep.subr.bf16.mxu0 %v3224
        %4349 = vmatpush1.bf16.msra.mxu0 %v3223
        %4350 = vmatprep.subr.bf16.mxu0 %v3228
        %4351 = vmatpush1.bf16.msra.mxu0 %v3227
        %4352 = vmatprep.subr.bf16.mxu0 %v3232
        %4353 = vmatpush1.bf16.msra.mxu0 %v3231
        %4354 = vmatprep.subr.bf16.mxu0 %v3236
        %4355 = vmatpush1.bf16.msra.mxu0 %v3235
        %4356 = vmatprep.subr.bf16.mxu0 %v3240
        %4357 = vmatpush1.bf16.msra.mxu0 %v3239
        %4358 = vmatprep.subr.bf16.mxu0 %v3244
        %4359 = vmatpush1.bf16.msra.mxu0 %v3243
        %4360 = vmatprep.subr.bf16.mxu0 %v3248
        %4361 = vmatpush1.bf16.msra.mxu0 %v3247
        %4362 = vmatprep.subr.bf16.mxu0 %v3252
        %4363 = vmatpush1.bf16.msra.mxu0 %v3251
        %4364 = vmatprep.mubr.bf16.mxu0 %v1246
        %4365 = vmatmul.mubr.bf16.gmra.mrb[0].mxu0 %v1245
        %v4366 = vpop.f32.mrb[0].mxu0
        %v4367 = vadd.f32 %v4264, %v4366
        %v4368 = vpop.f32.mrb[0].mxu0
        %v4369 = vadd.f32 %v4266, %v4368
        %v4370 = vpop.f32.mrb[0].mxu0
        %v4371 = vadd.f32 %v4268, %v4370
        %v4372 = vpop.f32.mrb[0].mxu0
        %v4373 = vadd.f32 %v4270, %v4372
        %4374 = vmatprep.mubr.bf16.mxu0 %v1262
        %4375 = vmatmul.mubr.bf16.gmra.mrb[0].mxu0 %v1261
        %v4376 = vpop.f32.mrb[0].mxu0
        %v4377 = vadd.f32 %v4274, %v4376
        %v4378 = vpop.f32.mrb[0].mxu0
        %v4379 = vadd.f32 %v4276, %v4378
        %v4380 = vpop.f32.mrb[0].mxu0
        %v4381 = vadd.f32 %v4278, %v4380
        %v4382 = vpop.f32.mrb[0].mxu0
        %v4383 = vadd.f32 %v4280, %v4382
        %4384 = vmatprep.mubr.bf16.mxu0 %v1278
        %4385 = vmatmul.mubr.bf16.gmra.mrb[0].mxu0 %v1277
        %v4386 = vpop.f32.mrb[0].mxu0
        %v4387 = vadd.f32 %v4284, %v4386
        %v4388 = vpop.f32.mrb[0].mxu0
        %v4389 = vadd.f32 %v4286, %v4388
        %v4390 = vpop.f32.mrb[0].mxu0
        %v4391 = vadd.f32 %v4288, %v4390
        %v4392 = vpop.f32.mrb[0].mxu0
        %v4393 = vadd.f32 %v4290, %v4392
        %4394 = vmatprep.mubr.bf16.mxu0 %v1294
        %4395 = vmatmul.mubr.bf16.gmra.mrb[0].mxu0 %v1293
        %v4396 = vpop.f32.mrb[0].mxu0
        %v4397 = vadd.f32 %v4294, %v4396
        %v4398 = vpop.f32.mrb[0].mxu0
        %v4399 = vadd.f32 %v4296, %v4398
        %v4400 = vpop.f32.mrb[0].mxu0
        %v4401 = vadd.f32 %v4298, %v4400
        %v4402 = vpop.f32.mrb[0].mxu0
        %v4403 = vadd.f32 %v4300, %v4402
        %4404 = vmatprep.mubr.bf16.mxu0 %v1310
        %4405 = vmatmul.mubr.bf16.gmra.mrb[0].mxu0 %v1309
        %v4406 = vpop.f32.mrb[0].mxu0
        %v4407 = vadd.f32 %v4304, %v4406
        %v4408 = vpop.f32.mrb[0].mxu0
        %v4409 = vadd.f32 %v4306, %v4408
        %v4410 = vpop.f32.mrb[0].mxu0
        %v4411 = vadd.f32 %v4308, %v4410
        %v4412 = vpop.f32.mrb[0].mxu0
        %v4413 = vadd.f32 %v4310, %v4412
        %4414 = vmatprep.mubr.bf16.mxu0 %v1326
        %4415 = vmatmul.mubr.bf16.gmra.mrb[0].mxu0 %v1325
        %v4416 = vpop.f32.mrb[0].mxu0
        %v4417 = vadd.f32 %v4314, %v4416
        %v4418 = vpop.f32.mrb[0].mxu0
        %v4419 = vadd.f32 %v4316, %v4418
        %v4420 = vpop.f32.mrb[0].mxu0
        %v4421 = vadd.f32 %v4318, %v4420
        %v4422 = vpop.f32.mrb[0].mxu0
        %v4423 = vadd.f32 %v4320, %v4422
        %4424 = vmatprep.mubr.bf16.mxu0 %v1342
        %4425 = vmatmul.mubr.bf16.gmra.mrb[0].mxu0 %v1341
        %v4426 = vpop.f32.mrb[0].mxu0
        %v4427 = vadd.f32 %v4324, %v4426
        %v4428 = vpop.f32.mrb[0].mxu0
        %v4429 = vadd.f32 %v4326, %v4428
        %v4430 = vpop.f32.mrb[0].mxu0
        %v4431 = vadd.f32 %v4328, %v4430
        %v4432 = vpop.f32.mrb[0].mxu0
        %v4433 = vadd.f32 %v4330, %v4432
        %4434 = vdwg.mxu0
        %4435 = vmatprep.subr.bf16.mxu0 %v3256
        %4436 = vmatpush1.bf16.msra.mxu0 %v3255
        %4437 = vmatprep.subr.bf16.mxu0 %v3260
        %4438 = vmatpush1.bf16.msra.mxu0 %v3259
        %4439 = vmatprep.subr.bf16.mxu0 %v3264
        %4440 = vmatpush1.bf16.msra.mxu0 %v3263
        %4441 = vmatprep.subr.bf16.mxu0 %v3268
        %4442 = vmatpush1.bf16.msra.mxu0 %v3267
        %4443 = vmatprep.subr.bf16.mxu0 %v3272
        %4444 = vmatpush1.bf16.msra.mxu0 %v3271
        %4445 = vmatprep.subr.bf16.mxu0 %v3276
        %4446 = vmatpush1.bf16.msra.mxu0 %v3275
        %4447 = vmatprep.subr.bf16.mxu0 %v3280
        %4448 = vmatpush1.bf16.msra.mxu0 %v3279
        %4449 = vmatprep.subr.bf16.mxu0 %v3284
        %4450 = vmatpush1.bf16.msra.mxu0 %v3283
        %4451 = vmatprep.subr.bf16.mxu0 %v3288
        %4452 = vmatpush1.bf16.msra.mxu0 %v3287
        %4453 = vmatprep.subr.bf16.mxu0 %v3292
        %4454 = vmatpush1.bf16.msra.mxu0 %v3291
        %4455 = vmatprep.subr.bf16.mxu0 %v3296
        %4456 = vmatpush1.bf16.msra.mxu0 %v3295
        %4457 = vmatprep.subr.bf16.mxu0 %v3300
        %4458 = vmatpush1.bf16.msra.mxu0 %v3299
        %4459 = vmatprep.subr.bf16.mxu0 %v3304
        %4460 = vmatpush1.bf16.msra.mxu0 %v3303
        %4461 = vmatprep.subr.bf16.mxu0 %v3308
        %4462 = vmatpush1.bf16.msra.mxu0 %v3307
        %4463 = vmatprep.subr.bf16.mxu0 %v3312
        %4464 = vmatpush1.bf16.msra.mxu0 %v3311
        %4465 = vmatprep.subr.bf16.mxu0 %v3316
        %4466 = vmatpush1.bf16.msra.mxu0 %v3315
        %4467 = vmatprep.mubr.bf16.mxu0 %v1248
        %4468 = vmatmul.mubr.bf16.gmra.mrb[0].mxu0 %v1247
        %v4469 = vpop.f32.mrb[0].mxu0
        %v4470 = vadd.f32 %v4367, %v4469
        %v4471 = vpop.f32.mrb[0].mxu0
        %v4472 = vadd.f32 %v4369, %v4471
        %v4473 = vpop.f32.mrb[0].mxu0
        %v4474 = vadd.f32 %v4371, %v4473
        %v4475 = vpop.f32.mrb[0].mxu0
        %v4476 = vadd.f32 %v4373, %v4475
        %4477 = vmatprep.mubr.bf16.mxu0 %v1264
        %4478 = vmatmul.mubr.bf16.gmra.mrb[0].mxu0 %v1263
        %v4479 = vpop.f32.mrb[0].mxu0
        %v4480 = vadd.f32 %v4377, %v4479
        %v4481 = vpop.f32.mrb[0].mxu0
        %v4482 = vadd.f32 %v4379, %v4481
        %v4483 = vpop.f32.mrb[0].mxu0
        %v4484 = vadd.f32 %v4381, %v4483
        %v4485 = vpop.f32.mrb[0].mxu0
        %v4486 = vadd.f32 %v4383, %v4485
        %4487 = vmatprep.mubr.bf16.mxu0 %v1280
        %4488 = vmatmul.mubr.bf16.gmra.mrb[0].mxu0 %v1279
        %v4489 = vpop.f32.mrb[0].mxu0
        %v4490 = vadd.f32 %v4387, %v4489
        %v4491 = vpop.f32.mrb[0].mxu0
        %v4492 = vadd.f32 %v4389, %v4491
        %v4493 = vpop.f32.mrb[0].mxu0
        %v4494 = vadd.f32 %v4391, %v4493
        %v4495 = vpop.f32.mrb[0].mxu0
        %v4496 = vadd.f32 %v4393, %v4495
        %4497 = vmatprep.mubr.bf16.mxu0 %v1296
        %4498 = vmatmul.mubr.bf16.gmra.mrb[0].mxu0 %v1295
        %v4499 = vpop.f32.mrb[0].mxu0
        %v4500 = vadd.f32 %v4397, %v4499
        %v4501 = vpop.f32.mrb[0].mxu0
        %v4502 = vadd.f32 %v4399, %v4501
        %v4503 = vpop.f32.mrb[0].mxu0
        %v4504 = vadd.f32 %v4401, %v4503
        %v4505 = vpop.f32.mrb[0].mxu0
        %v4506 = vadd.f32 %v4403, %v4505
        %4507 = vmatprep.mubr.bf16.mxu0 %v1312
        %4508 = vmatmul.mubr.bf16.gmra.mrb[0].mxu0 %v1311
        %v4509 = vpop.f32.mrb[0].mxu0
        %v4510 = vadd.f32 %v4407, %v4509
        %v4511 = vpop.f32.mrb[0].mxu0
        %v4512 = vadd.f32 %v4409, %v4511
        %v4513 = vpop.f32.mrb[0].mxu0
        %v4514 = vadd.f32 %v4411, %v4513
        %v4515 = vpop.f32.mrb[0].mxu0
        %v4516 = vadd.f32 %v4413, %v4515
        %4517 = vmatprep.mubr.bf16.mxu0 %v1328
        %4518 = vmatmul.mubr.bf16.gmra.mrb[0].mxu0 %v1327
        %v4519 = vpop.f32.mrb[0].mxu0
        %v4520 = vadd.f32 %v4417, %v4519
        %v4521 = vpop.f32.mrb[0].mxu0
        %v4522 = vadd.f32 %v4419, %v4521
        %v4523 = vpop.f32.mrb[0].mxu0
        %v4524 = vadd.f32 %v4421, %v4523
        %v4525 = vpop.f32.mrb[0].mxu0
        %v4526 = vadd.f32 %v4423, %v4525
        %4527 = vmatprep.mubr.bf16.mxu0 %v1344
        %4528 = vmatmul.mubr.bf16.gmra.mrb[0].mxu0 %v1343
        %v4529 = vpop.f32.mrb[0].mxu0
        %v4530 = vadd.f32 %v4427, %v4529
        %v4531 = vpop.f32.mrb[0].mxu0
        %v4532 = vadd.f32 %v4429, %v4531
        %v4533 = vpop.f32.mrb[0].mxu0
        %v4534 = vadd.f32 %v4431, %v4533
        %v4535 = vpop.f32.mrb[0].mxu0
        %v4536 = vadd.f32 %v4433, %v4535
        %4537 = vdwg.mxu0
        %4538 = vmatprep.subr.bf16.mxu0 %v3320
        %4539 = vmatpush1.bf16.msra.mxu0 %v3319
        %4540 = vmatprep.subr.bf16.mxu0 %v3324
        %4541 = vmatpush1.bf16.msra.mxu0 %v3323
        %4542 = vmatprep.subr.bf16.mxu0 %v3328
        %4543 = vmatpush1.bf16.msra.mxu0 %v3327
        %4544 = vmatprep.subr.bf16.mxu0 %v3332
        %4545 = vmatpush1.bf16.msra.mxu0 %v3331
        %4546 = vmatprep.subr.bf16.mxu0 %v3336
        %4547 = vmatpush1.bf16.msra.mxu0 %v3335
        %4548 = vmatprep.subr.bf16.mxu0 %v3340
        %4549 = vmatpush1.bf16.msra.mxu0 %v3339
        %4550 = vmatprep.subr.bf16.mxu0 %v3344
        %4551 = vmatpush1.bf16.msra.mxu0 %v3343
        %4552 = vmatprep.subr.bf16.mxu0 %v3348
        %4553 = vmatpush1.bf16.msra.mxu0 %v3347
        %4554 = vmatprep.subr.bf16.mxu0 %v3352
        %4555 = vmatpush1.bf16.msra.mxu0 %v3351
        %4556 = vmatprep.subr.bf16.mxu0 %v3356
        %4557 = vmatpush1.bf16.msra.mxu0 %v3355
        %4558 = vmatprep.subr.bf16.mxu0 %v3360
        %4559 = vmatpush1.bf16.msra.mxu0 %v3359
        %4560 = vmatprep.subr.bf16.mxu0 %v3364
        %4561 = vmatpush1.bf16.msra.mxu0 %v3363
        %4562 = vmatprep.subr.bf16.mxu0 %v3368
        %4563 = vmatpush1.bf16.msra.mxu0 %v3367
        %4564 = vmatprep.subr.bf16.mxu0 %v3372
        %4565 = vmatpush1.bf16.msra.mxu0 %v3371
        %4566 = vmatprep.subr.bf16.mxu0 %v3376
        %4567 = vmatpush1.bf16.msra.mxu0 %v3375
        %4568 = vmatprep.subr.bf16.mxu0 %v3380
        %4569 = vmatpush1.bf16.msra.mxu0 %v3379
        %4570 = vmatprep.mubr.bf16.mxu0 %v1250
        %4571 = vmatmul.mubr.bf16.gmra.mrb[0].mxu0 %v1249
        %v4572 = vpop.f32.mrb[0].mxu0
        %v4573 = vadd.f32 %v4470, %v4572
        %v4574 = vpop.f32.mrb[0].mxu0
        %v4575 = vadd.f32 %v4472, %v4574
        %v4576 = vpop.f32.mrb[0].mxu0
        %v4577 = vadd.f32 %v4474, %v4576
        %v4578 = vpop.f32.mrb[0].mxu0
        %v4579 = vadd.f32 %v4476, %v4578
        %4580 = vmatprep.mubr.bf16.mxu0 %v1266
        %4581 = vmatmul.mubr.bf16.gmra.mrb[0].mxu0 %v1265
        %v4582 = vpop.f32.mrb[0].mxu0
        %v4583 = vadd.f32 %v4480, %v4582
        %v4584 = vpop.f32.mrb[0].mxu0
        %v4585 = vadd.f32 %v4482, %v4584
        %v4586 = vpop.f32.mrb[0].mxu0
        %v4587 = vadd.f32 %v4484, %v4586
        %v4588 = vpop.f32.mrb[0].mxu0
        %v4589 = vadd.f32 %v4486, %v4588
        %4590 = vmatprep.mubr.bf16.mxu0 %v1282
        %4591 = vmatmul.mubr.bf16.gmra.mrb[0].mxu0 %v1281
        %v4592 = vpop.f32.mrb[0].mxu0
        %v4593 = vadd.f32 %v4490, %v4592
        %v4594 = vpop.f32.mrb[0].mxu0
        %v4595 = vadd.f32 %v4492, %v4594
        %v4596 = vpop.f32.mrb[0].mxu0
        %v4597 = vadd.f32 %v4494, %v4596
        %v4598 = vpop.f32.mrb[0].mxu0
        %v4599 = vadd.f32 %v4496, %v4598
        %4600 = vmatprep.mubr.bf16.mxu0 %v1298
        %4601 = vmatmul.mubr.bf16.gmra.mrb[0].mxu0 %v1297
        %v4602 = vpop.f32.mrb[0].mxu0
        %v4603 = vadd.f32 %v4500, %v4602
        %v4604 = vpop.f32.mrb[0].mxu0
        %v4605 = vadd.f32 %v4502, %v4604
        %v4606 = vpop.f32.mrb[0].mxu0
        %v4607 = vadd.f32 %v4504, %v4606
        %v4608 = vpop.f32.mrb[0].mxu0
        %v4609 = vadd.f32 %v4506, %v4608
        %4610 = vmatprep.mubr.bf16.mxu0 %v1314
        %4611 = vmatmul.mubr.bf16.gmra.mrb[0].mxu0 %v1313
        %v4612 = vpop.f32.mrb[0].mxu0
        %v4613 = vadd.f32 %v4510, %v4612
        %v4614 = vpop.f32.mrb[0].mxu0
        %v4615 = vadd.f32 %v4512, %v4614
        %v4616 = vpop.f32.mrb[0].mxu0
        %v4617 = vadd.f32 %v4514, %v4616
        %v4618 = vpop.f32.mrb[0].mxu0
        %v4619 = vadd.f32 %v4516, %v4618
        %4620 = vmatprep.mubr.bf16.mxu0 %v1330
        %4621 = vmatmul.mubr.bf16.gmra.mrb[0].mxu0 %v1329
        %v4622 = vpop.f32.mrb[0].mxu0
        %v4623 = vadd.f32 %v4520, %v4622
        %v4624 = vpop.f32.mrb[0].mxu0
        %v4625 = vadd.f32 %v4522, %v4624
        %v4626 = vpop.f32.mrb[0].mxu0
        %v4627 = vadd.f32 %v4524, %v4626
        %v4628 = vpop.f32.mrb[0].mxu0
        %v4629 = vadd.f32 %v4526, %v4628
        %4630 = vmatprep.mubr.bf16.mxu0 %v1346
        %4631 = vmatmul.mubr.bf16.gmra.mrb[0].mxu0 %v1345
        %v4632 = vpop.f32.mrb[0].mxu0
        %v4633 = vadd.f32 %v4530, %v4632
        %v4634 = vpop.f32.mrb[0].mxu0
        %v4635 = vadd.f32 %v4532, %v4634
        %v4636 = vpop.f32.mrb[0].mxu0
        %v4637 = vadd.f32 %v4534, %v4636
        %v4638 = vpop.f32.mrb[0].mxu0
        %v4639 = vadd.f32 %v4536, %v4638
        %4640 = vdwg.mxu0
        %4641 = vmatprep.subr.bf16.mxu0 %v3384
        %4642 = vmatpush1.bf16.msra.mxu0 %v3383
        %4643 = vmatprep.subr.bf16.mxu0 %v3388
        %4644 = vmatpush1.bf16.msra.mxu0 %v3387
        %4645 = vmatprep.subr.bf16.mxu0 %v3392
        %4646 = vmatpush1.bf16.msra.mxu0 %v3391
        %4647 = vmatprep.subr.bf16.mxu0 %v3396
        %4648 = vmatpush1.bf16.msra.mxu0 %v3395
        %4649 = vmatprep.subr.bf16.mxu0 %v3400
        %4650 = vmatpush1.bf16.msra.mxu0 %v3399
        %4651 = vmatprep.subr.bf16.mxu0 %v3404
        %4652 = vmatpush1.bf16.msra.mxu0 %v3403
        %4653 = vmatprep.subr.bf16.mxu0 %v3408
        %4654 = vmatpush1.bf16.msra.mxu0 %v3407
        %4655 = vmatprep.subr.bf16.mxu0 %v3412
        %4656 = vmatpush1.bf16.msra.mxu0 %v3411
        %4657 = vmatprep.subr.bf16.mxu0 %v3416
        %4658 = vmatpush1.bf16.msra.mxu0 %v3415
        %4659 = vmatprep.subr.bf16.mxu0 %v3420
        %4660 = vmatpush1.bf16.msra.mxu0 %v3419
        %4661 = vmatprep.subr.bf16.mxu0 %v3424
        %4662 = vmatpush1.bf16.msra.mxu0 %v3423
        %4663 = vmatprep.subr.bf16.mxu0 %v3428
        %4664 = vmatpush1.bf16.msra.mxu0 %v3427
        %4665 = vmatprep.subr.bf16.mxu0 %v3432
        %4666 = vmatpush1.bf16.msra.mxu0 %v3431
        %4667 = vmatprep.subr.bf16.mxu0 %v3436
        %4668 = vmatpush1.bf16.msra.mxu0 %v3435
        %4669 = vmatprep.subr.bf16.mxu0 %v3440
        %4670 = vmatpush1.bf16.msra.mxu0 %v3439
        %4671 = vmatprep.subr.bf16.mxu0 %v3444
        %4672 = vmatpush1.bf16.msra.mxu0 %v3443
        %4673 = vmatprep.mubr.bf16.mxu0 %v1252
        %4674 = vmatmul.mubr.bf16.gmra.mrb[0].mxu0 %v1251
        %v4675 = vpop.f32.mrb[0].mxu0
        %v4676 = vadd.f32 %v4573, %v4675
        %v4677 = vpop.f32.mrb[0].mxu0
        %v4678 = vadd.f32 %v4575, %v4677
        %v4679 = vpop.f32.mrb[0].mxu0
        %v4680 = vadd.f32 %v4577, %v4679
        %v4681 = vpop.f32.mrb[0].mxu0
        %v4682 = vadd.f32 %v4579, %v4681
        %4683 = vmatprep.mubr.bf16.mxu0 %v1268
        %4684 = vmatmul.mubr.bf16.gmra.mrb[0].mxu0 %v1267
        %v4685 = vpop.f32.mrb[0].mxu0
        %v4686 = vadd.f32 %v4583, %v4685
        %v4687 = vpop.f32.mrb[0].mxu0
        %v4688 = vadd.f32 %v4585, %v4687
        %v4689 = vpop.f32.mrb[0].mxu0
        %v4690 = vadd.f32 %v4587, %v4689
        %v4691 = vpop.f32.mrb[0].mxu0
        %v4692 = vadd.f32 %v4589, %v4691
        %4693 = vmatprep.mubr.bf16.mxu0 %v1284
        %4694 = vmatmul.mubr.bf16.gmra.mrb[0].mxu0 %v1283
        %v4695 = vpop.f32.mrb[0].mxu0
        %v4696 = vadd.f32 %v4593, %v4695
        %v4697 = vpop.f32.mrb[0].mxu0
        %v4698 = vadd.f32 %v4595, %v4697
        %v4699 = vpop.f32.mrb[0].mxu0
        %v4700 = vadd.f32 %v4597, %v4699
        %v4701 = vpop.f32.mrb[0].mxu0
        %v4702 = vadd.f32 %v4599, %v4701
        %4703 = vmatprep.mubr.bf16.mxu0 %v1300
        %4704 = vmatmul.mubr.bf16.gmra.mrb[0].mxu0 %v1299
        %v4705 = vpop.f32.mrb[0].mxu0
        %v4706 = vadd.f32 %v4603, %v4705
        %v4707 = vpop.f32.mrb[0].mxu0
        %v4708 = vadd.f32 %v4605, %v4707
        %v4709 = vpop.f32.mrb[0].mxu0
        %v4710 = vadd.f32 %v4607, %v4709
        %v4711 = vpop.f32.mrb[0].mxu0
        %v4712 = vadd.f32 %v4609, %v4711
        %4713 = vmatprep.mubr.bf16.mxu0 %v1316
        %4714 = vmatmul.mubr.bf16.gmra.mrb[0].mxu0 %v1315
        %v4715 = vpop.f32.mrb[0].mxu0
        %v4716 = vadd.f32 %v4613, %v4715
        %v4717 = vpop.f32.mrb[0].mxu0
        %v4718 = vadd.f32 %v4615, %v4717
        %v4719 = vpop.f32.mrb[0].mxu0
        %v4720 = vadd.f32 %v4617, %v4719
        %v4721 = vpop.f32.mrb[0].mxu0
        %v4722 = vadd.f32 %v4619, %v4721
        %4723 = vmatprep.mubr.bf16.mxu0 %v1332
        %4724 = vmatmul.mubr.bf16.gmra.mrb[0].mxu0 %v1331
        %v4725 = vpop.f32.mrb[0].mxu0
        %v4726 = vadd.f32 %v4623, %v4725
        %v4727 = vpop.f32.mrb[0].mxu0
        %v4728 = vadd.f32 %v4625, %v4727
        %v4729 = vpop.f32.mrb[0].mxu0
        %v4730 = vadd.f32 %v4627, %v4729
        %v4731 = vpop.f32.mrb[0].mxu0
        %v4732 = vadd.f32 %v4629, %v4731
        %4733 = vmatprep.mubr.bf16.mxu0 %v1348
        %4734 = vmatmul.mubr.bf16.gmra.mrb[0].mxu0 %v1347
        %v4735 = vpop.f32.mrb[0].mxu0
        %v4736 = vadd.f32 %v4633, %v4735
        %v4737 = vpop.f32.mrb[0].mxu0
        %v4738 = vadd.f32 %v4635, %v4737
        %v4739 = vpop.f32.mrb[0].mxu0
        %v4740 = vadd.f32 %v4637, %v4739
        %v4741 = vpop.f32.mrb[0].mxu0
        %v4742 = vadd.f32 %v4639, %v4741
        %4743 = vdwg.mxu0
        %4744 = vmatprep.subr.bf16.mxu0 %v3448
        %4745 = vmatpush1.bf16.msra.mxu0 %v3447
        %4746 = vmatprep.subr.bf16.mxu0 %v3452
        %4747 = vmatpush1.bf16.msra.mxu0 %v3451
        %4748 = vmatprep.subr.bf16.mxu0 %v3456
        %4749 = vmatpush1.bf16.msra.mxu0 %v3455
        %4750 = vmatprep.subr.bf16.mxu0 %v3460
        %4751 = vmatpush1.bf16.msra.mxu0 %v3459
        %4752 = vmatprep.subr.bf16.mxu0 %v3464
        %4753 = vmatpush1.bf16.msra.mxu0 %v3463
        %4754 = vmatprep.subr.bf16.mxu0 %v3468
        %4755 = vmatpush1.bf16.msra.mxu0 %v3467
        %4756 = vmatprep.subr.bf16.mxu0 %v3472
        %4757 = vmatpush1.bf16.msra.mxu0 %v3471
        %4758 = vmatprep.subr.bf16.mxu0 %v3476
        %4759 = vmatpush1.bf16.msra.mxu0 %v3475
        %4760 = vmatprep.subr.bf16.mxu0 %v3480
        %4761 = vmatpush1.bf16.msra.mxu0 %v3479
        %4762 = vmatprep.subr.bf16.mxu0 %v3484
        %4763 = vmatpush1.bf16.msra.mxu0 %v3483
        %4764 = vmatprep.subr.bf16.mxu0 %v3488
        %4765 = vmatpush1.bf16.msra.mxu0 %v3487
        %4766 = vmatprep.subr.bf16.mxu0 %v3492
        %4767 = vmatpush1.bf16.msra.mxu0 %v3491
        %4768 = vmatprep.subr.bf16.mxu0 %v3496
        %4769 = vmatpush1.bf16.msra.mxu0 %v3495
        %4770 = vmatprep.subr.bf16.mxu0 %v3500
        %4771 = vmatpush1.bf16.msra.mxu0 %v3499
        %4772 = vmatprep.subr.bf16.mxu0 %v3504
        %4773 = vmatpush1.bf16.msra.mxu0 %v3503
        %4774 = vmatprep.subr.bf16.mxu0 %v3508
        %4775 = vmatpush1.bf16.msra.mxu0 %v3507
        %4776 = vmatprep.mubr.bf16.mxu0 %v1254
        %4777 = vmatmul.mubr.bf16.gmra.mrb[0].mxu0 %v1253
        %v4778 = vpop.f32.mrb[0].mxu0
        %v4779 = vadd.f32 %v4676, %v4778
        %v4780 = vpop.f32.mrb[0].mxu0
        %v4781 = vadd.f32 %v4678, %v4780
        %v4782 = vpop.f32.mrb[0].mxu0
        %v4783 = vadd.f32 %v4680, %v4782
        %v4784 = vpop.f32.mrb[0].mxu0
        %v4785 = vadd.f32 %v4682, %v4784
        %4786 = vmatprep.mubr.bf16.mxu0 %v1270
        %4787 = vmatmul.mubr.bf16.gmra.mrb[0].mxu0 %v1269
        %v4788 = vpop.f32.mrb[0].mxu0
        %v4789 = vadd.f32 %v4686, %v4788
        %v4790 = vpop.f32.mrb[0].mxu0
        %v4791 = vadd.f32 %v4688, %v4790
        %v4792 = vpop.f32.mrb[0].mxu0
        %v4793 = vadd.f32 %v4690, %v4792
        %v4794 = vpop.f32.mrb[0].mxu0
        %v4795 = vadd.f32 %v4692, %v4794
        %4796 = vmatprep.mubr.bf16.mxu0 %v1286
        %4797 = vmatmul.mubr.bf16.gmra.mrb[0].mxu0 %v1285
        %v4798 = vpop.f32.mrb[0].mxu0
        %v4799 = vadd.f32 %v4696, %v4798
        %v4800 = vpop.f32.mrb[0].mxu0
        %v4801 = vadd.f32 %v4698, %v4800
        %v4802 = vpop.f32.mrb[0].mxu0
        %v4803 = vadd.f32 %v4700, %v4802
        %v4804 = vpop.f32.mrb[0].mxu0
        %v4805 = vadd.f32 %v4702, %v4804
        %4806 = vmatprep.mubr.bf16.mxu0 %v1302
        %4807 = vmatmul.mubr.bf16.gmra.mrb[0].mxu0 %v1301
        %v4808 = vpop.f32.mrb[0].mxu0
        %v4809 = vadd.f32 %v4706, %v4808
        %v4810 = vpop.f32.mrb[0].mxu0
        %v4811 = vadd.f32 %v4708, %v4810
        %v4812 = vpop.f32.mrb[0].mxu0
        %v4813 = vadd.f32 %v4710, %v4812
        %v4814 = vpop.f32.mrb[0].mxu0
        %v4815 = vadd.f32 %v4712, %v4814
        %4816 = vmatprep.mubr.bf16.mxu0 %v1318
        %4817 = vmatmul.mubr.bf16.gmra.mrb[0].mxu0 %v1317
        %v4818 = vpop.f32.mrb[0].mxu0
        %v4819 = vadd.f32 %v4716, %v4818
        %v4820 = vpop.f32.mrb[0].mxu0
        %v4821 = vadd.f32 %v4718, %v4820
        %v4822 = vpop.f32.mrb[0].mxu0
        %v4823 = vadd.f32 %v4720, %v4822
        %v4824 = vpop.f32.mrb[0].mxu0
        %v4825 = vadd.f32 %v4722, %v4824
        %4826 = vmatprep.mubr.bf16.mxu0 %v1334
        %4827 = vmatmul.mubr.bf16.gmra.mrb[0].mxu0 %v1333
        %v4828 = vpop.f32.mrb[0].mxu0
        %v4829 = vadd.f32 %v4726, %v4828
        %v4830 = vpop.f32.mrb[0].mxu0
        %v4831 = vadd.f32 %v4728, %v4830
        %v4832 = vpop.f32.mrb[0].mxu0
        %v4833 = vadd.f32 %v4730, %v4832
        %v4834 = vpop.f32.mrb[0].mxu0
        %v4835 = vadd.f32 %v4732, %v4834
        %4836 = vmatprep.mubr.bf16.mxu0 %v1350
        %4837 = vmatmul.mubr.bf16.gmra.mrb[0].mxu0 %v1349
        %v4838 = vpop.f32.mrb[0].mxu0
        %v4839 = vadd.f32 %v4736, %v4838
        %v4840 = vpop.f32.mrb[0].mxu0
        %v4841 = vadd.f32 %v4738, %v4840
        %v4842 = vpop.f32.mrb[0].mxu0
        %v4843 = vadd.f32 %v4740, %v4842
        %v4844 = vpop.f32.mrb[0].mxu0
        %v4845 = vadd.f32 %v4742, %v4844
        %4846 = vdwg.mxu0
        %4847 = vmatprep.subr.bf16.mxu0 %v3002
        %4848 = vmatpush1.bf16.msra.mxu0 %v3001
        %4849 = vmatprep.subr.bf16.mxu0 %v3006
        %4850 = vmatpush1.bf16.msra.mxu0 %v3005
        %4851 = vmatprep.subr.bf16.mxu0 %v3010
        %4852 = vmatpush1.bf16.msra.mxu0 %v3009
        %4853 = vmatprep.subr.bf16.mxu0 %v3014
        %4854 = vmatpush1.bf16.msra.mxu0 %v3013
        %4855 = vmatprep.subr.bf16.mxu0 %v3018
        %4856 = vmatpush1.bf16.msra.mxu0 %v3017
        %4857 = vmatprep.subr.bf16.mxu0 %v3022
        %4858 = vmatpush1.bf16.msra.mxu0 %v3021
        %4859 = vmatprep.subr.bf16.mxu0 %v3026
        %4860 = vmatpush1.bf16.msra.mxu0 %v3025
        %4861 = vmatprep.subr.bf16.mxu0 %v3030
        %4862 = vmatpush1.bf16.msra.mxu0 %v3029
        %4863 = vmatprep.subr.bf16.mxu0 %v3034
        %4864 = vmatpush1.bf16.msra.mxu0 %v3033
        %4865 = vmatprep.subr.bf16.mxu0 %v3038
        %4866 = vmatpush1.bf16.msra.mxu0 %v3037
        %4867 = vmatprep.subr.bf16.mxu0 %v3042
        %4868 = vmatpush1.bf16.msra.mxu0 %v3041
        %4869 = vmatprep.subr.bf16.mxu0 %v3046
        %4870 = vmatpush1.bf16.msra.mxu0 %v3045
        %4871 = vmatprep.subr.bf16.mxu0 %v3050
        %4872 = vmatpush1.bf16.msra.mxu0 %v3049
        %4873 = vmatprep.subr.bf16.mxu0 %v3054
        %4874 = vmatpush1.bf16.msra.mxu0 %v3053
        %4875 = vmatprep.subr.bf16.mxu0 %v3058
        %4876 = vmatpush1.bf16.msra.mxu0 %v3057
        %4877 = vmatprep.subr.bf16.mxu0 %v3062
        %4878 = vmatpush1.bf16.msra.mxu0 %v3061
        %4879 = vmatprep.mubr.bf16.mxu0 %v1240
        %4880 = vmatmul.mubr.bf16.gmra.mrb[0].mxu0 %v1239
        %v4881 = vpop.f32.mrb[0].mxu0
        %v4882 = vadd.f32 %v894, %v4881
        %v4883 = vpop.f32.mrb[0].mxu0
        %v4884 = vadd.f32 %v898, %v4883
        %v4885 = vpop.f32.mrb[0].mxu0
        %v4886 = vadd.f32 %v894, %v4885
        %v4887 = vpop.f32.mrb[0].mxu0
        %v4888 = vadd.f32 %v898, %v4887
        %4889 = vmatprep.mubr.bf16.mxu0 %v1256
        %4890 = vmatmul.mubr.bf16.gmra.mrb[0].mxu0 %v1255
        %v4891 = vpop.f32.mrb[0].mxu0
        %v4892 = vadd.f32 %v894, %v4891
        %v4893 = vpop.f32.mrb[0].mxu0
        %v4894 = vadd.f32 %v898, %v4893
        %v4895 = vpop.f32.mrb[0].mxu0
        %v4896 = vadd.f32 %v894, %v4895
        %v4897 = vpop.f32.mrb[0].mxu0
        %v4898 = vadd.f32 %v898, %v4897
        %4899 = vmatprep.mubr.bf16.mxu0 %v1272
        %4900 = vmatmul.mubr.bf16.gmra.mrb[0].mxu0 %v1271
        %v4901 = vpop.f32.mrb[0].mxu0
        %v4902 = vadd.f32 %v894, %v4901
        %v4903 = vpop.f32.mrb[0].mxu0
        %v4904 = vadd.f32 %v898, %v4903
        %v4905 = vpop.f32.mrb[0].mxu0
        %v4906 = vadd.f32 %v894, %v4905
        %v4907 = vpop.f32.mrb[0].mxu0
        %v4908 = vadd.f32 %v898, %v4907
        %4909 = vmatprep.mubr.bf16.mxu0 %v1288
        %4910 = vmatmul.mubr.bf16.gmra.mrb[0].mxu0 %v1287
        %v4911 = vpop.f32.mrb[0].mxu0
        %v4912 = vadd.f32 %v894, %v4911
        %v4913 = vpop.f32.mrb[0].mxu0
        %v4914 = vadd.f32 %v898, %v4913
        %v4915 = vpop.f32.mrb[0].mxu0
        %v4916 = vadd.f32 %v894, %v4915
        %v4917 = vpop.f32.mrb[0].mxu0
        %v4918 = vadd.f32 %v898, %v4917
        %4919 = vmatprep.mubr.bf16.mxu0 %v1304
        %4920 = vmatmul.mubr.bf16.gmra.mrb[0].mxu0 %v1303
        %v4921 = vpop.f32.mrb[0].mxu0
        %v4922 = vadd.f32 %v894, %v4921
        %v4923 = vpop.f32.mrb[0].mxu0
        %v4924 = vadd.f32 %v898, %v4923
        %v4925 = vpop.f32.mrb[0].mxu0
        %v4926 = vadd.f32 %v894, %v4925
        %v4927 = vpop.f32.mrb[0].mxu0
        %v4928 = vadd.f32 %v898, %v4927
        %4929 = vmatprep.mubr.bf16.mxu0 %v1320
        %4930 = vmatmul.mubr.bf16.gmra.mrb[0].mxu0 %v1319
        %v4931 = vpop.f32.mrb[0].mxu0
        %v4932 = vadd.f32 %v894, %v4931
        %v4933 = vpop.f32.mrb[0].mxu0
        %v4934 = vadd.f32 %v898, %v4933
        %v4935 = vpop.f32.mrb[0].mxu0
        %v4936 = vadd.f32 %v894, %v4935
        %v4937 = vpop.f32.mrb[0].mxu0
        %v4938 = vadd.f32 %v898, %v4937
        %4939 = vmatprep.mubr.bf16.mxu0 %v1336
        %4940 = vmatmul.mubr.bf16.gmra.mrb[0].mxu0 %v1335
        %v4941 = vpop.f32.mrb[0].mxu0
        %v4942 = vadd.f32 %v894, %v4941
        %v4943 = vpop.f32.mrb[0].mxu0
        %v4944 = vadd.f32 %v898, %v4943
        %v4945 = vpop.f32.mrb[0].mxu0
        %v4946 = vadd.f32 %v894, %v4945
        %v4947 = vpop.f32.mrb[0].mxu0
        %v4948 = vadd.f32 %v898, %v4947
        %4949 = vdwg.mxu0
        %4950 = vmatprep.subr.bf16.mxu0 %v3066
        %4951 = vmatpush1.bf16.msra.mxu0 %v3065
        %4952 = vmatprep.subr.bf16.mxu0 %v3070
        %4953 = vmatpush1.bf16.msra.mxu0 %v3069
        %4954 = vmatprep.subr.bf16.mxu0 %v3074
        %4955 = vmatpush1.bf16.msra.mxu0 %v3073
        %4956 = vmatprep.subr.bf16.mxu0 %v3078
        %4957 = vmatpush1.bf16.msra.mxu0 %v3077
        %4958 = vmatprep.subr.bf16.mxu0 %v3082
        %4959 = vmatpush1.bf16.msra.mxu0 %v3081
        %4960 = vmatprep.subr.bf16.mxu0 %v3086
        %4961 = vmatpush1.bf16.msra.mxu0 %v3085
        %4962 = vmatprep.subr.bf16.mxu0 %v3090
        %4963 = vmatpush1.bf16.msra.mxu0 %v3089
        %4964 = vmatprep.subr.bf16.mxu0 %v3094
        %4965 = vmatpush1.bf16.msra.mxu0 %v3093
        %4966 = vmatprep.subr.bf16.mxu0 %v3098
        %4967 = vmatpush1.bf16.msra.mxu0 %v3097
        %4968 = vmatprep.subr.bf16.mxu0 %v3102
        %4969 = vmatpush1.bf16.msra.mxu0 %v3101
        %4970 = vmatprep.subr.bf16.mxu0 %v3106
        %4971 = vmatpush1.bf16.msra.mxu0 %v3105
        %4972 = vmatprep.subr.bf16.mxu0 %v3110
        %4973 = vmatpush1.bf16.msra.mxu0 %v3109
        %4974 = vmatprep.subr.bf16.mxu0 %v3114
        %4975 = vmatpush1.bf16.msra.mxu0 %v3113
        %4976 = vmatprep.subr.bf16.mxu0 %v3118
        %4977 = vmatpush1.bf16.msra.mxu0 %v3117
        %4978 = vmatprep.subr.bf16.mxu0 %v3122
        %4979 = vmatpush1.bf16.msra.mxu0 %v3121
        %4980 = vmatprep.subr.bf16.mxu0 %v3126
        %4981 = vmatpush1.bf16.msra.mxu0 %v3125
        %4982 = vmatprep.mubr.bf16.mxu0 %v1242
        %4983 = vmatmul.mubr.bf16.gmra.mrb[0].mxu0 %v1241
        %v4984 = vpop.f32.mrb[0].mxu0
        %v4985 = vadd.f32 %v4882, %v4984
        %v4986 = vpop.f32.mrb[0].mxu0
        %v4987 = vadd.f32 %v4884, %v4986
        %v4988 = vpop.f32.mrb[0].mxu0
        %v4989 = vadd.f32 %v4886, %v4988
        %v4990 = vpop.f32.mrb[0].mxu0
        %v4991 = vadd.f32 %v4888, %v4990
        %4992 = vmatprep.mubr.bf16.mxu0 %v1258
        %4993 = vmatmul.mubr.bf16.gmra.mrb[0].mxu0 %v1257
        %v4994 = vpop.f32.mrb[0].mxu0
        %v4995 = vadd.f32 %v4892, %v4994
        %v4996 = vpop.f32.mrb[0].mxu0
        %v4997 = vadd.f32 %v4894, %v4996
        %v4998 = vpop.f32.mrb[0].mxu0
        %v4999 = vadd.f32 %v4896, %v4998
        %v5000 = vpop.f32.mrb[0].mxu0
        %v5001 = vadd.f32 %v4898, %v5000
        %5002 = vmatprep.mubr.bf16.mxu0 %v1274
        %5003 = vmatmul.mubr.bf16.gmra.mrb[0].mxu0 %v1273
        %v5004 = vpop.f32.mrb[0].mxu0
        %v5005 = vadd.f32 %v4902, %v5004
        %v5006 = vpop.f32.mrb[0].mxu0
        %v5007 = vadd.f32 %v4904, %v5006
        %v5008 = vpop.f32.mrb[0].mxu0
        %v5009 = vadd.f32 %v4906, %v5008
        %v5010 = vpop.f32.mrb[0].mxu0
        %v5011 = vadd.f32 %v4908, %v5010
        %5012 = vmatprep.mubr.bf16.mxu0 %v1290
        %5013 = vmatmul.mubr.bf16.gmra.mrb[0].mxu0 %v1289
        %v5014 = vpop.f32.mrb[0].mxu0
        %v5015 = vadd.f32 %v4912, %v5014
        %v5016 = vpop.f32.mrb[0].mxu0
        %v5017 = vadd.f32 %v4914, %v5016
        %v5018 = vpop.f32.mrb[0].mxu0
        %v5019 = vadd.f32 %v4916, %v5018
        %v5020 = vpop.f32.mrb[0].mxu0
        %v5021 = vadd.f32 %v4918, %v5020
        %5022 = vmatprep.mubr.bf16.mxu0 %v1306
        %5023 = vmatmul.mubr.bf16.gmra.mrb[0].mxu0 %v1305
        %v5024 = vpop.f32.mrb[0].mxu0
        %v5025 = vadd.f32 %v4922, %v5024
        %v5026 = vpop.f32.mrb[0].mxu0
        %v5027 = vadd.f32 %v4924, %v5026
        %v5028 = vpop.f32.mrb[0].mxu0
        %v5029 = vadd.f32 %v4926, %v5028
        %v5030 = vpop.f32.mrb[0].mxu0
        %v5031 = vadd.f32 %v4928, %v5030
        %5032 = vmatprep.mubr.bf16.mxu0 %v1322
        %5033 = vmatmul.mubr.bf16.gmra.mrb[0].mxu0 %v1321
        %v5034 = vpop.f32.mrb[0].mxu0
        %v5035 = vadd.f32 %v4932, %v5034
        %v5036 = vpop.f32.mrb[0].mxu0
        %v5037 = vadd.f32 %v4934, %v5036
        %v5038 = vpop.f32.mrb[0].mxu0
        %v5039 = vadd.f32 %v4936, %v5038
        %v5040 = vpop.f32.mrb[0].mxu0
        %v5041 = vadd.f32 %v4938, %v5040
        %5042 = vmatprep.mubr.bf16.mxu0 %v1338
        %5043 = vmatmul.mubr.bf16.gmra.mrb[0].mxu0 %v1337
        %v5044 = vpop.f32.mrb[0].mxu0
        %v5045 = vadd.f32 %v4942, %v5044
        %v5046 = vpop.f32.mrb[0].mxu0
        %v5047 = vadd.f32 %v4944, %v5046
        %v5048 = vpop.f32.mrb[0].mxu0
        %v5049 = vadd.f32 %v4946, %v5048
        %v5050 = vpop.f32.mrb[0].mxu0
        %v5051 = vadd.f32 %v4948, %v5050
        %5052 = vdwg.mxu0
        %5053 = vmatprep.subr.bf16.mxu0 %v3130
        %5054 = vmatpush1.bf16.msra.mxu0 %v3129
        %5055 = vmatprep.subr.bf16.mxu0 %v3134
        %5056 = vmatpush1.bf16.msra.mxu0 %v3133
        %5057 = vmatprep.subr.bf16.mxu0 %v3138
        %5058 = vmatpush1.bf16.msra.mxu0 %v3137
        %5059 = vmatprep.subr.bf16.mxu0 %v3142
        %5060 = vmatpush1.bf16.msra.mxu0 %v3141
        %5061 = vmatprep.subr.bf16.mxu0 %v3146
        %5062 = vmatpush1.bf16.msra.mxu0 %v3145
        %5063 = vmatprep.subr.bf16.mxu0 %v3150
        %5064 = vmatpush1.bf16.msra.mxu0 %v3149
        %5065 = vmatprep.subr.bf16.mxu0 %v3154
        %5066 = vmatpush1.bf16.msra.mxu0 %v3153
        %5067 = vmatprep.subr.bf16.mxu0 %v3158
        %5068 = vmatpush1.bf16.msra.mxu0 %v3157
        %5069 = vmatprep.subr.bf16.mxu0 %v3162
        %5070 = vmatpush1.bf16.msra.mxu0 %v3161
        %5071 = vmatprep.subr.bf16.mxu0 %v3166
        %5072 = vmatpush1.bf16.msra.mxu0 %v3165
        %5073 = vmatprep.subr.bf16.mxu0 %v3170
        %5074 = vmatpush1.bf16.msra.mxu0 %v3169
        %5075 = vmatprep.subr.bf16.mxu0 %v3174
        %5076 = vmatpush1.bf16.msra.mxu0 %v3173
        %5077 = vmatprep.subr.bf16.mxu0 %v3178
        %5078 = vmatpush1.bf16.msra.mxu0 %v3177
        %5079 = vmatprep.subr.bf16.mxu0 %v3182
        %5080 = vmatpush1.bf16.msra.mxu0 %v3181
        %5081 = vmatprep.subr.bf16.mxu0 %v3186
        %5082 = vmatpush1.bf16.msra.mxu0 %v3185
        %5083 = vmatprep.subr.bf16.mxu0 %v3190
        %5084 = vmatpush1.bf16.msra.mxu0 %v3189
        %5085 = vmatprep.mubr.bf16.mxu0 %v1244
        %5086 = vmatmul.mubr.bf16.gmra.mrb[0].mxu0 %v1243
        %v5087 = vpop.f32.mrb[0].mxu0
        %v5088 = vadd.f32 %v4985, %v5087
        %v5089 = vpop.f32.mrb[0].mxu0
        %v5090 = vadd.f32 %v4987, %v5089
        %v5091 = vpop.f32.mrb[0].mxu0
        %v5092 = vadd.f32 %v4989, %v5091
        %v5093 = vpop.f32.mrb[0].mxu0
        %v5094 = vadd.f32 %v4991, %v5093
        %5095 = vmatprep.mubr.bf16.mxu0 %v1260
        %5096 = vmatmul.mubr.bf16.gmra.mrb[0].mxu0 %v1259
        %v5097 = vpop.f32.mrb[0].mxu0
        %v5098 = vadd.f32 %v4995, %v5097
        %v5099 = vpop.f32.mrb[0].mxu0
        %v5100 = vadd.f32 %v4997, %v5099
        %v5101 = vpop.f32.mrb[0].mxu0
        %v5102 = vadd.f32 %v4999, %v5101
        %v5103 = vpop.f32.mrb[0].mxu0
        %v5104 = vadd.f32 %v5001, %v5103
        %5105 = vmatprep.mubr.bf16.mxu0 %v1276
        %5106 = vmatmul.mubr.bf16.gmra.mrb[0].mxu0 %v1275
        %v5107 = vpop.f32.mrb[0].mxu0
        %v5108 = vadd.f32 %v5005, %v5107
        %v5109 = vpop.f32.mrb[0].mxu0
        %v5110 = vadd.f32 %v5007, %v5109
        %v5111 = vpop.f32.mrb[0].mxu0
        %v5112 = vadd.f32 %v5009, %v5111
        %v5113 = vpop.f32.mrb[0].mxu0
        %v5114 = vadd.f32 %v5011, %v5113
        %5115 = vmatprep.mubr.bf16.mxu0 %v1292
        %5116 = vmatmul.mubr.bf16.gmra.mrb[0].mxu0 %v1291
        %v5117 = vpop.f32.mrb[0].mxu0
        %v5118 = vadd.f32 %v5015, %v5117
        %v5119 = vpop.f32.mrb[0].mxu0
        %v5120 = vadd.f32 %v5017, %v5119
        %v5121 = vpop.f32.mrb[0].mxu0
        %v5122 = vadd.f32 %v5019, %v5121
        %v5123 = vpop.f32.mrb[0].mxu0
        %v5124 = vadd.f32 %v5021, %v5123
        %5125 = vmatprep.mubr.bf16.mxu0 %v1308
        %5126 = vmatmul.mubr.bf16.gmra.mrb[0].mxu0 %v1307
        %v5127 = vpop.f32.mrb[0].mxu0
        %v5128 = vadd.f32 %v5025, %v5127
        %v5129 = vpop.f32.mrb[0].mxu0
        %v5130 = vadd.f32 %v5027, %v5129
        %v5131 = vpop.f32.mrb[0].mxu0
        %v5132 = vadd.f32 %v5029, %v5131
        %v5133 = vpop.f32.mrb[0].mxu0
        %v5134 = vadd.f32 %v5031, %v5133
        %5135 = vmatprep.mubr.bf16.mxu0 %v1324
        %5136 = vmatmul.mubr.bf16.gmra.mrb[0].mxu0 %v1323
        %v5137 = vpop.f32.mrb[0].mxu0
        %v5138 = vadd.f32 %v5035, %v5137
        %v5139 = vpop.f32.mrb[0].mxu0
        %v5140 = vadd.f32 %v5037, %v5139
        %v5141 = vpop.f32.mrb[0].mxu0
        %v5142 = vadd.f32 %v5039, %v5141
        %v5143 = vpop.f32.mrb[0].mxu0
        %v5144 = vadd.f32 %v5041, %v5143
        %5145 = vmatprep.mubr.bf16.mxu0 %v1340
        %5146 = vmatmul.mubr.bf16.gmra.mrb[0].mxu0 %v1339
        %v5147 = vpop.f32.mrb[0].mxu0
        %v5148 = vadd.f32 %v5045, %v5147
        %v5149 = vpop.f32.mrb[0].mxu0
        %v5150 = vadd.f32 %v5047, %v5149
        %v5151 = vpop.f32.mrb[0].mxu0
        %v5152 = vadd.f32 %v5049, %v5151
        %v5153 = vpop.f32.mrb[0].mxu0
        %v5154 = vadd.f32 %v5051, %v5153
        %5155 = vdwg.mxu0
        %5156 = vmatprep.subr.bf16.mxu0 %v3194
        %5157 = vmatpush1.bf16.msra.mxu0 %v3193
        %5158 = vmatprep.subr.bf16.mxu0 %v3198
        %5159 = vmatpush1.bf16.msra.mxu0 %v3197
        %5160 = vmatprep.subr.bf16.mxu0 %v3202
        %5161 = vmatpush1.bf16.msra.mxu0 %v3201
        %5162 = vmatprep.subr.bf16.mxu0 %v3206
        %5163 = vmatpush1.bf16.msra.mxu0 %v3205
        %5164 = vmatprep.subr.bf16.mxu0 %v3210
        %5165 = vmatpush1.bf16.msra.mxu0 %v3209
        %5166 = vmatprep.subr.bf16.mxu0 %v3214
        %5167 = vmatpush1.bf16.msra.mxu0 %v3213
        %5168 = vmatprep.subr.bf16.mxu0 %v3218
        %5169 = vmatpush1.bf16.msra.mxu0 %v3217
        %5170 = vmatprep.subr.bf16.mxu0 %v3222
        %5171 = vmatpush1.bf16.msra.mxu0 %v3221
        %5172 = vmatprep.subr.bf16.mxu0 %v3226
        %5173 = vmatpush1.bf16.msra.mxu0 %v3225
        %5174 = vmatprep.subr.bf16.mxu0 %v3230
        %5175 = vmatpush1.bf16.msra.mxu0 %v3229
        %5176 = vmatprep.subr.bf16.mxu0 %v3234
        %5177 = vmatpush1.bf16.msra.mxu0 %v3233
        %5178 = vmatprep.subr.bf16.mxu0 %v3238
        %5179 = vmatpush1.bf16.msra.mxu0 %v3237
        %5180 = vmatprep.subr.bf16.mxu0 %v3242
        %5181 = vmatpush1.bf16.msra.mxu0 %v3241
        %5182 = vmatprep.subr.bf16.mxu0 %v3246
        %5183 = vmatpush1.bf16.msra.mxu0 %v3245
        %5184 = vmatprep.subr.bf16.mxu0 %v3250
        %5185 = vmatpush1.bf16.msra.mxu0 %v3249
        %5186 = vmatprep.subr.bf16.mxu0 %v3254
        %5187 = vmatpush1.bf16.msra.mxu0 %v3253
        %5188 = vmatprep.mubr.bf16.mxu0 %v1246
        %5189 = vmatmul.mubr.bf16.gmra.mrb[0].mxu0 %v1245
        %v5190 = vpop.f32.mrb[0].mxu0
        %v5191 = vadd.f32 %v5088, %v5190
        %v5192 = vpop.f32.mrb[0].mxu0
        %v5193 = vadd.f32 %v5090, %v5192
        %v5194 = vpop.f32.mrb[0].mxu0
        %v5195 = vadd.f32 %v5092, %v5194
        %v5196 = vpop.f32.mrb[0].mxu0
        %v5197 = vadd.f32 %v5094, %v5196
        %5198 = vmatprep.mubr.bf16.mxu0 %v1262
        %5199 = vmatmul.mubr.bf16.gmra.mrb[0].mxu0 %v1261
        %v5200 = vpop.f32.mrb[0].mxu0
        %v5201 = vadd.f32 %v5098, %v5200
        %v5202 = vpop.f32.mrb[0].mxu0
        %v5203 = vadd.f32 %v5100, %v5202
        %v5204 = vpop.f32.mrb[0].mxu0
        %v5205 = vadd.f32 %v5102, %v5204
        %v5206 = vpop.f32.mrb[0].mxu0
        %v5207 = vadd.f32 %v5104, %v5206
        %5208 = vmatprep.mubr.bf16.mxu0 %v1278
        %5209 = vmatmul.mubr.bf16.gmra.mrb[0].mxu0 %v1277
        %v5210 = vpop.f32.mrb[0].mxu0
        %v5211 = vadd.f32 %v5108, %v5210
        %v5212 = vpop.f32.mrb[0].mxu0
        %v5213 = vadd.f32 %v5110, %v5212
        %v5214 = vpop.f32.mrb[0].mxu0
        %v5215 = vadd.f32 %v5112, %v5214
        %v5216 = vpop.f32.mrb[0].mxu0
        %v5217 = vadd.f32 %v5114, %v5216
        %5218 = vmatprep.mubr.bf16.mxu0 %v1294
        %5219 = vmatmul.mubr.bf16.gmra.mrb[0].mxu0 %v1293
        %v5220 = vpop.f32.mrb[0].mxu0
        %v5221 = vadd.f32 %v5118, %v5220
        %v5222 = vpop.f32.mrb[0].mxu0
        %v5223 = vadd.f32 %v5120, %v5222
        %v5224 = vpop.f32.mrb[0].mxu0
        %v5225 = vadd.f32 %v5122, %v5224
        %v5226 = vpop.f32.mrb[0].mxu0
        %v5227 = vadd.f32 %v5124, %v5226
        %5228 = vmatprep.mubr.bf16.mxu0 %v1310
        %5229 = vmatmul.mubr.bf16.gmra.mrb[0].mxu0 %v1309
        %v5230 = vpop.f32.mrb[0].mxu0
        %v5231 = vadd.f32 %v5128, %v5230
        %v5232 = vpop.f32.mrb[0].mxu0
        %v5233 = vadd.f32 %v5130, %v5232
        %v5234 = vpop.f32.mrb[0].mxu0
        %v5235 = vadd.f32 %v5132, %v5234
        %v5236 = vpop.f32.mrb[0].mxu0
        %v5237 = vadd.f32 %v5134, %v5236
        %5238 = vmatprep.mubr.bf16.mxu0 %v1326
        %5239 = vmatmul.mubr.bf16.gmra.mrb[0].mxu0 %v1325
        %v5240 = vpop.f32.mrb[0].mxu0
        %v5241 = vadd.f32 %v5138, %v5240
        %v5242 = vpop.f32.mrb[0].mxu0
        %v5243 = vadd.f32 %v5140, %v5242
        %v5244 = vpop.f32.mrb[0].mxu0
        %v5245 = vadd.f32 %v5142, %v5244
        %v5246 = vpop.f32.mrb[0].mxu0
        %v5247 = vadd.f32 %v5144, %v5246
        %5248 = vmatprep.mubr.bf16.mxu0 %v1342
        %5249 = vmatmul.mubr.bf16.gmra.mrb[0].mxu0 %v1341
        %v5250 = vpop.f32.mrb[0].mxu0
        %v5251 = vadd.f32 %v5148, %v5250
        %v5252 = vpop.f32.mrb[0].mxu0
        %v5253 = vadd.f32 %v5150, %v5252
        %v5254 = vpop.f32.mrb[0].mxu0
        %v5255 = vadd.f32 %v5152, %v5254
        %v5256 = vpop.f32.mrb[0].mxu0
        %v5257 = vadd.f32 %v5154, %v5256
        %5258 = vdwg.mxu0
        %5259 = vmatprep.subr.bf16.mxu0 %v3258
        %5260 = vmatpush1.bf16.msra.mxu0 %v3257
        %5261 = vmatprep.subr.bf16.mxu0 %v3262
        %5262 = vmatpush1.bf16.msra.mxu0 %v3261
        %5263 = vmatprep.subr.bf16.mxu0 %v3266
        %5264 = vmatpush1.bf16.msra.mxu0 %v3265
        %5265 = vmatprep.subr.bf16.mxu0 %v3270
        %5266 = vmatpush1.bf16.msra.mxu0 %v3269
        %5267 = vmatprep.subr.bf16.mxu0 %v3274
        %5268 = vmatpush1.bf16.msra.mxu0 %v3273
        %5269 = vmatprep.subr.bf16.mxu0 %v3278
        %5270 = vmatpush1.bf16.msra.mxu0 %v3277
        %5271 = vmatprep.subr.bf16.mxu0 %v3282
        %5272 = vmatpush1.bf16.msra.mxu0 %v3281
        %5273 = vmatprep.subr.bf16.mxu0 %v3286
        %5274 = vmatpush1.bf16.msra.mxu0 %v3285
        %5275 = vmatprep.subr.bf16.mxu0 %v3290
        %5276 = vmatpush1.bf16.msra.mxu0 %v3289
        %5277 = vmatprep.subr.bf16.mxu0 %v3294
        %5278 = vmatpush1.bf16.msra.mxu0 %v3293
        %5279 = vmatprep.subr.bf16.mxu0 %v3298
        %5280 = vmatpush1.bf16.msra.mxu0 %v3297
        %5281 = vmatprep.subr.bf16.mxu0 %v3302
        %5282 = vmatpush1.bf16.msra.mxu0 %v3301
        %5283 = vmatprep.subr.bf16.mxu0 %v3306
        %5284 = vmatpush1.bf16.msra.mxu0 %v3305
        %5285 = vmatprep.subr.bf16.mxu0 %v3310
        %5286 = vmatpush1.bf16.msra.mxu0 %v3309
        %5287 = vmatprep.subr.bf16.mxu0 %v3314
        %5288 = vmatpush1.bf16.msra.mxu0 %v3313
        %5289 = vmatprep.subr.bf16.mxu0 %v3318
        %5290 = vmatpush1.bf16.msra.mxu0 %v3317
        %5291 = vmatprep.mubr.bf16.mxu0 %v1248
        %5292 = vmatmul.mubr.bf16.gmra.mrb[0].mxu0 %v1247
        %v5293 = vpop.f32.mrb[0].mxu0
        %v5294 = vadd.f32 %v5191, %v5293
        %v5295 = vpop.f32.mrb[0].mxu0
        %v5296 = vadd.f32 %v5193, %v5295
        %v5297 = vpop.f32.mrb[0].mxu0
        %v5298 = vadd.f32 %v5195, %v5297
        %v5299 = vpop.f32.mrb[0].mxu0
        %v5300 = vadd.f32 %v5197, %v5299
        %5301 = vmatprep.mubr.bf16.mxu0 %v1264
        %5302 = vmatmul.mubr.bf16.gmra.mrb[0].mxu0 %v1263
        %v5303 = vpop.f32.mrb[0].mxu0
        %v5304 = vadd.f32 %v5201, %v5303
        %v5305 = vpop.f32.mrb[0].mxu0
        %v5306 = vadd.f32 %v5203, %v5305
        %v5307 = vpop.f32.mrb[0].mxu0
        %v5308 = vadd.f32 %v5205, %v5307
        %v5309 = vpop.f32.mrb[0].mxu0
        %v5310 = vadd.f32 %v5207, %v5309
        %5311 = vmatprep.mubr.bf16.mxu0 %v1280
        %5312 = vmatmul.mubr.bf16.gmra.mrb[0].mxu0 %v1279
        %v5313 = vpop.f32.mrb[0].mxu0
        %v5314 = vadd.f32 %v5211, %v5313
        %v5315 = vpop.f32.mrb[0].mxu0
        %v5316 = vadd.f32 %v5213, %v5315
        %v5317 = vpop.f32.mrb[0].mxu0
        %v5318 = vadd.f32 %v5215, %v5317
        %v5319 = vpop.f32.mrb[0].mxu0
        %v5320 = vadd.f32 %v5217, %v5319
        %5321 = vmatprep.mubr.bf16.mxu0 %v1296
        %5322 = vmatmul.mubr.bf16.gmra.mrb[0].mxu0 %v1295
        %v5323 = vpop.f32.mrb[0].mxu0
        %v5324 = vadd.f32 %v5221, %v5323
        %v5325 = vpop.f32.mrb[0].mxu0
        %v5326 = vadd.f32 %v5223, %v5325
        %v5327 = vpop.f32.mrb[0].mxu0
        %v5328 = vadd.f32 %v5225, %v5327
        %v5329 = vpop.f32.mrb[0].mxu0
        %v5330 = vadd.f32 %v5227, %v5329
        %5331 = vmatprep.mubr.bf16.mxu0 %v1312
        %5332 = vmatmul.mubr.bf16.gmra.mrb[0].mxu0 %v1311
        %v5333 = vpop.f32.mrb[0].mxu0
        %v5334 = vadd.f32 %v5231, %v5333
        %v5335 = vpop.f32.mrb[0].mxu0
        %v5336 = vadd.f32 %v5233, %v5335
        %v5337 = vpop.f32.mrb[0].mxu0
        %v5338 = vadd.f32 %v5235, %v5337
        %v5339 = vpop.f32.mrb[0].mxu0
        %v5340 = vadd.f32 %v5237, %v5339
        %5341 = vmatprep.mubr.bf16.mxu0 %v1328
        %5342 = vmatmul.mubr.bf16.gmra.mrb[0].mxu0 %v1327
        %v5343 = vpop.f32.mrb[0].mxu0
        %v5344 = vadd.f32 %v5241, %v5343
        %v5345 = vpop.f32.mrb[0].mxu0
        %v5346 = vadd.f32 %v5243, %v5345
        %v5347 = vpop.f32.mrb[0].mxu0
        %v5348 = vadd.f32 %v5245, %v5347
        %v5349 = vpop.f32.mrb[0].mxu0
        %v5350 = vadd.f32 %v5247, %v5349
        %5351 = vmatprep.mubr.bf16.mxu0 %v1344
        %5352 = vmatmul.mubr.bf16.gmra.mrb[0].mxu0 %v1343
        %v5353 = vpop.f32.mrb[0].mxu0
        %v5354 = vadd.f32 %v5251, %v5353
        %v5355 = vpop.f32.mrb[0].mxu0
        %v5356 = vadd.f32 %v5253, %v5355
        %v5357 = vpop.f32.mrb[0].mxu0
        %v5358 = vadd.f32 %v5255, %v5357
        %v5359 = vpop.f32.mrb[0].mxu0
        %v5360 = vadd.f32 %v5257, %v5359
        %5361 = vdwg.mxu0
        %5362 = vmatprep.subr.bf16.mxu0 %v3322
        %5363 = vmatpush1.bf16.msra.mxu0 %v3321
        %5364 = vmatprep.subr.bf16.mxu0 %v3326
        %5365 = vmatpush1.bf16.msra.mxu0 %v3325
        %5366 = vmatprep.subr.bf16.mxu0 %v3330
        %5367 = vmatpush1.bf16.msra.mxu0 %v3329
        %5368 = vmatprep.subr.bf16.mxu0 %v3334
        %5369 = vmatpush1.bf16.msra.mxu0 %v3333
        %5370 = vmatprep.subr.bf16.mxu0 %v3338
        %5371 = vmatpush1.bf16.msra.mxu0 %v3337
        %5372 = vmatprep.subr.bf16.mxu0 %v3342
        %5373 = vmatpush1.bf16.msra.mxu0 %v3341
        %5374 = vmatprep.subr.bf16.mxu0 %v3346
        %5375 = vmatpush1.bf16.msra.mxu0 %v3345
        %5376 = vmatprep.subr.bf16.mxu0 %v3350
        %5377 = vmatpush1.bf16.msra.mxu0 %v3349
        %5378 = vmatprep.subr.bf16.mxu0 %v3354
        %5379 = vmatpush1.bf16.msra.mxu0 %v3353
        %5380 = vmatprep.subr.bf16.mxu0 %v3358
        %5381 = vmatpush1.bf16.msra.mxu0 %v3357
        %5382 = vmatprep.subr.bf16.mxu0 %v3362
        %5383 = vmatpush1.bf16.msra.mxu0 %v3361
        %5384 = vmatprep.subr.bf16.mxu0 %v3366
        %5385 = vmatpush1.bf16.msra.mxu0 %v3365
        %5386 = vmatprep.subr.bf16.mxu0 %v3370
        %5387 = vmatpush1.bf16.msra.mxu0 %v3369
        %5388 = vmatprep.subr.bf16.mxu0 %v3374
        %5389 = vmatpush1.bf16.msra.mxu0 %v3373
        %5390 = vmatprep.subr.bf16.mxu0 %v3378
        %5391 = vmatpush1.bf16.msra.mxu0 %v3377
        %5392 = vmatprep.subr.bf16.mxu0 %v3382
        %5393 = vmatpush1.bf16.msra.mxu0 %v3381
        %5394 = vmatprep.mubr.bf16.mxu0 %v1250
        %5395 = vmatmul.mubr.bf16.gmra.mrb[0].mxu0 %v1249
        %v5396 = vpop.f32.mrb[0].mxu0
        %v5397 = vadd.f32 %v5294, %v5396
        %v5398 = vpop.f32.mrb[0].mxu0
        %v5399 = vadd.f32 %v5296, %v5398
        %v5400 = vpop.f32.mrb[0].mxu0
        %v5401 = vadd.f32 %v5298, %v5400
        %v5402 = vpop.f32.mrb[0].mxu0
        %v5403 = vadd.f32 %v5300, %v5402
        %5404 = vmatprep.mubr.bf16.mxu0 %v1266
        %5405 = vmatmul.mubr.bf16.gmra.mrb[0].mxu0 %v1265
        %v5406 = vpop.f32.mrb[0].mxu0
        %v5407 = vadd.f32 %v5304, %v5406
        %v5408 = vpop.f32.mrb[0].mxu0
        %v5409 = vadd.f32 %v5306, %v5408
        %v5410 = vpop.f32.mrb[0].mxu0
        %v5411 = vadd.f32 %v5308, %v5410
        %v5412 = vpop.f32.mrb[0].mxu0
        %v5413 = vadd.f32 %v5310, %v5412
        %5414 = vmatprep.mubr.bf16.mxu0 %v1282
        %5415 = vmatmul.mubr.bf16.gmra.mrb[0].mxu0 %v1281
        %v5416 = vpop.f32.mrb[0].mxu0
        %v5417 = vadd.f32 %v5314, %v5416
        %v5418 = vpop.f32.mrb[0].mxu0
        %v5419 = vadd.f32 %v5316, %v5418
        %v5420 = vpop.f32.mrb[0].mxu0
        %v5421 = vadd.f32 %v5318, %v5420
        %v5422 = vpop.f32.mrb[0].mxu0
        %v5423 = vadd.f32 %v5320, %v5422
        %5424 = vmatprep.mubr.bf16.mxu0 %v1298
        %5425 = vmatmul.mubr.bf16.gmra.mrb[0].mxu0 %v1297
        %v5426 = vpop.f32.mrb[0].mxu0
        %v5427 = vadd.f32 %v5324, %v5426
        %v5428 = vpop.f32.mrb[0].mxu0
        %v5429 = vadd.f32 %v5326, %v5428
        %v5430 = vpop.f32.mrb[0].mxu0
        %v5431 = vadd.f32 %v5328, %v5430
        %v5432 = vpop.f32.mrb[0].mxu0
        %v5433 = vadd.f32 %v5330, %v5432
        %5434 = vmatprep.mubr.bf16.mxu0 %v1314
        %5435 = vmatmul.mubr.bf16.gmra.mrb[0].mxu0 %v1313
        %v5436 = vpop.f32.mrb[0].mxu0
        %v5437 = vadd.f32 %v5334, %v5436
        %v5438 = vpop.f32.mrb[0].mxu0
        %v5439 = vadd.f32 %v5336, %v5438
        %v5440 = vpop.f32.mrb[0].mxu0
        %v5441 = vadd.f32 %v5338, %v5440
        %v5442 = vpop.f32.mrb[0].mxu0
        %v5443 = vadd.f32 %v5340, %v5442
        %5444 = vmatprep.mubr.bf16.mxu0 %v1330
        %5445 = vmatmul.mubr.bf16.gmra.mrb[0].mxu0 %v1329
        %v5446 = vpop.f32.mrb[0].mxu0
        %v5447 = vadd.f32 %v5344, %v5446
        %v5448 = vpop.f32.mrb[0].mxu0
        %v5449 = vadd.f32 %v5346, %v5448
        %v5450 = vpop.f32.mrb[0].mxu0
        %v5451 = vadd.f32 %v5348, %v5450
        %v5452 = vpop.f32.mrb[0].mxu0
        %v5453 = vadd.f32 %v5350, %v5452
        %5454 = vmatprep.mubr.bf16.mxu0 %v1346
        %5455 = vmatmul.mubr.bf16.gmra.mrb[0].mxu0 %v1345
        %v5456 = vpop.f32.mrb[0].mxu0
        %v5457 = vadd.f32 %v5354, %v5456
        %v5458 = vpop.f32.mrb[0].mxu0
        %v5459 = vadd.f32 %v5356, %v5458
        %v5460 = vpop.f32.mrb[0].mxu0
        %v5461 = vadd.f32 %v5358, %v5460
        %v5462 = vpop.f32.mrb[0].mxu0
        %v5463 = vadd.f32 %v5360, %v5462
        %5464 = vdwg.mxu0
        %5465 = vmatprep.subr.bf16.mxu0 %v3386
        %5466 = vmatpush1.bf16.msra.mxu0 %v3385
        %5467 = vmatprep.subr.bf16.mxu0 %v3390
        %5468 = vmatpush1.bf16.msra.mxu0 %v3389
        %5469 = vmatprep.subr.bf16.mxu0 %v3394
        %5470 = vmatpush1.bf16.msra.mxu0 %v3393
        %5471 = vmatprep.subr.bf16.mxu0 %v3398
        %5472 = vmatpush1.bf16.msra.mxu0 %v3397
        %5473 = vmatprep.subr.bf16.mxu0 %v3402
        %5474 = vmatpush1.bf16.msra.mxu0 %v3401
        %5475 = vmatprep.subr.bf16.mxu0 %v3406
        %5476 = vmatpush1.bf16.msra.mxu0 %v3405
        %5477 = vmatprep.subr.bf16.mxu0 %v3410
        %5478 = vmatpush1.bf16.msra.mxu0 %v3409
        %5479 = vmatprep.subr.bf16.mxu0 %v3414
        %5480 = vmatpush1.bf16.msra.mxu0 %v3413
        %5481 = vmatprep.subr.bf16.mxu0 %v3418
        %5482 = vmatpush1.bf16.msra.mxu0 %v3417
        %5483 = vmatprep.subr.bf16.mxu0 %v3422
        %5484 = vmatpush1.bf16.msra.mxu0 %v3421
        %5485 = vmatprep.subr.bf16.mxu0 %v3426
        %5486 = vmatpush1.bf16.msra.mxu0 %v3425
        %5487 = vmatprep.subr.bf16.mxu0 %v3430
        %5488 = vmatpush1.bf16.msra.mxu0 %v3429
        %5489 = vmatprep.subr.bf16.mxu0 %v3434
        %5490 = vmatpush1.bf16.msra.mxu0 %v3433
        %5491 = vmatprep.subr.bf16.mxu0 %v3438
        %5492 = vmatpush1.bf16.msra.mxu0 %v3437
        %5493 = vmatprep.subr.bf16.mxu0 %v3442
        %5494 = vmatpush1.bf16.msra.mxu0 %v3441
        %5495 = vmatprep.subr.bf16.mxu0 %v3446
        %5496 = vmatpush1.bf16.msra.mxu0 %v3445
        %5497 = vmatprep.mubr.bf16.mxu0 %v1252
        %5498 = vmatmul.mubr.bf16.gmra.mrb[0].mxu0 %v1251
        %v5499 = vpop.f32.mrb[0].mxu0
        %v5500 = vadd.f32 %v5397, %v5499
        %v5501 = vpop.f32.mrb[0].mxu0
        %v5502 = vadd.f32 %v5399, %v5501
        %v5503 = vpop.f32.mrb[0].mxu0
        %v5504 = vadd.f32 %v5401, %v5503
        %v5505 = vpop.f32.mrb[0].mxu0
        %v5506 = vadd.f32 %v5403, %v5505
        %5507 = vmatprep.mubr.bf16.mxu0 %v1268
        %5508 = vmatmul.mubr.bf16.gmra.mrb[0].mxu0 %v1267
        %v5509 = vpop.f32.mrb[0].mxu0
        %v5510 = vadd.f32 %v5407, %v5509
        %v5511 = vpop.f32.mrb[0].mxu0
        %v5512 = vadd.f32 %v5409, %v5511
        %v5513 = vpop.f32.mrb[0].mxu0
        %v5514 = vadd.f32 %v5411, %v5513
        %v5515 = vpop.f32.mrb[0].mxu0
        %v5516 = vadd.f32 %v5413, %v5515
        %5517 = vmatprep.mubr.bf16.mxu0 %v1284
        %5518 = vmatmul.mubr.bf16.gmra.mrb[0].mxu0 %v1283
        %v5519 = vpop.f32.mrb[0].mxu0
        %v5520 = vadd.f32 %v5417, %v5519
        %v5521 = vpop.f32.mrb[0].mxu0
        %v5522 = vadd.f32 %v5419, %v5521
        %v5523 = vpop.f32.mrb[0].mxu0
        %v5524 = vadd.f32 %v5421, %v5523
        %v5525 = vpop.f32.mrb[0].mxu0
        %v5526 = vadd.f32 %v5423, %v5525
        %5527 = vmatprep.mubr.bf16.mxu0 %v1300
        %5528 = vmatmul.mubr.bf16.gmra.mrb[0].mxu0 %v1299
        %v5529 = vpop.f32.mrb[0].mxu0
        %v5530 = vadd.f32 %v5427, %v5529
        %v5531 = vpop.f32.mrb[0].mxu0
        %v5532 = vadd.f32 %v5429, %v5531
        %v5533 = vpop.f32.mrb[0].mxu0
        %v5534 = vadd.f32 %v5431, %v5533
        %v5535 = vpop.f32.mrb[0].mxu0
        %v5536 = vadd.f32 %v5433, %v5535
        %5537 = vmatprep.mubr.bf16.mxu0 %v1316
        %5538 = vmatmul.mubr.bf16.gmra.mrb[0].mxu0 %v1315
        %v5539 = vpop.f32.mrb[0].mxu0
        %v5540 = vadd.f32 %v5437, %v5539
        %v5541 = vpop.f32.mrb[0].mxu0
        %v5542 = vadd.f32 %v5439, %v5541
        %v5543 = vpop.f32.mrb[0].mxu0
        %v5544 = vadd.f32 %v5441, %v5543
        %v5545 = vpop.f32.mrb[0].mxu0
        %v5546 = vadd.f32 %v5443, %v5545
        %5547 = vmatprep.mubr.bf16.mxu0 %v1332
        %5548 = vmatmul.mubr.bf16.gmra.mrb[0].mxu0 %v1331
        %v5549 = vpop.f32.mrb[0].mxu0
        %v5550 = vadd.f32 %v5447, %v5549
        %v5551 = vpop.f32.mrb[0].mxu0
        %v5552 = vadd.f32 %v5449, %v5551
        %v5553 = vpop.f32.mrb[0].mxu0
        %v5554 = vadd.f32 %v5451, %v5553
        %v5555 = vpop.f32.mrb[0].mxu0
        %v5556 = vadd.f32 %v5453, %v5555
        %5557 = vmatprep.mubr.bf16.mxu0 %v1348
        %5558 = vmatmul.mubr.bf16.gmra.mrb[0].mxu0 %v1347
        %v5559 = vpop.f32.mrb[0].mxu0
        %v5560 = vadd.f32 %v5457, %v5559
        %v5561 = vpop.f32.mrb[0].mxu0
        %v5562 = vadd.f32 %v5459, %v5561
        %v5563 = vpop.f32.mrb[0].mxu0
        %v5564 = vadd.f32 %v5461, %v5563
        %v5565 = vpop.f32.mrb[0].mxu0
        %v5566 = vadd.f32 %v5463, %v5565
        %5567 = vdwg.mxu0
        %5568 = vmatprep.subr.bf16.mxu0 %v3450
        %5569 = vmatpush1.bf16.msra.mxu0 %v3449
        %5570 = vmatprep.subr.bf16.mxu0 %v3454
        %5571 = vmatpush1.bf16.msra.mxu0 %v3453
        %5572 = vmatprep.subr.bf16.mxu0 %v3458
        %5573 = vmatpush1.bf16.msra.mxu0 %v3457
        %5574 = vmatprep.subr.bf16.mxu0 %v3462
        %5575 = vmatpush1.bf16.msra.mxu0 %v3461
        %5576 = vmatprep.subr.bf16.mxu0 %v3466
        %5577 = vmatpush1.bf16.msra.mxu0 %v3465
        %5578 = vmatprep.subr.bf16.mxu0 %v3470
        %5579 = vmatpush1.bf16.msra.mxu0 %v3469
        %5580 = vmatprep.subr.bf16.mxu0 %v3474
        %5581 = vmatpush1.bf16.msra.mxu0 %v3473
        %5582 = vmatprep.subr.bf16.mxu0 %v3478
        %5583 = vmatpush1.bf16.msra.mxu0 %v3477
        %5584 = vmatprep.subr.bf16.mxu0 %v3482
        %5585 = vmatpush1.bf16.msra.mxu0 %v3481
        %5586 = vmatprep.subr.bf16.mxu0 %v3486
        %5587 = vmatpush1.bf16.msra.mxu0 %v3485
        %5588 = vmatprep.subr.bf16.mxu0 %v3490
        %5589 = vmatpush1.bf16.msra.mxu0 %v3489
        %5590 = vmatprep.subr.bf16.mxu0 %v3494
        %5591 = vmatpush1.bf16.msra.mxu0 %v3493
        %5592 = vmatprep.subr.bf16.mxu0 %v3498
        %5593 = vmatpush1.bf16.msra.mxu0 %v3497
        %5594 = vmatprep.subr.bf16.mxu0 %v3502
        %5595 = vmatpush1.bf16.msra.mxu0 %v3501
        %5596 = vmatprep.subr.bf16.mxu0 %v3506
        %5597 = vmatpush1.bf16.msra.mxu0 %v3505
        %5598 = vmatprep.subr.bf16.mxu0 %v3510
        %5599 = vmatpush1.bf16.msra.mxu0 %v3509
        %5600 = vmatprep.mubr.bf16.mxu0 %v1254
        %5601 = vmatmul.mubr.bf16.gmra.mrb[0].mxu0 %v1253
        %v5602 = vpop.f32.mrb[0].mxu0
        %v5603 = vadd.f32 %v5500, %v5602
        %v5604 = vpop.f32.mrb[0].mxu0
        %v5605 = vadd.f32 %v5502, %v5604
        %v5606 = vpop.f32.mrb[0].mxu0
        %v5607 = vadd.f32 %v5504, %v5606
        %v5608 = vpop.f32.mrb[0].mxu0
        %v5609 = vadd.f32 %v5506, %v5608
        %5610 = vmatprep.mubr.bf16.mxu0 %v1270
        %5611 = vmatmul.mubr.bf16.gmra.mrb[0].mxu0 %v1269
        %v5612 = vpop.f32.mrb[0].mxu0
        %v5613 = vadd.f32 %v5510, %v5612
        %v5614 = vpop.f32.mrb[0].mxu0
        %v5615 = vadd.f32 %v5512, %v5614
        %v5616 = vpop.f32.mrb[0].mxu0
        %v5617 = vadd.f32 %v5514, %v5616
        %v5618 = vpop.f32.mrb[0].mxu0
        %v5619 = vadd.f32 %v5516, %v5618
        %5620 = vmatprep.mubr.bf16.mxu0 %v1286
        %5621 = vmatmul.mubr.bf16.gmra.mrb[0].mxu0 %v1285
        %v5622 = vpop.f32.mrb[0].mxu0
        %v5623 = vadd.f32 %v5520, %v5622
        %v5624 = vpop.f32.mrb[0].mxu0
        %v5625 = vadd.f32 %v5522, %v5624
        %v5626 = vpop.f32.mrb[0].mxu0
        %v5627 = vadd.f32 %v5524, %v5626
        %v5628 = vpop.f32.mrb[0].mxu0
        %v5629 = vadd.f32 %v5526, %v5628
        %5630 = vmatprep.mubr.bf16.mxu0 %v1302
        %5631 = vmatmul.mubr.bf16.gmra.mrb[0].mxu0 %v1301
        %v5632 = vpop.f32.mrb[0].mxu0
        %v5633 = vadd.f32 %v5530, %v5632
        %v5634 = vpop.f32.mrb[0].mxu0
        %v5635 = vadd.f32 %v5532, %v5634
        %v5636 = vpop.f32.mrb[0].mxu0
        %v5637 = vadd.f32 %v5534, %v5636
        %v5638 = vpop.f32.mrb[0].mxu0
        %v5639 = vadd.f32 %v5536, %v5638
        %5640 = vmatprep.mubr.bf16.mxu0 %v1318
        %5641 = vmatmul.mubr.bf16.gmra.mrb[0].mxu0 %v1317
        %v5642 = vpop.f32.mrb[0].mxu0
        %v5643 = vadd.f32 %v5540, %v5642
        %v5644 = vpop.f32.mrb[0].mxu0
        %v5645 = vadd.f32 %v5542, %v5644
        %v5646 = vpop.f32.mrb[0].mxu0
        %v5647 = vadd.f32 %v5544, %v5646
        %v5648 = vpop.f32.mrb[0].mxu0
        %v5649 = vadd.f32 %v5546, %v5648
        %5650 = vmatprep.mubr.bf16.mxu0 %v1334
        %5651 = vmatmul.mubr.bf16.gmra.mrb[0].mxu0 %v1333
        %v5652 = vpop.f32.mrb[0].mxu0
        %v5653 = vadd.f32 %v5550, %v5652
        %v5654 = vpop.f32.mrb[0].mxu0
        %v5655 = vadd.f32 %v5552, %v5654
        %v5656 = vpop.f32.mrb[0].mxu0
        %v5657 = vadd.f32 %v5554, %v5656
        %v5658 = vpop.f32.mrb[0].mxu0
        %v5659 = vadd.f32 %v5556, %v5658
        %5660 = vmatprep.mubr.bf16.mxu0 %v1350
        %5661 = vmatmul.mubr.bf16.gmra.mrb[0].mxu0 %v1349
        %v5662 = vpop.f32.mrb[0].mxu0
        %v5663 = vadd.f32 %v5560, %v5662
        %v5664 = vpop.f32.mrb[0].mxu0
        %v5665 = vadd.f32 %v5562, %v5664
        %v5666 = vpop.f32.mrb[0].mxu0
        %v5667 = vadd.f32 %v5564, %v5666
        %v5668 = vpop.f32.mrb[0].mxu0
        %v5669 = vadd.f32 %v5566, %v5668
        %5670 = vdwg.mxu0
        %v5671 = vmul.f32 %v4779, 0.5
        %v5672 = vmul.f32 %v4781, 0.5
        %v5673 = vmul.f32 %v5603, 0.5
        %v5674 = vmul.f32 %v5605, 0.5
        %v5675 = vmul.f32 %v4783, 0.5
        %v5676 = vmul.f32 %v4785, 0.5
        %v5677 = vmul.f32 %v5607, 0.5
        %v5678 = vmul.f32 %v5609, 0.5
        %v5679 = vmul.f32 %v4789, 0.5
        %v5680 = vmul.f32 %v4791, 0.5
        %v5681 = vmul.f32 %v5613, 0.5
        %v5682 = vmul.f32 %v5615, 0.5
        %v5683 = vmul.f32 %v4793, 0.5
        %v5684 = vmul.f32 %v4795, 0.5
        %v5685 = vmul.f32 %v5617, 0.5
        %v5686 = vmul.f32 %v5619, 0.5
        %v5687 = vmul.f32 %v4799, 0.5
        %v5688 = vmul.f32 %v4801, 0.5
        %v5689 = vmul.f32 %v5623, 0.5
        %v5690 = vmul.f32 %v5625, 0.5
        %v5691 = vmul.f32 %v4803, 0.5
        %v5692 = vmul.f32 %v4805, 0.5
        %v5693 = vmul.f32 %v5627, 0.5
        %v5694 = vmul.f32 %v5629, 0.5
        %v5695 = vmul.f32 %v4809, 0.5
        %v5696 = vmul.f32 %v4811, 0.5
        %v5697 = vmul.f32 %v5633, 0.5
        %v5698 = vmul.f32 %v5635, 0.5
        %v5699 = vmul.f32 %v4813, 0.5
        %v5700 = vmul.f32 %v4815, 0.5
        %v5701 = vmul.f32 %v5637, 0.5
        %v5702 = vmul.f32 %v5639, 0.5
        %v5703 = vmul.f32 %v4819, 0.5
        %v5704 = vmul.f32 %v4821, 0.5
        %v5705 = vmul.f32 %v5643, 0.5
        %v5706 = vmul.f32 %v5645, 0.5
        %v5707 = vmul.f32 %v4823, 0.5
        %v5708 = vmul.f32 %v4825, 0.5
        %v5709 = vmul.f32 %v5647, 0.5
        %v5710 = vmul.f32 %v5649, 0.5
        %v5711 = vmul.f32 %v4829, 0.5
        %v5712 = vmul.f32 %v4831, 0.5
        %v5713 = vmul.f32 %v5653, 0.5
        %v5714 = vmul.f32 %v5655, 0.5
        %v5715 = vmul.f32 %v4833, 0.5
        %v5716 = vmul.f32 %v4835, 0.5
        %v5717 = vmul.f32 %v5657, 0.5
        %v5718 = vmul.f32 %v5659, 0.5
        %v5719 = vmul.f32 %v4839, 0.5
        %v5720 = vmul.f32 %v4841, 0.5
        %v5721 = vmul.f32 %v5663, 0.5
        %v5722 = vmul.f32 %v5665, 0.5
        %v5723 = vmul.f32 %v4843, 0.5
        %v5724 = vmul.f32 %v4845, 0.5
        %v5725 = vmul.f32 %v5667, 0.5
        %v5726 = vmul.f32 %v5669, 0.5
        %v5727 = vtanh.pop %v5671
        %v5728 = vtanh.pop %v5672
        %v5729 = vtanh.pop %v5673
        %v5730 = vtanh.pop %v5674
        %v5731 = vtanh.pop %v5675
        %v5732 = vtanh.pop %v5676
        %v5733 = vtanh.pop %v5677
        %v5734 = vtanh.pop %v5678
        %v5735 = vtanh.pop %v5679
        %v5736 = vtanh.pop %v5680
        %v5737 = vtanh.pop %v5681
        %v5738 = vtanh.pop %v5682
        %v5739 = vtanh.pop %v5683
        %v5740 = vtanh.pop %v5684
        %v5741 = vtanh.pop %v5685
        %v5742 = vtanh.pop %v5686
        %v5743 = vtanh.pop %v5687
        %v5744 = vtanh.pop %v5688
        %v5745 = vtanh.pop %v5689
        %v5746 = vtanh.pop %v5690
        %v5747 = vtanh.pop %v5691
        %v5748 = vtanh.pop %v5692
        %v5749 = vtanh.pop %v5693
        %v5750 = vtanh.pop %v5694
        %v5751 = vtanh.pop %v5695
        %v5752 = vtanh.pop %v5696
        %v5753 = vtanh.pop %v5697
        %v5754 = vtanh.pop %v5698
        %v5755 = vtanh.pop %v5699
        %v5756 = vtanh.pop %v5700
        %v5757 = vtanh.pop %v5701
        %v5758 = vtanh.pop %v5702
        %v5759 = vtanh.pop %v5703
        %v5760 = vtanh.pop %v5704
        %v5761 = vtanh.pop %v5705
        %v5762 = vtanh.pop %v5706
        %v5763 = vtanh.pop %v5707
        %v5764 = vtanh.pop %v5708
        %v5765 = vtanh.pop %v5709
        %v5766 = vtanh.pop %v5710
        %v5767 = vtanh.pop %v5711
        %v5768 = vtanh.pop %v5712
        %v5769 = vtanh.pop %v5713
        %v5770 = vtanh.pop %v5714
        %v5771 = vtanh.pop %v5715
        %v5772 = vtanh.pop %v5716
        %v5773 = vtanh.pop %v5717
        %v5774 = vtanh.pop %v5718
        %v5775 = vtanh.pop %v5719
        %v5776 = vtanh.pop %v5720
        %v5777 = vtanh.pop %v5721
        %v5778 = vtanh.pop %v5722
        %v5779 = vtanh.pop %v5723
        %v5780 = vtanh.pop %v5724
        %v5781 = vtanh.pop %v5725
        %v5782 = vtanh.pop %v5726
        %v5783 = vadd.f32 %v5727, 1.0
        %v5784 = vadd.f32 %v5728, 1.0
        %v5785 = vadd.f32 %v5729, 1.0
        %v5786 = vadd.f32 %v5730, 1.0
        %v5787 = vadd.f32 %v5731, 1.0
        %v5788 = vadd.f32 %v5732, 1.0
        %v5789 = vadd.f32 %v5733, 1.0
        %v5790 = vadd.f32 %v5734, 1.0
        %v5791 = vadd.f32 %v5735, 1.0
        %v5792 = vadd.f32 %v5736, 1.0
        %v5793 = vadd.f32 %v5737, 1.0
        %v5794 = vadd.f32 %v5738, 1.0
        %v5795 = vadd.f32 %v5739, 1.0
        %v5796 = vadd.f32 %v5740, 1.0
        %v5797 = vadd.f32 %v5741, 1.0
        %v5798 = vadd.f32 %v5742, 1.0
        %v5799 = vadd.f32 %v5743, 1.0
        %v5800 = vadd.f32 %v5744, 1.0
        %v5801 = vadd.f32 %v5745, 1.0
        %v5802 = vadd.f32 %v5746, 1.0
        %v5803 = vadd.f32 %v5747, 1.0
        %v5804 = vadd.f32 %v5748, 1.0
        %v5805 = vadd.f32 %v5749, 1.0
        %v5806 = vadd.f32 %v5750, 1.0
        %v5807 = vadd.f32 %v5751, 1.0
        %v5808 = vadd.f32 %v5752, 1.0
        %v5809 = vadd.f32 %v5753, 1.0
        %v5810 = vadd.f32 %v5754, 1.0
        %v5811 = vadd.f32 %v5755, 1.0
        %v5812 = vadd.f32 %v5756, 1.0
        %v5813 = vadd.f32 %v5757, 1.0
        %v5814 = vadd.f32 %v5758, 1.0
        %v5815 = vadd.f32 %v5759, 1.0
        %v5816 = vadd.f32 %v5760, 1.0
        %v5817 = vadd.f32 %v5761, 1.0
        %v5818 = vadd.f32 %v5762, 1.0
        %v5819 = vadd.f32 %v5763, 1.0
        %v5820 = vadd.f32 %v5764, 1.0
        %v5821 = vadd.f32 %v5765, 1.0
        %v5822 = vadd.f32 %v5766, 1.0
        %v5823 = vadd.f32 %v5767, 1.0
        %v5824 = vadd.f32 %v5768, 1.0
        %v5825 = vadd.f32 %v5769, 1.0
        %v5826 = vadd.f32 %v5770, 1.0
        %v5827 = vadd.f32 %v5771, 1.0
        %v5828 = vadd.f32 %v5772, 1.0
        %v5829 = vadd.f32 %v5773, 1.0
        %v5830 = vadd.f32 %v5774, 1.0
        %v5831 = vadd.f32 %v5775, 1.0
        %v5832 = vadd.f32 %v5776, 1.0
        %v5833 = vadd.f32 %v5777, 1.0
        %v5834 = vadd.f32 %v5778, 1.0
        %v5835 = vadd.f32 %v5779, 1.0
        %v5836 = vadd.f32 %v5780, 1.0
        %v5837 = vadd.f32 %v5781, 1.0
        %v5838 = vadd.f32 %v5782, 1.0
        %v5839 = vmul.f32 %v5783, 0.5
        %v5840 = vmul.f32 %v5784, 0.5
        %v5841 = vmul.f32 %v5785, 0.5
        %v5842 = vmul.f32 %v5786, 0.5
        %v5843 = vmul.f32 %v5787, 0.5
        %v5844 = vmul.f32 %v5788, 0.5
        %v5845 = vmul.f32 %v5789, 0.5
        %v5846 = vmul.f32 %v5790, 0.5
        %v5847 = vmul.f32 %v5791, 0.5
        %v5848 = vmul.f32 %v5792, 0.5
        %v5849 = vmul.f32 %v5793, 0.5
        %v5850 = vmul.f32 %v5794, 0.5
        %v5851 = vmul.f32 %v5795, 0.5
        %v5852 = vmul.f32 %v5796, 0.5
        %v5853 = vmul.f32 %v5797, 0.5
        %v5854 = vmul.f32 %v5798, 0.5
        %v5855 = vmul.f32 %v5799, 0.5
        %v5856 = vmul.f32 %v5800, 0.5
        %v5857 = vmul.f32 %v5801, 0.5
        %v5858 = vmul.f32 %v5802, 0.5
        %v5859 = vmul.f32 %v5803, 0.5
        %v5860 = vmul.f32 %v5804, 0.5
        %v5861 = vmul.f32 %v5805, 0.5
        %v5862 = vmul.f32 %v5806, 0.5
        %v5863 = vmul.f32 %v5807, 0.5
        %v5864 = vmul.f32 %v5808, 0.5
        %v5865 = vmul.f32 %v5809, 0.5
        %v5866 = vmul.f32 %v5810, 0.5
        %v5867 = vmul.f32 %v5811, 0.5
        %v5868 = vmul.f32 %v5812, 0.5
        %v5869 = vmul.f32 %v5813, 0.5
        %v5870 = vmul.f32 %v5814, 0.5
        %v5871 = vmul.f32 %v5815, 0.5
        %v5872 = vmul.f32 %v5816, 0.5
        %v5873 = vmul.f32 %v5817, 0.5
        %v5874 = vmul.f32 %v5818, 0.5
        %v5875 = vmul.f32 %v5819, 0.5
        %v5876 = vmul.f32 %v5820, 0.5
        %v5877 = vmul.f32 %v5821, 0.5
        %v5878 = vmul.f32 %v5822, 0.5
        %v5879 = vmul.f32 %v5823, 0.5
        %v5880 = vmul.f32 %v5824, 0.5
        %v5881 = vmul.f32 %v5825, 0.5
        %v5882 = vmul.f32 %v5826, 0.5
        %v5883 = vmul.f32 %v5827, 0.5
        %v5884 = vmul.f32 %v5828, 0.5
        %v5885 = vmul.f32 %v5829, 0.5
        %v5886 = vmul.f32 %v5830, 0.5
        %v5887 = vmul.f32 %v5831, 0.5
        %v5888 = vmul.f32 %v5832, 0.5
        %v5889 = vmul.f32 %v5833, 0.5
        %v5890 = vmul.f32 %v5834, 0.5
        %v5891 = vmul.f32 %v5835, 0.5
        %v5892 = vmul.f32 %v5836, 0.5
        %v5893 = vmul.f32 %v5837, 0.5
        %v5894 = vmul.f32 %v5838, 0.5
        %v5895 = vld [vmem:[%s3] sm:$0x1]
        %v5896 = vpack.c.bf16 %v5843, %v5839
        %v5897 = vpack.c.bf16 %v5844, %v5840
        %v5898 = vpack.c.bf16 %v5845, %v5841
        %v5899 = vpack.c.bf16 %v5846, %v5842
        %v5900 = vpack.c.bf16 %v5851, %v5847
        %v5901 = vpack.c.bf16 %v5852, %v5848
        %v5902 = vpack.c.bf16 %v5853, %v5849
        %v5903 = vpack.c.bf16 %v5854, %v5850
        %v5904 = vpack.c.bf16 %v5859, %v5855
        %v5905 = vpack.c.bf16 %v5860, %v5856
        %v5906 = vpack.c.bf16 %v5861, %v5857
        %v5907 = vpack.c.bf16 %v5862, %v5858
        %v5908 = vpack.c.bf16 %v5867, %v5863
        %v5909 = vpack.c.bf16 %v5868, %v5864
        %v5910 = vpack.c.bf16 %v5869, %v5865
        %v5911 = vpack.c.bf16 %v5870, %v5866
        %v5912 = vpack.c.bf16 %v5875, %v5871
        %v5913 = vpack.c.bf16 %v5876, %v5872
        %v5914 = vpack.c.bf16 %v5877, %v5873
        %v5915 = vpack.c.bf16 %v5878, %v5874
        %v5916 = vpack.c.bf16 %v5883, %v5879
        %v5917 = vpack.c.bf16 %v5884, %v5880
        %v5918 = vpack.c.bf16 %v5885, %v5881
        %v5919 = vpack.c.bf16 %v5886, %v5882
        %v5920 = vpack.c.bf16 %v5891, %v5887
        %v5921 = vpack.c.bf16 %v5892, %v5888
        %v5922 = vpack.c.bf16 %v5893, %v5889
        %v5923 = vpack.c.bf16 %v5894, %v5890
        %vm5924 = vcmask 916480
        %v5926 = vsel %vm5924, %v5895, 0
        %5928 = vmatprep.subr.bf16.mxu0 %v5897
        %5929 = vmatpush1.bf16.msra.mxu0 %v5896
        %5930 = vmatprep.subr.bf16.mxu0 %v5901
        %5931 = vmatpush1.bf16.msra.mxu0 %v5900
        %5932 = vmatprep.subr.bf16.mxu0 %v5905
        %5933 = vmatpush1.bf16.msra.mxu0 %v5904
        %5934 = vmatprep.subr.bf16.mxu0 %v5909
        %5935 = vmatpush1.bf16.msra.mxu0 %v5908
        %5936 = vmatprep.subr.bf16.mxu0 %v5913
        %5937 = vmatpush1.bf16.msra.mxu0 %v5912
        %5938 = vmatprep.subr.bf16.mxu0 %v5917
        %5939 = vmatpush1.bf16.msra.mxu0 %v5916
        %5940 = vmatprep.subr.bf16.mxu0 %v5921
        %5941 = vmatpush1.bf16.msra.mxu0 %v5920
        %5942 = vmatprep.subr.bf16.mxu0 0
        %5943 = vmatpush1.bf16.msra.mxu0 0
        %5944 = vmatprep.subr.bf16.mxu0 0
        %5945 = vmatpush1.bf16.msra.mxu0 0
        %5946 = vmatprep.subr.bf16.mxu0 0
        %5947 = vmatpush1.bf16.msra.mxu0 0
        %5948 = vmatprep.subr.bf16.mxu0 0
        %5949 = vmatpush1.bf16.msra.mxu0 0
        %5950 = vmatprep.subr.bf16.mxu0 0
        %5951 = vmatpush1.bf16.msra.mxu0 0
        %5952 = vmatprep.subr.bf16.mxu0 0
        %5953 = vmatpush1.bf16.msra.mxu0 0
        %5954 = vmatprep.subr.bf16.mxu0 0
        %5955 = vmatpush1.bf16.msra.mxu0 0
        %5956 = vmatprep.subr.bf16.mxu0 0
        %5957 = vmatpush1.bf16.msra.mxu0 0
        %5958 = vmatprep.subr.bf16.mxu0 0
        %5959 = vmatpush1.bf16.msra.mxu0 0
        %5960 = vmatprep.mubr.bf16.mxu0 0
        %5961 = vmatmul.mubr.bf16.gmra.mrb[0].mxu0 %v5926
        %v5962 = vpop.f32.mrb[0].mxu0
        %v5963 = vadd.f32 0.0, %v5962
        %v5964 = vpop.f32.mrb[0].mxu0
        %v5965 = vadd.f32 0.0, %v5964
        %v5966 = vpop.f32.mrb[0].mxu0
        %v5967 = vpop.f32.mrb[0].mxu0
        %5968 = vdwg.mxu0
        %5969 = vmatprep.subr.bf16.mxu0 %v5899
        %5970 = vmatpush1.bf16.msra.mxu0 %v5898
        %5971 = vmatprep.subr.bf16.mxu0 %v5903
        %5972 = vmatpush1.bf16.msra.mxu0 %v5902
        %5973 = vmatprep.subr.bf16.mxu0 %v5907
        %5974 = vmatpush1.bf16.msra.mxu0 %v5906
        %5975 = vmatprep.subr.bf16.mxu0 %v5911
        %5976 = vmatpush1.bf16.msra.mxu0 %v5910
        %5977 = vmatprep.subr.bf16.mxu0 %v5915
        %5978 = vmatpush1.bf16.msra.mxu0 %v5914
        %5979 = vmatprep.subr.bf16.mxu0 %v5919
        %5980 = vmatpush1.bf16.msra.mxu0 %v5918
        %5981 = vmatprep.subr.bf16.mxu0 %v5923
        %5982 = vmatpush1.bf16.msra.mxu0 %v5922
        %5983 = vmatprep.subr.bf16.mxu0 0
        %5984 = vmatpush1.bf16.msra.mxu0 0
        %5985 = vmatprep.subr.bf16.mxu0 0
        %5986 = vmatpush1.bf16.msra.mxu0 0
        %5987 = vmatprep.subr.bf16.mxu0 0
        %5988 = vmatpush1.bf16.msra.mxu0 0
        %5989 = vmatprep.subr.bf16.mxu0 0
        %5990 = vmatpush1.bf16.msra.mxu0 0
        %5991 = vmatprep.subr.bf16.mxu0 0
        %5992 = vmatpush1.bf16.msra.mxu0 0
        %5993 = vmatprep.subr.bf16.mxu0 0
        %5994 = vmatpush1.bf16.msra.mxu0 0
        %5995 = vmatprep.subr.bf16.mxu0 0
        %5996 = vmatpush1.bf16.msra.mxu0 0
        %5997 = vmatprep.subr.bf16.mxu0 0
        %5998 = vmatpush1.bf16.msra.mxu0 0
        %5999 = vmatprep.subr.bf16.mxu0 0
        %6000 = vmatpush1.bf16.msra.mxu0 0
        %6001 = vmatprep.mubr.bf16.mxu0 0
        %6002 = vmatmul.mubr.bf16.gmra.mrb[0].mxu0 %v5926
        %v6003 = vpop.f32.mrb[0].mxu0
        %v6004 = vadd.f32 0.0, %v6003
        %v6005 = vpop.f32.mrb[0].mxu0
        %v6006 = vadd.f32 0.0, %v6005
        %v6007 = vpop.f32.mrb[0].mxu0
        %v6008 = vpop.f32.mrb[0].mxu0
        %6009 = vdwg.mxu0
        %v6014 = vcombine.low %v5963, %v5965
        %v6015 = vcombine.low %v6004, %v6006
        %v6017 = vunpack.c.l.s4 1983009808
        %v6018 = vunpack.c.0.s8 %v6017
        %v6019 = vlaneseq
        %v6020 = vshrl.u32 %v6019, 7
        %v6021 = vsub.s32 %v6018, %v6020
        %v6022 = vrot.slane %v6014, %v6021
        %v6024 = vunpack.c.l.s4 1983009808
        %v6025 = vunpack.c.0.s8 %v6024
        %v6026 = vlaneseq
        %v6027 = vshrl.u32 %v6026, 7
        %v6028 = vsub.s32 %v6025, %v6027
        %v6029 = vrot.slane %v6015, %v6028
        %v6030 = vcombine.low %v6022, %v6029
        %6032 = vst [vmem:[%s253] sm:$0xff] %v6030
        %s6033 = sand.u32 %s126, 1
        %s6034 = scalar_lea.sflag [#allocation4], %s6033
        %s6035 = sand.u32 %s126, 1
        %s6036 = smul.addr %s6035, 8
        %s6037 = scalar_lea.vmem [#allocation7], %s6036
        // Predicated region
        $region45: #{resnet_mil_forward.1} parent=35 // pred_check
          %p6038 = pneg %p136
        $region46: #{resnet_mil_forward.1} parent=35 // pred_check_branch
          %6040 = sbr.rel (%p6038) target = $region48
        $region47: #{resnet_mil_forward.1} parent=35 // pred_region
          %s6041 = smul.u32 4, %s24
          %s6043 = ssub.s32 128, 128
          %6044 = vsyncadd %s6034, %s6043
          %s6045 = smul.addr %s6041, 32
          %s6046 = scalar_lea.hbm %s4, %s6045
          %s6048 = sshll.u32 %s6037, 4
          %s6049 = int_to_ptr.vmem [resolvable:$true] %s6048
          %6051 = dma.vmem_to_hbm [thread:$0]  %s6049, 128, %s6046, %s6034
        $region48: #{resnet_mil_forward.1} parent=35 // pred_fallthru
          _
      $region36: #{resnet_mil_forward.1} parent=5 // pred_fallthru
        _
      %p6052 = scmp.le.s32.totalorder 2, %s19
      // Predicated region
      $region49: #{resnet_mil_forward.1} parent=5 // pred_check
        %p6053 = pneg %p6052
      $region50: #{resnet_mil_forward.1} parent=5 // pred_check_branch
        %6055 = sbr.rel (%p6053) target = $region52
      $region51: #{resnet_mil_forward.1} parent=5 // pred_region
        %s6056 = ssub.s32 %s19, 2
        // Predicated region
        $region53: #{resnet_mil_forward.1} parent=51 // pred_check
          %p6057 = pneg %p142
        $region54: #{resnet_mil_forward.1} parent=51 // pred_check_branch
          %6059 = sbr.rel (%p6057) target = $region56
        $region55: #{resnet_mil_forward.1} parent=51 // pred_region
          %s6060 = sand.u32 %s127, 1
          %s6061 = scalar_lea.sflag [#allocation4], %s6060
          %s6062 = sand.u32 %s127, 1
          %s6063 = smul.addr %s6062, 8
          %s6064 = scalar_lea.vmem [#allocation7], %s6063
          %6065 = dma.done %s6061, 128
        $region56: #{resnet_mil_forward.1} parent=51 // pred_fallthru
          _
      $region52: #{resnet_mil_forward.1} parent=5 // pred_fallthru
        _
    $region6: #{resnet_mil_forward.1} parent=1 // loop_footer
      %s23 = sadd.s32 1, %s19
    $region7: #{resnet_mil_forward.1} parent=1 // loop_footer_branch
      %18 = sbr.rel target = $region3
    $region8: #{resnet_mil_forward.1} parent=1 // loop_exit
      _
    %6066 = vsyncpa [#allocation3], 1
    %s6067 = scalar_lea.sflag [#allocation3], 1
    %6068 = vsyncpa %s6067, 1
    %6069 = vsyncpa [#allocation6], 1
    %s6070 = scalar_lea.sflag [#allocation6], 1
    %6071 = vsyncpa %s6070, 1
    %6072 = vsyncpa [#allocation4], 1
    %s6073 = scalar_lea.sflag [#allocation4], 1
    %6074 = vsyncpa %s6073, 1

</llo_original>
